<compile_context>
chip_gen: v6e
topology: v6e:2x2x1
jax: 0.10.0
libtpu: 0.0.40
codegen_flags: <defaults>
</compile_context>

<pallas_src>
import functools
import numpy as np

import jax
import jax.numpy as jnp
from jax import lax
from jax.experimental import pallas as pl
from jax.experimental.pallas import tpu as pltpu  # noqa: F401  (TPU backend)

# ----------------------------- model sizes (small) -----------------------------
F_DIM = 16    # node_feature_dim
HID = 32      # hidden_dim
EMB = 16      # embedding_dim
HEADS = 4     # num_heads  (HID % HEADS == 0)
LAYERS = 4    # num_gnn_layers
N_NODES = 16  # number of graph nodes

NEG_BIG = -1e30  # additive "-inf" used inside the attention softmax masking

# (heads, per-head channels) for each GAT layer
LAYER_DIMS = tuple((HEADS, HID // HEADS) if i < LAYERS - 1 else (1, EMB)
                   for i in range(LAYERS))


# ----------------------------- slab packing helpers -----------------------------
def _pack_rows(entries, width):
    """Row-pack 2-D f32 arrays into one [R, width] slab.

    Each array is placed at an 8-aligned row offset with its columns starting
    at lane 0, so in-kernel static slices are (8,128)-tile-aligned views.
    Returns (slab, {name: (row_off, rows, cols)}).
    """
    pieces, offsets, cur = [], {}, 0
    for name, a in entries:
        a = jnp.asarray(a, jnp.float32)
        r, c = a.shape
        rp = -(-r // 8) * 8
        offsets[name] = (cur, r, c)
        pieces.append(jnp.pad(a, ((0, rp - r), (0, width - c))))
        cur += rp
    return jnp.concatenate(pieces, axis=0), offsets


def _block_att_matrix(att, heads, c):
    # att: [heads, 1, c] -> [heads, heads*c]; row h carries att[h] in block h,
    # so a single matmul yields all per-head attention logits at once.
    eye = jnp.eye(heads, dtype=jnp.float32)
    return (eye[:, :, None] * att[None, :, 0, :]).reshape(heads, heads * c)


# ----------------------------- the fused Pallas kernel -----------------------------
def _fused_forward_kernel(w_ref, d_ref, out_ref, *, w_off, d_off, layer_dims, n):
    def W(name):
        o, r, c = w_off[name]
        return w_ref[o:o + r, :c]

    def D(name):
        o, r, c = d_off[name]
        return d_ref[o:o + r, :c]

    adjb_tiled = D('adjb')          # [HEADS*N, N] additive edge bias (0 / -1e30)
    adjb = adjb_tiled[:n, :]        # single-head view (first replica)

    # ---- input_proj + ReLU (dropout = identity in eval) ----
    h = jnp.dot(D('x'), W('in_w'), preferred_element_type=jnp.float32) + W('in_b')
    h = jnp.maximum(h, 0.0)
    h_init = h

    # ---- GAT layers, fully unrolled ----
    for l, (heads, c) in enumerate(layer_dims):
        xl = jnp.dot(h, W(f'lin_w{l}'), preferred_element_type=jnp.float32)   # [N, H*C]

        # attention logits for ALL heads via block-structured att matrices
        asrc = lax.dot_general(W(f'asrc{l}'), xl, (((1,), (1,)), ((), ())),
                               preferred_element_type=jnp.float32)            # [H, N]
        adst = lax.dot_general(xl, W(f'adst{l}'), (((1,), (1,)), ((), ())),
                               preferred_element_type=jnp.float32)            # [N, H]

        # Stack heads along sublanes -> ONE [H*N, N] logits tile, ONE softmax.
        if heads > 1:
            e = jnp.concatenate(
                [adst[:, hh:hh + 1] + asrc[hh:hh + 1, :] for hh in range(heads)],
                axis=0)                                                       # [H*N, N]
            e = jnp.maximum(e, 0.2 * e) + adjb_tiled                          # LeakyReLU + mask
        else:
            e = adst[:, 0:1] + asrc[0:1, :]                                   # [N, N]
            e = jnp.maximum(e, 0.2 * e) + adjb

        mx = jnp.max(e, axis=-1, keepdims=True)
        p = jnp.exp(e - mx)                                # masked lanes underflow to 0
        attn = p / jnp.sum(p, axis=-1, keepdims=True)      # [H*N, N]

        # Per-head sliced aggregation, assembled by lane concat (concat heads).
        if heads > 1:
            out = jnp.concatenate(
                [jnp.dot(attn[hh * n:(hh + 1) * n, :], xl[:, hh * c:(hh + 1) * c],
                         preferred_element_type=jnp.float32)
                 for hh in range(heads)], axis=-1)                            # [N, H*C]
        else:
            out = jnp.dot(attn, xl, preferred_element_type=jnp.float32)       # mean of 1 head

        out = out + W(f'bias{l}')

        # LayerNorm (+ReLU for all but the last layer), fused epilogue
        mu = jnp.mean(out, axis=-1, keepdims=True)
        xc = out - mu
        var = jnp.mean(xc * xc, axis=-1, keepdims=True)
        y = xc * lax.rsqrt(var + 1e-5) * W(f'ln_g{l}') + W(f'ln_b{l}')
        if l < len(layer_dims) - 1:
            y = jnp.maximum(y, 0.0)
        h = y

    # ---- skip connection (emb != hidden => always applied) ----
    node_emb = (h + jnp.dot(h_init, W('skip_w'), preferred_element_type=jnp.float32)
                + W('skip_b'))

    # ---- father/mother MLPs, batched via concatenated / block-diag weights ----
    h1 = jnp.maximum(
        jnp.dot(node_emb, W('fm1_w'), preferred_element_type=jnp.float32) + W('fm1_b'),
        0.0)                                                                  # [N, 2*HID]
    h2 = jnp.maximum(
        jnp.dot(h1, W('fm2_w'), preferred_element_type=jnp.float32) + W('fm2_b'),
        0.0)                                                                  # [N, 2*HID]

    # ---- bilinear scores with shared candidate-side matmul ----
    K = lax.dot_general(W('bil_w'), node_emb, (((1,), (1,)), ((), ())),
                        preferred_element_type=jnp.float32)                   # [HID, N]
    add = D('mask')                                    # [N, 2N]: bil_b or -inf (constraints)
    f_sc = jnp.dot(h2[:, :HID], K, preferred_element_type=jnp.float32) + add[:, :n]
    m_sc = jnp.dot(h2[:, HID:], K, preferred_element_type=jnp.float32) + add[:, n:]

    # single lane-concatenated output slab: [father | mother | node_emb]
    out_ref[...] = jnp.concatenate([f_sc, m_sc, node_emb], axis=-1)


# ----------------------------- wrapper (single pallas_call) -----------------------------
def model_forward(params, x, adj, gender, generation):
    n = x.shape[0]

    # -- parameter slab (one DMA): batched fm-MLP weights prepared in plain JAX --
    fm1_w = jnp.concatenate([params['f1_w'], params['m1_w']], axis=1)      # [EMB, 2*HID]
    fm1_b = jnp.concatenate([params['f1_b'], params['m1_b']], axis=1)      # [1, 2*HID]
    z = jnp.zeros((HID, HID), jnp.float32)
    fm2_w = jnp.concatenate(
        [jnp.concatenate([params['f2_w'], z], axis=1),
         jnp.concatenate([z, params['m2_w']], axis=1)], axis=0)            # [2*HID, 2*HID]
    fm2_b = jnp.concatenate([params['f2_b'], params['m2_b']], axis=1)      # [1, 2*HID]

    w_entries = [('in_w', params['in_w']), ('in_b', params['in_b'])]
    for l in range(LAYERS):
        g, ln = params['gat'][l], params['ln'][l]
        heads, c = LAYER_DIMS[l]
        w_entries += [(f'lin_w{l}', g['lin_w']),
                      (f'asrc{l}', _block_att_matrix(g['att_src'], heads, c)),
                      (f'adst{l}', _block_att_matrix(g['att_dst'], heads, c)),
                      (f'bias{l}', g['bias']),
                      (f'ln_g{l}', ln['g']), (f'ln_b{l}', ln['b'])]
    w_entries += [('skip_w', params['skip_w']), ('skip_b', params['skip_b']),
                  ('fm1_w', fm1_w), ('fm1_b', fm1_b),
                  ('fm2_w', fm2_w), ('fm2_b', fm2_b),
                  ('bil_w', params['bil_w'])]
    wslab, w_off = _pack_rows(w_entries, width=2 * HID)

    # -- data slab (one DMA): x, tiled additive edge bias, additive constraint mask --
    adj_bias = jnp.where(adj > 0, 0.0, NEG_BIG)           # adj must contain self-loops
    adjb_tiled = jnp.tile(adj_bias, (HEADS, 1))           # shared by all multi-head layers

    gen_diff = generation[None, :] - generation[:, None]  # gen[cand] - gen[query]
    invalid = jnp.logical_or(gen_diff < 0.5, gen_diff > 2.0)
    neg_inf = jnp.float32(-jnp.inf)
    bb = params['bil_b'][0, 0]                             # bilinear bias folded in
    f_add = jnp.where(jnp.logical_or(invalid, gender[None, :] != 1.0), neg_inf, bb)
    m_add = jnp.where(jnp.logical_or(invalid, gender[None, :] != 0.0), neg_inf, bb)
    add_mask = jnp.concatenate([f_add, m_add], axis=1)     # [N, 2N]

    d_entries = [('x', x), ('adjb', adjb_tiled), ('mask', add_mask)]
    dslab, d_off = _pack_rows(d_entries, width=2 * n)

    combined = pl.pallas_call(
        functools.partial(_fused_forward_kernel, w_off=w_off, d_off=d_off,
                          layer_dims=LAYER_DIMS, n=n),
        out_shape=jax.ShapeDtypeStruct((n, 2 * n + EMB), jnp.float32),
        # grid-less: single invocation; both slabs + output are full-array VMEM blocks
    )(wslab, dslab)

    return {'father_scores': combined[:, :n],
            'mother_scores': combined[:, n:2 * n],
            'node_embeddings': combined[:, 2 * n:]}


# ----------------------------- deterministic parameters -----------------------------
def init_params(key):
    keys = iter(jax.random.split(key, 64))

    def nrm(shape, scale=0.2):
        return jax.random.normal(next(keys), shape, jnp.float32) * scale

    params = {
        'in_w': nrm((F_DIM, HID)), 'in_b': nrm((1, HID), 0.05),
        'skip_w': nrm((HID, EMB)), 'skip_b': nrm((1, EMB), 0.05),
        'f1_w': nrm((EMB, HID)), 'f1_b': nrm((1, HID), 0.05),
        'f2_w': nrm((HID, HID)), 'f2_b': nrm((1, HID), 0.05),
        'm1_w': nrm((EMB, HID)), 'm1_b': nrm((1, HID), 0.05),
        'm2_w': nrm((HID, HID)), 'm2_b': nrm((1, HID), 0.05),
        'bil_w': nrm((HID, EMB)), 'bil_b': nrm((1, 1), 0.05),
    }
    # TODO(synk): generation_embedder / generation_scorer are unused in forward(); omitted.
    gat = []
    for i in range(LAYERS):
        heads, c = LAYER_DIMS[i]
        gat.append({'lin_w': nrm((HID, heads * c)),        # PyG lin has bias=False
                    'att_src': nrm((heads, 1, c)),
                    'att_dst': nrm((heads, 1, c)),
                    'bias': jnp.zeros((1, heads * c), jnp.float32)})
    params['gat'] = gat
    params['ln'] = [{'g': jnp.ones((1, HID if i < LAYERS - 1 else EMB), jnp.float32),
                     'b': jnp.zeros((1, HID if i < LAYERS - 1 else EMB), jnp.float32)}
                    for i in range(LAYERS)]
    return params


# ----------------------------- example data & run -----------------------------
if __name__ == "__main__":
    key = jax.random.PRNGKey(0)
    k_param, k_x = jax.random.split(key)

    params = init_params(k_param)
    x = jax.random.normal(k_x, (N_NODES, F_DIM), jnp.float32)

    # Deterministic small family graph: chain edges + "generation" edges, both directions.
    adj_np = np.zeros((N_NODES, N_NODES), np.float32)   # adj[dst, src]
    for i in range(N_NODES):
        if i + 1 < N_NODES:
            adj_np[i + 1, i] = 1.0
            adj_np[i, i + 1] = 1.0
        if i + 4 < N_NODES:
            adj_np[i + 4, i] = 1.0
            adj_np[i, i + 4] = 1.0
    np.fill_diagonal(adj_np, 1.0)                        # GATConv add_self_loops=True
    adj = jnp.asarray(adj_np)

    gender = jnp.asarray(np.arange(N_NODES) % 2, jnp.float32)          # 0 = female, 1 = male
    generation = jnp.asarray(np.arange(N_NODES) // 4, jnp.float32)     # 4 generations

    fwd = jax.jit(model_forward)
    out = fwd(params, x, adj, gender, generation)
    jax.block_until_ready(out['father_scores'])
    jax.block_until_ready(out['mother_scores'])
    jax.block_until_ready(out['node_embeddings'])

    assert out['node_embeddings'].shape == (N_NODES, EMB)
    assert out['father_scores'].shape == (N_NODES, N_NODES)
    assert out['mother_scores'].shape == (N_NODES, N_NODES)
    assert bool(jnp.all(jnp.isfinite(out['node_embeddings'])))
    print("KERNEL_OK")
</pallas_src>

<mosaic_0001>
module attributes {stable_mosaic.version = 11 : i64} {
  func.func @_fused_forward_kernel(%arg0: memref<480x64xf32, #tpu.memory_space<vmem>>, %arg1: memref<96x32xf32, #tpu.memory_space<vmem>>, %arg2: memref<16x48xf32, #tpu.memory_space<vmem>>) attributes {dimension_semantics = [], scalar_prefetch = 0 : i64, scratch_operands = 0 : i64, tpu.core_type = #tpu.core_type<tc>} {
    %c16 = arith.constant 16 : index
    %c0 = arith.constant 0 : index
    %0 = vector.load %arg1[%c16, %c0] : memref<96x32xf32, #tpu.memory_space<vmem>>, vector<64x16xf32>
    %1 = vector.extract_strided_slice %0 {offsets = [0, 0], sizes = [16, 16], strides = [1, 1]} : vector<64x16xf32> to vector<16x16xf32>
    %c0_0 = arith.constant 0 : index
    %c0_1 = arith.constant 0 : index
    %2 = vector.load %arg1[%c0_0, %c0_1] : memref<96x32xf32, #tpu.memory_space<vmem>>, vector<16x16xf32>
    %c0_2 = arith.constant 0 : index
    %c0_3 = arith.constant 0 : index
    %3 = vector.load %arg0[%c0_2, %c0_3] : memref<480x64xf32, #tpu.memory_space<vmem>>, vector<16x32xf32>
    %cst = arith.constant dense<0.000000e+00> : vector<16x32xf32>
    %4 = tpu.matmul %2, %3, %cst {dimension_numbers = #tpu.dot_dimension_numbers<[1], [0], [0], [1], [0, 0, 1, 1], [], []>} : vector<16x16xf32>, vector<16x32xf32>, vector<16x32xf32> -> vector<16x32xf32>
    %c16_4 = arith.constant 16 : index
    %c0_5 = arith.constant 0 : index
    %5 = vector.load %arg0[%c16_4, %c0_5] : memref<480x64xf32, #tpu.memory_space<vmem>>, vector<1x32xf32>
    %6 = vector.broadcast %5 : vector<1x32xf32> to vector<16x32xf32>
    %7 = arith.addf %4, %6 : vector<16x32xf32>
    %cst_6 = arith.constant 0.000000e+00 : f32
    %8 = vector.broadcast %cst_6 : f32 to vector<16x32xf32>
    %9 = arith.maximumf %7, %8 : vector<16x32xf32>
    %c24 = arith.constant 24 : index
    %c0_7 = arith.constant 0 : index
    %10 = vector.load %arg0[%c24, %c0_7] : memref<480x64xf32, #tpu.memory_space<vmem>>, vector<32x32xf32>
    %cst_8 = arith.constant dense<0.000000e+00> : vector<16x32xf32>
    %11 = tpu.matmul %9, %10, %cst_8 {dimension_numbers = #tpu.dot_dimension_numbers<[1], [0], [0], [1], [0, 0, 1, 1], [], []>} : vector<16x32xf32>, vector<32x32xf32>, vector<16x32xf32> -> vector<16x32xf32>
    %c56 = arith.constant 56 : index
    %c0_9 = arith.constant 0 : index
    %12 = vector.load %arg0[%c56, %c0_9] : memref<480x64xf32, #tpu.memory_space<vmem>>, vector<4x32xf32>
    %cst_10 = arith.constant dense<0.000000e+00> : vector<4x16xf32>
    %13 = tpu.matmul %12, %11, %cst_10 {dimension_numbers = #tpu.dot_dimension_numbers<[1], [1], [0], [0], [0, 0, 1, 0], [], []>} : vector<4x32xf32>, vector<16x32xf32>, vector<4x16xf32> -> vector<4x16xf32>
    %c64 = arith.constant 64 : index
    %c0_11 = arith.constant 0 : index
    %14 = vector.load %arg0[%c64, %c0_11] : memref<480x64xf32, #tpu.memory_space<vmem>>, vector<4x32xf32>
    %cst_12 = arith.constant dense<0.000000e+00> : vector<16x4xf32>
    %15 = tpu.matmul %11, %14, %cst_12 {dimension_numbers = #tpu.dot_dimension_numbers<[1], [1], [0], [0], [0, 0, 1, 0], [], []>} : vector<16x32xf32>, vector<4x32xf32>, vector<16x4xf32> -> vector<16x4xf32>
    %16 = vector.extract_strided_slice %15 {offsets = [0, 0], sizes = [16, 1], strides = [1, 1]} : vector<16x4xf32> to vector<16x1xf32>
    %17 = vector.extract_strided_slice %13 {offsets = [0, 0], sizes = [1, 16], strides = [1, 1]} : vector<4x16xf32> to vector<1x16xf32>
    %18 = vector.broadcast %16 : vector<16x1xf32> to vector<16x16xf32>
    %19 = vector.broadcast %17 : vector<1x16xf32> to vector<16x16xf32>
    %20 = arith.addf %18, %19 : vector<16x16xf32>
    %21 = vector.extract_strided_slice %15 {offsets = [0, 1], sizes = [16, 1], strides = [1, 1]} : vector<16x4xf32> to vector<16x1xf32>
    %22 = vector.extract_strided_slice %13 {offsets = [1, 0], sizes = [1, 16], strides = [1, 1]} : vector<4x16xf32> to vector<1x16xf32>
    %23 = vector.broadcast %21 : vector<16x1xf32> to vector<16x16xf32>
    %24 = vector.broadcast %22 : vector<1x16xf32> to vector<16x16xf32>
    %25 = arith.addf %23, %24 : vector<16x16xf32>
    %26 = vector.extract_strided_slice %15 {offsets = [0, 2], sizes = [16, 1], strides = [1, 1]} : vector<16x4xf32> to vector<16x1xf32>
    %27 = vector.extract_strided_slice %13 {offsets = [2, 0], sizes = [1, 16], strides = [1, 1]} : vector<4x16xf32> to vector<1x16xf32>
    %28 = vector.broadcast %26 : vector<16x1xf32> to vector<16x16xf32>
    %29 = vector.broadcast %27 : vector<1x16xf32> to vector<16x16xf32>
    %30 = arith.addf %28, %29 : vector<16x16xf32>
    %31 = vector.extract_strided_slice %15 {offsets = [0, 3], sizes = [16, 1], strides = [1, 1]} : vector<16x4xf32> to vector<16x1xf32>
    %32 = vector.extract_strided_slice %13 {offsets = [3, 0], sizes = [1, 16], strides = [1, 1]} : vector<4x16xf32> to vector<1x16xf32>
    %33 = vector.broadcast %31 : vector<16x1xf32> to vector<16x16xf32>
    %34 = vector.broadcast %32 : vector<1x16xf32> to vector<16x16xf32>
    %35 = arith.addf %33, %34 : vector<16x16xf32>
    %36 = tpu.concatenate %20, %25, %30, %35 in 0 : vector<16x16xf32>, vector<16x16xf32>, vector<16x16xf32>, vector<16x16xf32> -> vector<64x16xf32>
    %cst_13 = arith.constant 2.000000e-01 : f32
    %37 = vector.broadcast %cst_13 : f32 to vector<64x16xf32>
    %38 = arith.mulf %37, %36 : vector<64x16xf32>
    %39 = arith.maximumf %36, %38 : vector<64x16xf32>
    %40 = arith.addf %39, %0 : vector<64x16xf32>
    %cst_14 = arith.constant dense<0xFF800000> : vector<64xf32>
    %41 = vector.multi_reduction <maximumf>, %40, %cst_14 [1] : vector<64x16xf32> to vector<64xf32>
    %42 = vector.shape_cast %41 : vector<64xf32> to vector<64x1xf32>
    %43 = vector.broadcast %42 : vector<64x1xf32> to vector<64x16xf32>
    %44 = arith.subf %40, %43 : vector<64x16xf32>
    %45 = math.exp %44 : vector<64x16xf32>
    %cst_15 = arith.constant dense<0.000000e+00> : vector<64xf32>
    %46 = vector.multi_reduction <add>, %45, %cst_15 [1] : vector<64x16xf32> to vector<64xf32>
    %47 = vector.shape_cast %46 : vector<64xf32> to vector<64x1xf32>
    %48 = vector.broadcast %47 : vector<64x1xf32> to vector<64x16xf32>
    %49 = arith.divf %45, %48 : vector<64x16xf32>
    %50 = vector.extract_strided_slice %49 {offsets = [0, 0], sizes = [16, 16], strides = [1, 1]} : vector<64x16xf32> to vector<16x16xf32>
    %51 = vector.extract_strided_slice %11 {offsets = [0, 0], sizes = [16, 8], strides = [1, 1]} : vector<16x32xf32> to vector<16x8xf32>
    %cst_16 = arith.constant dense<0.000000e+00> : vector<16x8xf32>
    %52 = tpu.matmul %50, %51, %cst_16 {dimension_numbers = #tpu.dot_dimension_numbers<[1], [0], [0], [1], [0, 0, 1, 1], [], []>} : vector<16x16xf32>, vector<16x8xf32>, vector<16x8xf32> -> vector<16x8xf32>
    %53 = vector.extract_strided_slice %49 {offsets = [16, 0], sizes = [16, 16], strides = [1, 1]} : vector<64x16xf32> to vector<16x16xf32>
    %54 = vector.extract_strided_slice %11 {offsets = [0, 8], sizes = [16, 8], strides = [1, 1]} : vector<16x32xf32> to vector<16x8xf32>
    %cst_17 = arith.constant dense<0.000000e+00> : vector<16x8xf32>
    %55 = tpu.matmul %53, %54, %cst_17 {dimension_numbers = #tpu.dot_dimension_numbers<[1], [0], [0], [1], [0, 0, 1, 1], [], []>} : vector<16x16xf32>, vector<16x8xf32>, vector<16x8xf32> -> vector<16x8xf32>
    %56 = vector.extract_strided_slice %49 {offsets = [32, 0], sizes = [16, 16], strides = [1, 1]} : vector<64x16xf32> to vector<16x16xf32>
    %57 = vector.extract_strided_slice %11 {offsets = [0, 16], sizes = [16, 8], strides = [1, 1]} : vector<16x32xf32> to vector<16x8xf32>
    %cst_18 = arith.constant dense<0.000000e+00> : vector<16x8xf32>
    %58 = tpu.matmul %56, %57, %cst_18 {dimension_numbers = #tpu.dot_dimension_numbers<[1], [0], [0], [1], [0, 0, 1, 1], [], []>} : vector<16x16xf32>, vector<16x8xf32>, vector<16x8xf32> -> vector<16x8xf32>
    %59 = vector.extract_strided_slice %49 {offsets = [48, 0], sizes = [16, 16], strides = [1, 1]} : vector<64x16xf32> to vector<16x16xf32>
    %60 = vector.extract_strided_slice %11 {offsets = [0, 24], sizes = [16, 8], strides = [1, 1]} : vector<16x32xf32> to vector<16x8xf32>
    %cst_19 = arith.constant dense<0.000000e+00> : vector<16x8xf32>
    %61 = tpu.matmul %59, %60, %cst_19 {dimension_numbers = #tpu.dot_dimension_numbers<[1], [0], [0], [1], [0, 0, 1, 1], [], []>} : vector<16x16xf32>, vector<16x8xf32>, vector<16x8xf32> -> vector<16x8xf32>
    %62 = tpu.concatenate %52, %55, %58, %61 in 1 : vector<16x8xf32>, vector<16x8xf32>, vector<16x8xf32>, vector<16x8xf32> -> vector<16x32xf32>
    %c72 = arith.constant 72 : index
    %c0_20 = arith.constant 0 : index
    %63 = vector.load %arg0[%c72, %c0_20] : memref<480x64xf32, #tpu.memory_space<vmem>>, vector<1x32xf32>
    %64 = vector.broadcast %63 : vector<1x32xf32> to vector<16x32xf32>
    %65 = arith.addf %62, %64 : vector<16x32xf32>
    %cst_21 = arith.constant dense<0.000000e+00> : vector<16xf32>
    %66 = vector.multi_reduction <add>, %65, %cst_21 [1] : vector<16x32xf32> to vector<16xf32>
    %67 = vector.shape_cast %66 : vector<16xf32> to vector<16x1xf32>
    %cst_22 = arith.constant 3.200000e+01 : f32
    %68 = vector.broadcast %cst_22 : f32 to vector<16x1xf32>
    %69 = arith.divf %67, %68 : vector<16x1xf32>
    %70 = vector.broadcast %69 : vector<16x1xf32> to vector<16x32xf32>
    %71 = arith.subf %65, %70 : vector<16x32xf32>
    %72 = arith.mulf %71, %71 : vector<16x32xf32>
    %cst_23 = arith.constant dense<0.000000e+00> : vector<16xf32>
    %73 = vector.multi_reduction <add>, %72, %cst_23 [1] : vector<16x32xf32> to vector<16xf32>
    %74 = vector.shape_cast %73 : vector<16xf32> to vector<16x1xf32>
    %cst_24 = arith.constant 3.200000e+01 : f32
    %75 = vector.broadcast %cst_24 : f32 to vector<16x1xf32>
    %76 = arith.divf %74, %75 : vector<16x1xf32>
    %cst_25 = arith.constant 9.99999974E-6 : f32
    %77 = vector.broadcast %cst_25 : f32 to vector<16x1xf32>
    %78 = arith.addf %76, %77 : vector<16x1xf32>
    %79 = math.rsqrt %78 : vector<16x1xf32>
    %80 = vector.broadcast %79 : vector<16x1xf32> to vector<16x32xf32>
    %81 = arith.mulf %71, %80 : vector<16x32xf32>
    %c80 = arith.constant 80 : index
    %c0_26 = arith.constant 0 : index
    %82 = vector.load %arg0[%c80, %c0_26] : memref<480x64xf32, #tpu.memory_space<vmem>>, vector<1x32xf32>
    %83 = vector.broadcast %82 : vector<1x32xf32> to vector<16x32xf32>
    %84 = arith.mulf %81, %83 : vector<16x32xf32>
    %c88 = arith.constant 88 : index
    %c0_27 = arith.constant 0 : index
    %85 = vector.load %arg0[%c88, %c0_27] : memref<480x64xf32, #tpu.memory_space<vmem>>, vector<1x32xf32>
    %86 = vector.broadcast %85 : vector<1x32xf32> to vector<16x32xf32>
    %87 = arith.addf %84, %86 : vector<16x32xf32>
    %cst_28 = arith.constant 0.000000e+00 : f32
    %88 = vector.broadcast %cst_28 : f32 to vector<16x32xf32>
    %89 = arith.maximumf %87, %88 : vector<16x32xf32>
    %c96 = arith.constant 96 : index
    %c0_29 = arith.constant 0 : index
    %90 = vector.load %arg0[%c96, %c0_29] : memref<480x64xf32, #tpu.memory_space<vmem>>, vector<32x32xf32>
    %cst_30 = arith.constant dense<0.000000e+00> : vector<16x32xf32>
    %91 = tpu.matmul %89, %90, %cst_30 {dimension_numbers = #tpu.dot_dimension_numbers<[1], [0], [0], [1], [0, 0, 1, 1], [], []>} : vector<16x32xf32>, vector<32x32xf32>, vector<16x32xf32> -> vector<16x32xf32>
    %c128 = arith.constant 128 : index
    %c0_31 = arith.constant 0 : index
    %92 = vector.load %arg0[%c128, %c0_31] : memref<480x64xf32, #tpu.memory_space<vmem>>, vector<4x32xf32>
    %cst_32 = arith.constant dense<0.000000e+00> : vector<4x16xf32>
    %93 = tpu.matmul %92, %91, %cst_32 {dimension_numbers = #tpu.dot_dimension_numbers<[1], [1], [0], [0], [0, 0, 1, 0], [], []>} : vector<4x32xf32>, vector<16x32xf32>, vector<4x16xf32> -> vector<4x16xf32>
    %c136 = arith.constant 136 : index
    %c0_33 = arith.constant 0 : index
    %94 = vector.load %arg0[%c136, %c0_33] : memref<480x64xf32, #tpu.memory_space<vmem>>, vector<4x32xf32>
    %cst_34 = arith.constant dense<0.000000e+00> : vector<16x4xf32>
    %95 = tpu.matmul %91, %94, %cst_34 {dimension_numbers = #tpu.dot_dimension_numbers<[1], [1], [0], [0], [0, 0, 1, 0], [], []>} : vector<16x32xf32>, vector<4x32xf32>, vector<16x4xf32> -> vector<16x4xf32>
    %96 = vector.extract_strided_slice %95 {offsets = [0, 0], sizes = [16, 1], strides = [1, 1]} : vector<16x4xf32> to vector<16x1xf32>
    %97 = vector.extract_strided_slice %93 {offsets = [0, 0], sizes = [1, 16], strides = [1, 1]} : vector<4x16xf32> to vector<1x16xf32>
    %98 = vector.broadcast %96 : vector<16x1xf32> to vector<16x16xf32>
    %99 = vector.broadcast %97 : vector<1x16xf32> to vector<16x16xf32>
    %100 = arith.addf %98, %99 : vector<16x16xf32>
    %101 = vector.extract_strided_slice %95 {offsets = [0, 1], sizes = [16, 1], strides = [1, 1]} : vector<16x4xf32> to vector<16x1xf32>
    %102 = vector.extract_strided_slice %93 {offsets = [1, 0], sizes = [1, 16], strides = [1, 1]} : vector<4x16xf32> to vector<1x16xf32>
    %103 = vector.broadcast %101 : vector<16x1xf32> to vector<16x16xf32>
    %104 = vector.broadcast %102 : vector<1x16xf32> to vector<16x16xf32>
    %105 = arith.addf %103, %104 : vector<16x16xf32>
    %106 = vector.extract_strided_slice %95 {offsets = [0, 2], sizes = [16, 1], strides = [1, 1]} : vector<16x4xf32> to vector<16x1xf32>
    %107 = vector.extract_strided_slice %93 {offsets = [2, 0], sizes = [1, 16], strides = [1, 1]} : vector<4x16xf32> to vector<1x16xf32>
    %108 = vector.broadcast %106 : vector<16x1xf32> to vector<16x16xf32>
    %109 = vector.broadcast %107 : vector<1x16xf32> to vector<16x16xf32>
    %110 = arith.addf %108, %109 : vector<16x16xf32>
    %111 = vector.extract_strided_slice %95 {offsets = [0, 3], sizes = [16, 1], strides = [1, 1]} : vector<16x4xf32> to vector<16x1xf32>
    %112 = vector.extract_strided_slice %93 {offsets = [3, 0], sizes = [1, 16], strides = [1, 1]} : vector<4x16xf32> to vector<1x16xf32>
    %113 = vector.broadcast %111 : vector<16x1xf32> to vector<16x16xf32>
    %114 = vector.broadcast %112 : vector<1x16xf32> to vector<16x16xf32>
    %115 = arith.addf %113, %114 : vector<16x16xf32>
    %116 = tpu.concatenate %100, %105, %110, %115 in 0 : vector<16x16xf32>, vector<16x16xf32>, vector<16x16xf32>, vector<16x16xf32> -> vector<64x16xf32>
    %cst_35 = arith.constant 2.000000e-01 : f32
    %117 = vector.broadcast %cst_35 : f32 to vector<64x16xf32>
    %118 = arith.mulf %117, %116 : vector<64x16xf32>
    %119 = arith.maximumf %116, %118 : vector<64x16xf32>
    %120 = arith.addf %119, %0 : vector<64x16xf32>
    %cst_36 = arith.constant dense<0xFF800000> : vector<64xf32>
    %121 = vector.multi_reduction <maximumf>, %120, %cst_36 [1] : vector<64x16xf32> to vector<64xf32>
    %122 = vector.shape_cast %121 : vector<64xf32> to vector<64x1xf32>
    %123 = vector.broadcast %122 : vector<64x1xf32> to vector<64x16xf32>
    %124 = arith.subf %120, %123 : vector<64x16xf32>
    %125 = math.exp %124 : vector<64x16xf32>
    %cst_37 = arith.constant dense<0.000000e+00> : vector<64xf32>
    %126 = vector.multi_reduction <add>, %125, %cst_37 [1] : vector<64x16xf32> to vector<64xf32>
    %127 = vector.shape_cast %126 : vector<64xf32> to vector<64x1xf32>
    %128 = vector.broadcast %127 : vector<64x1xf32> to vector<64x16xf32>
    %129 = arith.divf %125, %128 : vector<64x16xf32>
    %130 = vector.extract_strided_slice %129 {offsets = [0, 0], sizes = [16, 16], strides = [1, 1]} : vector<64x16xf32> to vector<16x16xf32>
    %131 = vector.extract_strided_slice %91 {offsets = [0, 0], sizes = [16, 8], strides = [1, 1]} : vector<16x32xf32> to vector<16x8xf32>
    %cst_38 = arith.constant dense<0.000000e+00> : vector<16x8xf32>
    %132 = tpu.matmul %130, %131, %cst_38 {dimension_numbers = #tpu.dot_dimension_numbers<[1], [0], [0], [1], [0, 0, 1, 1], [], []>} : vector<16x16xf32>, vector<16x8xf32>, vector<16x8xf32> -> vector<16x8xf32>
    %133 = vector.extract_strided_slice %129 {offsets = [16, 0], sizes = [16, 16], strides = [1, 1]} : vector<64x16xf32> to vector<16x16xf32>
    %134 = vector.extract_strided_slice %91 {offsets = [0, 8], sizes = [16, 8], strides = [1, 1]} : vector<16x32xf32> to vector<16x8xf32>
    %cst_39 = arith.constant dense<0.000000e+00> : vector<16x8xf32>
    %135 = tpu.matmul %133, %134, %cst_39 {dimension_numbers = #tpu.dot_dimension_numbers<[1], [0], [0], [1], [0, 0, 1, 1], [], []>} : vector<16x16xf32>, vector<16x8xf32>, vector<16x8xf32> -> vector<16x8xf32>
    %136 = vector.extract_strided_slice %129 {offsets = [32, 0], sizes = [16, 16], strides = [1, 1]} : vector<64x16xf32> to vector<16x16xf32>
    %137 = vector.extract_strided_slice %91 {offsets = [0, 16], sizes = [16, 8], strides = [1, 1]} : vector<16x32xf32> to vector<16x8xf32>
    %cst_40 = arith.constant dense<0.000000e+00> : vector<16x8xf32>
    %138 = tpu.matmul %136, %137, %cst_40 {dimension_numbers = #tpu.dot_dimension_numbers<[1], [0], [0], [1], [0, 0, 1, 1], [], []>} : vector<16x16xf32>, vector<16x8xf32>, vector<16x8xf32> -> vector<16x8xf32>
    %139 = vector.extract_strided_slice %129 {offsets = [48, 0], sizes = [16, 16], strides = [1, 1]} : vector<64x16xf32> to vector<16x16xf32>
    %140 = vector.extract_strided_slice %91 {offsets = [0, 24], sizes = [16, 8], strides = [1, 1]} : vector<16x32xf32> to vector<16x8xf32>
    %cst_41 = arith.constant dense<0.000000e+00> : vector<16x8xf32>
    %141 = tpu.matmul %139, %140, %cst_41 {dimension_numbers = #tpu.dot_dimension_numbers<[1], [0], [0], [1], [0, 0, 1, 1], [], []>} : vector<16x16xf32>, vector<16x8xf32>, vector<16x8xf32> -> vector<16x8xf32>
    %142 = tpu.concatenate %132, %135, %138, %141 in 1 : vector<16x8xf32>, vector<16x8xf32>, vector<16x8xf32>, vector<16x8xf32> -> vector<16x32xf32>
    %c144 = arith.constant 144 : index
    %c0_42 = arith.constant 0 : index
    %143 = vector.load %arg0[%c144, %c0_42] : memref<480x64xf32, #tpu.memory_space<vmem>>, vector<1x32xf32>
    %144 = vector.broadcast %143 : vector<1x32xf32> to vector<16x32xf32>
    %145 = arith.addf %142, %144 : vector<16x32xf32>
    %cst_43 = arith.constant dense<0.000000e+00> : vector<16xf32>
    %146 = vector.multi_reduction <add>, %145, %cst_43 [1] : vector<16x32xf32> to vector<16xf32>
    %147 = vector.shape_cast %146 : vector<16xf32> to vector<16x1xf32>
    %cst_44 = arith.constant 3.200000e+01 : f32
    %148 = vector.broadcast %cst_44 : f32 to vector<16x1xf32>
    %149 = arith.divf %147, %148 : vector<16x1xf32>
    %150 = vector.broadcast %149 : vector<16x1xf32> to vector<16x32xf32>
    %151 = arith.subf %145, %150 : vector<16x32xf32>
    %152 = arith.mulf %151, %151 : vector<16x32xf32>
    %cst_45 = arith.constant dense<0.000000e+00> : vector<16xf32>
    %153 = vector.multi_reduction <add>, %152, %cst_45 [1] : vector<16x32xf32> to vector<16xf32>
    %154 = vector.shape_cast %153 : vector<16xf32> to vector<16x1xf32>
    %cst_46 = arith.constant 3.200000e+01 : f32
    %155 = vector.broadcast %cst_46 : f32 to vector<16x1xf32>
    %156 = arith.divf %154, %155 : vector<16x1xf32>
    %cst_47 = arith.constant 9.99999974E-6 : f32
    %157 = vector.broadcast %cst_47 : f32 to vector<16x1xf32>
    %158 = arith.addf %156, %157 : vector<16x1xf32>
    %159 = math.rsqrt %158 : vector<16x1xf32>
    %160 = vector.broadcast %159 : vector<16x1xf32> to vector<16x32xf32>
    %161 = arith.mulf %151, %160 : vector<16x32xf32>
    %c152 = arith.constant 152 : index
    %c0_48 = arith.constant 0 : index
    %162 = vector.load %arg0[%c152, %c0_48] : memref<480x64xf32, #tpu.memory_space<vmem>>, vector<1x32xf32>
    %163 = vector.broadcast %162 : vector<1x32xf32> to vector<16x32xf32>
    %164 = arith.mulf %161, %163 : vector<16x32xf32>
    %c160 = arith.constant 160 : index
    %c0_49 = arith.constant 0 : index
    %165 = vector.load %arg0[%c160, %c0_49] : memref<480x64xf32, #tpu.memory_space<vmem>>, vector<1x32xf32>
    %166 = vector.broadcast %165 : vector<1x32xf32> to vector<16x32xf32>
    %167 = arith.addf %164, %166 : vector<16x32xf32>
    %cst_50 = arith.constant 0.000000e+00 : f32
    %168 = vector.broadcast %cst_50 : f32 to vector<16x32xf32>
    %169 = arith.maximumf %167, %168 : vector<16x32xf32>
    %c168 = arith.constant 168 : index
    %c0_51 = arith.constant 0 : index
    %170 = vector.load %arg0[%c168, %c0_51] : memref<480x64xf32, #tpu.memory_space<vmem>>, vector<32x32xf32>
    %cst_52 = arith.constant dense<0.000000e+00> : vector<16x32xf32>
    %171 = tpu.matmul %169, %170, %cst_52 {dimension_numbers = #tpu.dot_dimension_numbers<[1], [0], [0], [1], [0, 0, 1, 1], [], []>} : vector<16x32xf32>, vector<32x32xf32>, vector<16x32xf32> -> vector<16x32xf32>
    %c200 = arith.constant 200 : index
    %c0_53 = arith.constant 0 : index
    %172 = vector.load %arg0[%c200, %c0_53] : memref<480x64xf32, #tpu.memory_space<vmem>>, vector<4x32xf32>
    %cst_54 = arith.constant dense<0.000000e+00> : vector<4x16xf32>
    %173 = tpu.matmul %172, %171, %cst_54 {dimension_numbers = #tpu.dot_dimension_numbers<[1], [1], [0], [0], [0, 0, 1, 0], [], []>} : vector<4x32xf32>, vector<16x32xf32>, vector<4x16xf32> -> vector<4x16xf32>
    %c208 = arith.constant 208 : index
    %c0_55 = arith.constant 0 : index
    %174 = vector.load %arg0[%c208, %c0_55] : memref<480x64xf32, #tpu.memory_space<vmem>>, vector<4x32xf32>
    %cst_56 = arith.constant dense<0.000000e+00> : vector<16x4xf32>
    %175 = tpu.matmul %171, %174, %cst_56 {dimension_numbers = #tpu.dot_dimension_numbers<[1], [1], [0], [0], [0, 0, 1, 0], [], []>} : vector<16x32xf32>, vector<4x32xf32>, vector<16x4xf32> -> vector<16x4xf32>
    %176 = vector.extract_strided_slice %175 {offsets = [0, 0], sizes = [16, 1], strides = [1, 1]} : vector<16x4xf32> to vector<16x1xf32>
    %177 = vector.extract_strided_slice %173 {offsets = [0, 0], sizes = [1, 16], strides = [1, 1]} : vector<4x16xf32> to vector<1x16xf32>
    %178 = vector.broadcast %176 : vector<16x1xf32> to vector<16x16xf32>
    %179 = vector.broadcast %177 : vector<1x16xf32> to vector<16x16xf32>
    %180 = arith.addf %178, %179 : vector<16x16xf32>
    %181 = vector.extract_strided_slice %175 {offsets = [0, 1], sizes = [16, 1], strides = [1, 1]} : vector<16x4xf32> to vector<16x1xf32>
    %182 = vector.extract_strided_slice %173 {offsets = [1, 0], sizes = [1, 16], strides = [1, 1]} : vector<4x16xf32> to vector<1x16xf32>
    %183 = vector.broadcast %181 : vector<16x1xf32> to vector<16x16xf32>
    %184 = vector.broadcast %182 : vector<1x16xf32> to vector<16x16xf32>
    %185 = arith.addf %183, %184 : vector<16x16xf32>
    %186 = vector.extract_strided_slice %175 {offsets = [0, 2], sizes = [16, 1], strides = [1, 1]} : vector<16x4xf32> to vector<16x1xf32>
    %187 = vector.extract_strided_slice %173 {offsets = [2, 0], sizes = [1, 16], strides = [1, 1]} : vector<4x16xf32> to vector<1x16xf32>
    %188 = vector.broadcast %186 : vector<16x1xf32> to vector<16x16xf32>
    %189 = vector.broadcast %187 : vector<1x16xf32> to vector<16x16xf32>
    %190 = arith.addf %188, %189 : vector<16x16xf32>
    %191 = vector.extract_strided_slice %175 {offsets = [0, 3], sizes = [16, 1], strides = [1, 1]} : vector<16x4xf32> to vector<16x1xf32>
    %192 = vector.extract_strided_slice %173 {offsets = [3, 0], sizes = [1, 16], strides = [1, 1]} : vector<4x16xf32> to vector<1x16xf32>
    %193 = vector.broadcast %191 : vector<16x1xf32> to vector<16x16xf32>
    %194 = vector.broadcast %192 : vector<1x16xf32> to vector<16x16xf32>
    %195 = arith.addf %193, %194 : vector<16x16xf32>
    %196 = tpu.concatenate %180, %185, %190, %195 in 0 : vector<16x16xf32>, vector<16x16xf32>, vector<16x16xf32>, vector<16x16xf32> -> vector<64x16xf32>
    %cst_57 = arith.constant 2.000000e-01 : f32
    %197 = vector.broadcast %cst_57 : f32 to vector<64x16xf32>
    %198 = arith.mulf %197, %196 : vector<64x16xf32>
    %199 = arith.maximumf %196, %198 : vector<64x16xf32>
    %200 = arith.addf %199, %0 : vector<64x16xf32>
    %cst_58 = arith.constant dense<0xFF800000> : vector<64xf32>
    %201 = vector.multi_reduction <maximumf>, %200, %cst_58 [1] : vector<64x16xf32> to vector<64xf32>
    %202 = vector.shape_cast %201 : vector<64xf32> to vector<64x1xf32>
    %203 = vector.broadcast %202 : vector<64x1xf32> to vector<64x16xf32>
    %204 = arith.subf %200, %203 : vector<64x16xf32>
    %205 = math.exp %204 : vector<64x16xf32>
    %cst_59 = arith.constant dense<0.000000e+00> : vector<64xf32>
    %206 = vector.multi_reduction <add>, %205, %cst_59 [1] : vector<64x16xf32> to vector<64xf32>
    %207 = vector.shape_cast %206 : vector<64xf32> to vector<64x1xf32>
    %208 = vector.broadcast %207 : vector<64x1xf32> to vector<64x16xf32>
    %209 = arith.divf %205, %208 : vector<64x16xf32>
    %210 = vector.extract_strided_slice %209 {offsets = [0, 0], sizes = [16, 16], strides = [1, 1]} : vector<64x16xf32> to vector<16x16xf32>
    %211 = vector.extract_strided_slice %171 {offsets = [0, 0], sizes = [16, 8], strides = [1, 1]} : vector<16x32xf32> to vector<16x8xf32>
    %cst_60 = arith.constant dense<0.000000e+00> : vector<16x8xf32>
    %212 = tpu.matmul %210, %211, %cst_60 {dimension_numbers = #tpu.dot_dimension_numbers<[1], [0], [0], [1], [0, 0, 1, 1], [], []>} : vector<16x16xf32>, vector<16x8xf32>, vector<16x8xf32> -> vector<16x8xf32>
    %213 = vector.extract_strided_slice %209 {offsets = [16, 0], sizes = [16, 16], strides = [1, 1]} : vector<64x16xf32> to vector<16x16xf32>
    %214 = vector.extract_strided_slice %171 {offsets = [0, 8], sizes = [16, 8], strides = [1, 1]} : vector<16x32xf32> to vector<16x8xf32>
    %cst_61 = arith.constant dense<0.000000e+00> : vector<16x8xf32>
    %215 = tpu.matmul %213, %214, %cst_61 {dimension_numbers = #tpu.dot_dimension_numbers<[1], [0], [0], [1], [0, 0, 1, 1], [], []>} : vector<16x16xf32>, vector<16x8xf32>, vector<16x8xf32> -> vector<16x8xf32>
    %216 = vector.extract_strided_slice %209 {offsets = [32, 0], sizes = [16, 16], strides = [1, 1]} : vector<64x16xf32> to vector<16x16xf32>
    %217 = vector.extract_strided_slice %171 {offsets = [0, 16], sizes = [16, 8], strides = [1, 1]} : vector<16x32xf32> to vector<16x8xf32>
    %cst_62 = arith.constant dense<0.000000e+00> : vector<16x8xf32>
    %218 = tpu.matmul %216, %217, %cst_62 {dimension_numbers = #tpu.dot_dimension_numbers<[1], [0], [0], [1], [0, 0, 1, 1], [], []>} : vector<16x16xf32>, vector<16x8xf32>, vector<16x8xf32> -> vector<16x8xf32>
    %219 = vector.extract_strided_slice %209 {offsets = [48, 0], sizes = [16, 16], strides = [1, 1]} : vector<64x16xf32> to vector<16x16xf32>
    %220 = vector.extract_strided_slice %171 {offsets = [0, 24], sizes = [16, 8], strides = [1, 1]} : vector<16x32xf32> to vector<16x8xf32>
    %cst_63 = arith.constant dense<0.000000e+00> : vector<16x8xf32>
    %221 = tpu.matmul %219, %220, %cst_63 {dimension_numbers = #tpu.dot_dimension_numbers<[1], [0], [0], [1], [0, 0, 1, 1], [], []>} : vector<16x16xf32>, vector<16x8xf32>, vector<16x8xf32> -> vector<16x8xf32>
    %222 = tpu.concatenate %212, %215, %218, %221 in 1 : vector<16x8xf32>, vector<16x8xf32>, vector<16x8xf32>, vector<16x8xf32> -> vector<16x32xf32>
    %c216 = arith.constant 216 : index
    %c0_64 = arith.constant 0 : index
    %223 = vector.load %arg0[%c216, %c0_64] : memref<480x64xf32, #tpu.memory_space<vmem>>, vector<1x32xf32>
    %224 = vector.broadcast %223 : vector<1x32xf32> to vector<16x32xf32>
    %225 = arith.addf %222, %224 : vector<16x32xf32>
    %cst_65 = arith.constant dense<0.000000e+00> : vector<16xf32>
    %226 = vector.multi_reduction <add>, %225, %cst_65 [1] : vector<16x32xf32> to vector<16xf32>
    %227 = vector.shape_cast %226 : vector<16xf32> to vector<16x1xf32>
    %cst_66 = arith.constant 3.200000e+01 : f32
    %228 = vector.broadcast %cst_66 : f32 to vector<16x1xf32>
    %229 = arith.divf %227, %228 : vector<16x1xf32>
    %230 = vector.broadcast %229 : vector<16x1xf32> to vector<16x32xf32>
    %231 = arith.subf %225, %230 : vector<16x32xf32>
    %232 = arith.mulf %231, %231 : vector<16x32xf32>
    %cst_67 = arith.constant dense<0.000000e+00> : vector<16xf32>
    %233 = vector.multi_reduction <add>, %232, %cst_67 [1] : vector<16x32xf32> to vector<16xf32>
    %234 = vector.shape_cast %233 : vector<16xf32> to vector<16x1xf32>
    %cst_68 = arith.constant 3.200000e+01 : f32
    %235 = vector.broadcast %cst_68 : f32 to vector<16x1xf32>
    %236 = arith.divf %234, %235 : vector<16x1xf32>
    %cst_69 = arith.constant 9.99999974E-6 : f32
    %237 = vector.broadcast %cst_69 : f32 to vector<16x1xf32>
    %238 = arith.addf %236, %237 : vector<16x1xf32>
    %239 = math.rsqrt %238 : vector<16x1xf32>
    %240 = vector.broadcast %239 : vector<16x1xf32> to vector<16x32xf32>
    %241 = arith.mulf %231, %240 : vector<16x32xf32>
    %c224 = arith.constant 224 : index
    %c0_70 = arith.constant 0 : index
    %242 = vector.load %arg0[%c224, %c0_70] : memref<480x64xf32, #tpu.memory_space<vmem>>, vector<1x32xf32>
    %243 = vector.broadcast %242 : vector<1x32xf32> to vector<16x32xf32>
    %244 = arith.mulf %241, %243 : vector<16x32xf32>
    %c232 = arith.constant 232 : index
    %c0_71 = arith.constant 0 : index
    %245 = vector.load %arg0[%c232, %c0_71] : memref<480x64xf32, #tpu.memory_space<vmem>>, vector<1x32xf32>
    %246 = vector.broadcast %245 : vector<1x32xf32> to vector<16x32xf32>
    %247 = arith.addf %244, %246 : vector<16x32xf32>
    %cst_72 = arith.constant 0.000000e+00 : f32
    %248 = vector.broadcast %cst_72 : f32 to vector<16x32xf32>
    %249 = arith.maximumf %247, %248 : vector<16x32xf32>
    %c240 = arith.constant 240 : index
    %c0_73 = arith.constant 0 : index
    %250 = vector.load %arg0[%c240, %c0_73] : memref<480x64xf32, #tpu.memory_space<vmem>>, vector<32x16xf32>
    %cst_74 = arith.constant dense<0.000000e+00> : vector<16x16xf32>
    %251 = tpu.matmul %249, %250, %cst_74 {dimension_numbers = #tpu.dot_dimension_numbers<[1], [0], [0], [1], [0, 0, 1, 1], [], []>} : vector<16x32xf32>, vector<32x16xf32>, vector<16x16xf32> -> vector<16x16xf32>
    %c272 = arith.constant 272 : index
    %c0_75 = arith.constant 0 : index
    %252 = vector.load %arg0[%c272, %c0_75] : memref<480x64xf32, #tpu.memory_space<vmem>>, vector<1x16xf32>
    %cst_76 = arith.constant dense<0.000000e+00> : vector<1x16xf32>
    %253 = tpu.matmul %252, %251, %cst_76 {dimension_numbers = #tpu.dot_dimension_numbers<[1], [1], [0], [0], [0, 0, 1, 0], [], []>} : vector<1x16xf32>, vector<16x16xf32>, vector<1x16xf32> -> vector<1x16xf32>
    %c280 = arith.constant 280 : index
    %c0_77 = arith.constant 0 : index
    %254 = vector.load %arg0[%c280, %c0_77] : memref<480x64xf32, #tpu.memory_space<vmem>>, vector<1x16xf32>
    %cst_78 = arith.constant dense<0.000000e+00> : vector<16x1xf32>
    %255 = tpu.matmul %251, %254, %cst_78 {dimension_numbers = #tpu.dot_dimension_numbers<[1], [1], [0], [0], [0, 0, 1, 0], [], []>} : vector<16x16xf32>, vector<1x16xf32>, vector<16x1xf32> -> vector<16x1xf32>
    %256 = vector.broadcast %255 : vector<16x1xf32> to vector<16x16xf32>
    %257 = vector.broadcast %253 : vector<1x16xf32> to vector<16x16xf32>
    %258 = arith.addf %256, %257 : vector<16x16xf32>
    %cst_79 = arith.constant 2.000000e-01 : f32
    %259 = vector.broadcast %cst_79 : f32 to vector<16x16xf32>
    %260 = arith.mulf %259, %258 : vector<16x16xf32>
    %261 = arith.maximumf %258, %260 : vector<16x16xf32>
    %262 = arith.addf %261, %1 : vector<16x16xf32>
    %cst_80 = arith.constant dense<0xFF800000> : vector<16xf32>
    %263 = vector.multi_reduction <maximumf>, %262, %cst_80 [1] : vector<16x16xf32> to vector<16xf32>
    %264 = vector.shape_cast %263 : vector<16xf32> to vector<16x1xf32>
    %265 = vector.broadcast %264 : vector<16x1xf32> to vector<16x16xf32>
    %266 = arith.subf %262, %265 : vector<16x16xf32>
    %267 = math.exp %266 : vector<16x16xf32>
    %cst_81 = arith.constant dense<0.000000e+00> : vector<16xf32>
    %268 = vector.multi_reduction <add>, %267, %cst_81 [1] : vector<16x16xf32> to vector<16xf32>
    %269 = vector.shape_cast %268 : vector<16xf32> to vector<16x1xf32>
    %270 = vector.broadcast %269 : vector<16x1xf32> to vector<16x16xf32>
    %271 = arith.divf %267, %270 : vector<16x16xf32>
    %cst_82 = arith.constant dense<0.000000e+00> : vector<16x16xf32>
    %272 = tpu.matmul %271, %251, %cst_82 {dimension_numbers = #tpu.dot_dimension_numbers<[1], [0], [0], [1], [0, 0, 1, 1], [], []>} : vector<16x16xf32>, vector<16x16xf32>, vector<16x16xf32> -> vector<16x16xf32>
    %c288 = arith.constant 288 : index
    %c0_83 = arith.constant 0 : index
    %273 = vector.load %arg0[%c288, %c0_83] : memref<480x64xf32, #tpu.memory_space<vmem>>, vector<1x16xf32>
    %274 = vector.broadcast %273 : vector<1x16xf32> to vector<16x16xf32>
    %275 = arith.addf %272, %274 : vector<16x16xf32>
    %cst_84 = arith.constant dense<0.000000e+00> : vector<16xf32>
    %276 = vector.multi_reduction <add>, %275, %cst_84 [1] : vector<16x16xf32> to vector<16xf32>
    %277 = vector.shape_cast %276 : vector<16xf32> to vector<16x1xf32>
    %cst_85 = arith.constant 1.600000e+01 : f32
    %278 = vector.broadcast %cst_85 : f32 to vector<16x1xf32>
    %279 = arith.divf %277, %278 : vector<16x1xf32>
    %280 = vector.broadcast %279 : vector<16x1xf32> to vector<16x16xf32>
    %281 = arith.subf %275, %280 : vector<16x16xf32>
    %282 = arith.mulf %281, %281 : vector<16x16xf32>
    %cst_86 = arith.constant dense<0.000000e+00> : vector<16xf32>
    %283 = vector.multi_reduction <add>, %282, %cst_86 [1] : vector<16x16xf32> to vector<16xf32>
    %284 = vector.shape_cast %283 : vector<16xf32> to vector<16x1xf32>
    %cst_87 = arith.constant 1.600000e+01 : f32
    %285 = vector.broadcast %cst_87 : f32 to vector<16x1xf32>
    %286 = arith.divf %284, %285 : vector<16x1xf32>
    %cst_88 = arith.constant 9.99999974E-6 : f32
    %287 = vector.broadcast %cst_88 : f32 to vector<16x1xf32>
    %288 = arith.addf %286, %287 : vector<16x1xf32>
    %289 = math.rsqrt %288 : vector<16x1xf32>
    %290 = vector.broadcast %289 : vector<16x1xf32> to vector<16x16xf32>
    %291 = arith.mulf %281, %290 : vector<16x16xf32>
    %c296 = arith.constant 296 : index
    %c0_89 = arith.constant 0 : index
    %292 = vector.load %arg0[%c296, %c0_89] : memref<480x64xf32, #tpu.memory_space<vmem>>, vector<1x16xf32>
    %293 = vector.broadcast %292 : vector<1x16xf32> to vector<16x16xf32>
    %294 = arith.mulf %291, %293 : vector<16x16xf32>
    %c304 = arith.constant 304 : index
    %c0_90 = arith.constant 0 : index
    %295 = vector.load %arg0[%c304, %c0_90] : memref<480x64xf32, #tpu.memory_space<vmem>>, vector<1x16xf32>
    %296 = vector.broadcast %295 : vector<1x16xf32> to vector<16x16xf32>
    %297 = arith.addf %294, %296 : vector<16x16xf32>
    %c312 = arith.constant 312 : index
    %c0_91 = arith.constant 0 : index
    %298 = vector.load %arg0[%c312, %c0_91] : memref<480x64xf32, #tpu.memory_space<vmem>>, vector<32x16xf32>
    %cst_92 = arith.constant dense<0.000000e+00> : vector<16x16xf32>
    %299 = tpu.matmul %9, %298, %cst_92 {dimension_numbers = #tpu.dot_dimension_numbers<[1], [0], [0], [1], [0, 0, 1, 1], [], []>} : vector<16x32xf32>, vector<32x16xf32>, vector<16x16xf32> -> vector<16x16xf32>
    %300 = arith.addf %297, %299 : vector<16x16xf32>
    %c344 = arith.constant 344 : index
    %c0_93 = arith.constant 0 : index
    %301 = vector.load %arg0[%c344, %c0_93] : memref<480x64xf32, #tpu.memory_space<vmem>>, vector<1x16xf32>
    %302 = vector.broadcast %301 : vector<1x16xf32> to vector<16x16xf32>
    %303 = arith.addf %300, %302 : vector<16x16xf32>
    %c352 = arith.constant 352 : index
    %c0_94 = arith.constant 0 : index
    %304 = vector.load %arg0[%c352, %c0_94] : memref<480x64xf32, #tpu.memory_space<vmem>>, vector<16x64xf32>
    %cst_95 = arith.constant dense<0.000000e+00> : vector<16x64xf32>
    %305 = tpu.matmul %303, %304, %cst_95 {dimension_numbers = #tpu.dot_dimension_numbers<[1], [0], [0], [1], [0, 0, 1, 1], [], []>} : vector<16x16xf32>, vector<16x64xf32>, vector<16x64xf32> -> vector<16x64xf32>
    %c368 = arith.constant 368 : index
    %c0_96 = arith.constant 0 : index
    %306 = vector.load %arg0[%c368, %c0_96] : memref<480x64xf32, #tpu.memory_space<vmem>>, vector<1x64xf32>
    %307 = vector.broadcast %306 : vector<1x64xf32> to vector<16x64xf32>
    %308 = arith.addf %305, %307 : vector<16x64xf32>
    %cst_97 = arith.constant 0.000000e+00 : f32
    %309 = vector.broadcast %cst_97 : f32 to vector<16x64xf32>
    %310 = arith.maximumf %308, %309 : vector<16x64xf32>
    %c376 = arith.constant 376 : index
    %c0_98 = arith.constant 0 : index
    %311 = vector.load %arg0[%c376, %c0_98] : memref<480x64xf32, #tpu.memory_space<vmem>>, vector<64x64xf32>
    %cst_99 = arith.constant dense<0.000000e+00> : vector<16x64xf32>
    %312 = tpu.matmul %310, %311, %cst_99 {dimension_numbers = #tpu.dot_dimension_numbers<[1], [0], [0], [1], [0, 0, 1, 1], [], []>} : vector<16x64xf32>, vector<64x64xf32>, vector<16x64xf32> -> vector<16x64xf32>
    %c440 = arith.constant 440 : index
    %c0_100 = arith.constant 0 : index
    %313 = vector.load %arg0[%c440, %c0_100] : memref<480x64xf32, #tpu.memory_space<vmem>>, vector<1x64xf32>
    %314 = vector.broadcast %313 : vector<1x64xf32> to vector<16x64xf32>
    %315 = arith.addf %312, %314 : vector<16x64xf32>
    %cst_101 = arith.constant 0.000000e+00 : f32
    %316 = vector.broadcast %cst_101 : f32 to vector<16x64xf32>
    %317 = arith.maximumf %315, %316 : vector<16x64xf32>
    %c448 = arith.constant 448 : index
    %c0_102 = arith.constant 0 : index
    %318 = vector.load %arg0[%c448, %c0_102] : memref<480x64xf32, #tpu.memory_space<vmem>>, vector<32x16xf32>
    %cst_103 = arith.constant dense<0.000000e+00> : vector<32x16xf32>
    %319 = tpu.matmul %318, %303, %cst_103 {dimension_numbers = #tpu.dot_dimension_numbers<[1], [1], [0], [0], [0, 0, 1, 0], [], []>} : vector<32x16xf32>, vector<16x16xf32>, vector<32x16xf32> -> vector<32x16xf32>
    %c80_104 = arith.constant 80 : index
    %c0_105 = arith.constant 0 : index
    %320 = vector.load %arg1[%c80_104, %c0_105] : memref<96x32xf32, #tpu.memory_space<vmem>>, vector<16x32xf32>
    %321 = vector.extract_strided_slice %317 {offsets = [0, 0], sizes = [16, 32], strides = [1, 1]} : vector<16x64xf32> to vector<16x32xf32>
    %cst_106 = arith.constant dense<0.000000e+00> : vector<16x16xf32>
    %322 = tpu.matmul %321, %319, %cst_106 {dimension_numbers = #tpu.dot_dimension_numbers<[1], [0], [0], [1], [0, 0, 1, 1], [], []>} : vector<16x32xf32>, vector<32x16xf32>, vector<16x16xf32> -> vector<16x16xf32>
    %323 = vector.extract_strided_slice %320 {offsets = [0, 0], sizes = [16, 16], strides = [1, 1]} : vector<16x32xf32> to vector<16x16xf32>
    %324 = arith.addf %322, %323 : vector<16x16xf32>
    %325 = vector.extract_strided_slice %317 {offsets = [0, 32], sizes = [16, 32], strides = [1, 1]} : vector<16x64xf32> to vector<16x32xf32>
    %cst_107 = arith.constant dense<0.000000e+00> : vector<16x16xf32>
    %326 = tpu.matmul %325, %319, %cst_107 {dimension_numbers = #tpu.dot_dimension_numbers<[1], [0], [0], [1], [0, 0, 1, 1], [], []>} : vector<16x32xf32>, vector<32x16xf32>, vector<16x16xf32> -> vector<16x16xf32>
    %327 = vector.extract_strided_slice %320 {offsets = [0, 16], sizes = [16, 16], strides = [1, 1]} : vector<16x32xf32> to vector<16x16xf32>
    %328 = arith.addf %326, %327 : vector<16x16xf32>
    %329 = tpu.concatenate %324, %328, %303 in 1 : vector<16x16xf32>, vector<16x16xf32>, vector<16x16xf32> -> vector<16x48xf32>
    %c0_108 = arith.constant 0 : index
    %c0_109 = arith.constant 0 : index
    %330 = vector.load %arg2[%c0_108, %c0_109] : memref<16x48xf32, #tpu.memory_space<vmem>>, vector<16x48xf32>
    tpu.vector_store %arg2[%c0_108, %c0_109], %329 {strides = array<i32>} : memref<16x48xf32, #tpu.memory_space<vmem>>, vector<16x48xf32>,
    return
  }
}

</mosaic_0001>

<llo_original>
// kernel: tile.9
$region0: #{tile.9}
  %s0 = inlined_call_operand.vmem [shape: f32[4,16,16], index: 0, kind: input, shape index: {}]
  %s1 = inlined_call_operand.vmem [shape: f32[64,16], index: 1, kind: output, shape index: {}]
  $region1: #{tile.9} parent=0
    #allocation0 [shape = 'u8[65536]{0}', space=vmem, size = 0x10000, scoped, tag = 'scoped mem for input reshape']
    %s3 = sshll.u32 1, 4
    %s4 = ssub.s32 %s3, 1
    %s5 = smul.addr 4, 15
    %s6 = scalar_lea.vmem %s0, %s5
    %v7 = vld [vmem:[%s6] sm:%s4]
    %s8 = scalar_lea.vmem [#allocation0], 120
    %9 = vst [vmem:[%s8] sm:%s4] %v7
    %s10 = smul.addr 4, 14
    %s11 = scalar_lea.vmem %s0, %s10
    %v12 = vld [vmem:[%s11] sm:%s4]
    %s13 = scalar_lea.vmem [#allocation0], 112
    %14 = vst [vmem:[%s13] sm:%s4] %v12
    %s15 = smul.addr 4, 13
    %s16 = scalar_lea.vmem %s0, %s15
    %v17 = vld [vmem:[%s16] sm:%s4]
    %s18 = scalar_lea.vmem [#allocation0], 104
    %19 = vst [vmem:[%s18] sm:%s4] %v17
    %s20 = smul.addr 4, 12
    %s21 = scalar_lea.vmem %s0, %s20
    %v22 = vld [vmem:[%s21] sm:%s4]
    %s23 = scalar_lea.vmem [#allocation0], 96
    %24 = vst [vmem:[%s23] sm:%s4] %v22
    %s25 = smul.addr 4, 11
    %s26 = scalar_lea.vmem %s0, %s25
    %v27 = vld [vmem:[%s26] sm:%s4]
    %s28 = scalar_lea.vmem [#allocation0], 88
    %29 = vst [vmem:[%s28] sm:%s4] %v27
    %s30 = smul.addr 4, 10
    %s31 = scalar_lea.vmem %s0, %s30
    %v32 = vld [vmem:[%s31] sm:%s4]
    %s33 = scalar_lea.vmem [#allocation0], 80
    %34 = vst [vmem:[%s33] sm:%s4] %v32
    %s35 = smul.addr 4, 9
    %s36 = scalar_lea.vmem %s0, %s35
    %v37 = vld [vmem:[%s36] sm:%s4]
    %s38 = scalar_lea.vmem [#allocation0], 72
    %39 = vst [vmem:[%s38] sm:%s4] %v37
    %s40 = smul.addr 4, 8
    %s41 = scalar_lea.vmem %s0, %s40
    %v42 = vld [vmem:[%s41] sm:%s4]
    %s43 = scalar_lea.vmem [#allocation0], 64
    %44 = vst [vmem:[%s43] sm:%s4] %v42
    %s45 = smul.addr 4, 7
    %s46 = scalar_lea.vmem %s0, %s45
    %v47 = vld [vmem:[%s46] sm:%s4]
    %s48 = scalar_lea.vmem [#allocation0], 56
    %49 = vst [vmem:[%s48] sm:%s4] %v47
    %s50 = smul.addr 4, 6
    %s51 = scalar_lea.vmem %s0, %s50
    %v52 = vld [vmem:[%s51] sm:%s4]
    %s53 = scalar_lea.vmem [#allocation0], 48
    %54 = vst [vmem:[%s53] sm:%s4] %v52
    %s55 = smul.addr 4, 5
    %s56 = scalar_lea.vmem %s0, %s55
    %v57 = vld [vmem:[%s56] sm:%s4]
    %s58 = scalar_lea.vmem [#allocation0], 40
    %59 = vst [vmem:[%s58] sm:%s4] %v57
    %s60 = smul.addr 4, 4
    %s61 = scalar_lea.vmem %s0, %s60
    %v62 = vld [vmem:[%s61] sm:%s4]
    %s63 = scalar_lea.vmem [#allocation0], 32
    %64 = vst [vmem:[%s63] sm:%s4] %v62
    %s65 = smul.addr 4, 3
    %s66 = scalar_lea.vmem %s0, %s65
    %v67 = vld [vmem:[%s66] sm:%s4]
    %s68 = scalar_lea.vmem [#allocation0], 24
    %69 = vst [vmem:[%s68] sm:%s4] %v67
    %s70 = smul.addr 4, 2
    %s71 = scalar_lea.vmem %s0, %s70
    %v72 = vld [vmem:[%s71] sm:%s4]
    %s73 = scalar_lea.vmem [#allocation0], 16
    %74 = vst [vmem:[%s73] sm:%s4] %v72
    %s75 = scalar_lea.vmem %s0, 4
    %v76 = vld [vmem:[%s75] sm:%s4]
    %s77 = scalar_lea.vmem [#allocation0], 8
    %78 = vst [vmem:[%s77] sm:%s4] %v76
    %v79 = vld [vmem:[%s0] sm:%s4]
    %80 = vst [vmem:[#allocation0] sm:%s4] %v79
    %v81 = vld [vmem:[#allocation0] ss:$8 sm:$0xf]
    %v82 = vld [vmem:[#allocation0] ss:$8 sm:$0xf0]
    %vm83 = vcmask 1047556
    %v84 = vsel %vm83, %v82, %v81
    %vm85 = vcmask 130048
    %86 = vst.msk [vmem:[%s1] sm:$0xff] %vm85, %v84
    %s87 = scalar_lea.vmem [#allocation0], 64
    %v88 = vld [vmem:[%s87] ss:$8 sm:$0xf]
    %s89 = scalar_lea.vmem [#allocation0], 64
    %v90 = vld [vmem:[%s89] ss:$8 sm:$0xf0]
    %vm91 = vcmask 1047556
    %v92 = vsel %vm91, %v90, %v88
    %vm93 = vcmask 130048
    %s94 = scalar_lea.vmem %s1, 8
    %95 = vst.msk [vmem:[%s94] sm:$0xff] %vm93, %v92
    %s96 = scalar_lea.vmem [#allocation0], 3
    %v97 = vld [vmem:[%s96] ss:$8 sm:$0xf]
    %s98 = scalar_lea.vmem [#allocation0], 3
    %v99 = vld [vmem:[%s98] ss:$8 sm:$0xf0]
    %vm100 = vcmask 1047556
    %v101 = vsel %vm100, %v99, %v97
    %102 = vrot.lane.b32.xlu0 %v101, 48
    %v103 = vpop.permute.xlu0 %102
    %vm104 = vcmask 523648
    %105 = vst.msk [vmem:[%s1] sm:$0xff] %vm104, %v103
    %s106 = scalar_lea.vmem [#allocation0], 67
    %v107 = vld [vmem:[%s106] ss:$8 sm:$0xf]
    %s108 = scalar_lea.vmem [#allocation0], 67
    %v109 = vld [vmem:[%s108] ss:$8 sm:$0xf0]
    %vm110 = vcmask 1047556
    %v111 = vsel %vm110, %v109, %v107
    %112 = vrot.lane.b32.xlu0 %v111, 48
    %v113 = vpop.permute.xlu0 %112
    %vm114 = vcmask 523648
    %s115 = scalar_lea.vmem %s1, 8
    %116 = vst.msk [vmem:[%s115] sm:$0xff] %vm114, %v113
    %s117 = scalar_lea.vmem [#allocation0], 2
    %v118 = vld [vmem:[%s117] ss:$8 sm:$0xf]
    %s119 = scalar_lea.vmem [#allocation0], 2
    %v120 = vld [vmem:[%s119] ss:$8 sm:$0xf0]
    %vm121 = vcmask 1047556
    %v122 = vsel %vm121, %v120, %v118
    %123 = vrot.lane.b32.xlu0 %v122, 32
    %v124 = vpop.permute.xlu0 %123
    %vm125 = vcmask 392448
    %126 = vst.msk [vmem:[%s1] sm:$0xff] %vm125, %v124
    %s127 = scalar_lea.vmem [#allocation0], 66
    %v128 = vld [vmem:[%s127] ss:$8 sm:$0xf]
    %s129 = scalar_lea.vmem [#allocation0], 66
    %v130 = vld [vmem:[%s129] ss:$8 sm:$0xf0]
    %vm131 = vcmask 1047556
    %v132 = vsel %vm131, %v130, %v128
    %133 = vrot.lane.b32.xlu0 %v132, 32
    %v134 = vpop.permute.xlu0 %133
    %vm135 = vcmask 392448
    %s136 = scalar_lea.vmem %s1, 8
    %137 = vst.msk [vmem:[%s136] sm:$0xff] %vm135, %v134
    %s138 = scalar_lea.vmem [#allocation0], 1
    %v139 = vld [vmem:[%s138] ss:$8 sm:$0xf]
    %s140 = scalar_lea.vmem [#allocation0], 1
    %v141 = vld [vmem:[%s140] ss:$8 sm:$0xf0]
    %vm142 = vcmask 1047556
    %v143 = vsel %vm142, %v141, %v139
    %144 = vrot.lane.b32.xlu0 %v143, 16
    %v145 = vpop.permute.xlu0 %144
    %vm146 = vcmask 261248
    %147 = vst.msk [vmem:[%s1] sm:$0xff] %vm146, %v145
    %s148 = scalar_lea.vmem [#allocation0], 65
    %v149 = vld [vmem:[%s148] ss:$8 sm:$0xf]
    %s150 = scalar_lea.vmem [#allocation0], 65
    %v151 = vld [vmem:[%s150] ss:$8 sm:$0xf0]
    %vm152 = vcmask 1047556
    %v153 = vsel %vm152, %v151, %v149
    %154 = vrot.lane.b32.xlu0 %v153, 16
    %v155 = vpop.permute.xlu0 %154
    %vm156 = vcmask 261248
    %s157 = scalar_lea.vmem %s1, 8
    %158 = vst.msk [vmem:[%s157] sm:$0xff] %vm156, %v155

// kernel: model_forward.1
$region0: #{model_forward.1}
  #allocation0 [shape = 'u32[]', space=smem, size = 0x4, offset = 0x4, fixed_abs, tag = 'smem constant byte address 0x4 - core index']
  #allocation1 [shape = 'u32[144,128]{1,0:T(1,128)}', space=vmem, size = 0x12000, scoped, tag = 'internal scratch']
  %s0 = inlined_call_operand.vmem [shape: f32[480,64], index: 0, kind: input, shape index: {}]
  %s1 = inlined_call_operand.vmem [shape: f32[96,32], index: 1, kind: input, shape index: {}]
  %s2 = inlined_call_operand.vmem [shape: f32[16,48], index: 2, kind: output, shape index: {}]
  %s3 = sld [smem:[#allocation0]]
  $region18: #{model_forward.1} parent=0
    _
  %s5 = ssub.s32 1, %s3
  %s6 = scalar_select 0, %s5, %s3
  // Predicated region
  $region2: #{model_forward.1} parent=0 // pred_check
    _
  $region3: #{model_forward.1} parent=0 // pred_check_branch
    %8 = sbr.rel (0) target = $region5
  $region4: #{model_forward.1} parent=0 // pred_region
    _
  $region5: #{model_forward.1} parent=0 // pred_fallthru
    _
  // Predicated region
  $region6: #{model_forward.1} parent=0 // pred_check
    _
  $region7: #{model_forward.1} parent=0 // pred_check_branch
    %10 = sbr.rel (0) target = $region9
  $region8: #{model_forward.1} parent=0 // pred_region
    _
  $region9: #{model_forward.1} parent=0 // pred_fallthru
    _
  %v11 = vld [vmem:[%s1 + $0x10] sm:$0xff]
  %v12 = vld [vmem:[%s1 + $0x18] sm:$0xff]
  %v13 = vld [vmem:[%s1 + $0x20] sm:$0xff]
  %v14 = vld [vmem:[%s1 + $0x28] sm:$0xff]
  %v15 = vld [vmem:[%s1 + $0x30] sm:$0xff]
  %v16 = vld [vmem:[%s1 + $0x38] sm:$0xff]
  %v17 = vld [vmem:[%s1 + $0x40] sm:$0xff]
  %v18 = vld [vmem:[%s1 + $0x48] sm:$0xff]
  %v19 = vld [vmem:[%s1] sm:$0xff]
  %v20 = vld [vmem:[%s1 + $0x8] sm:$0xff]
  %v21 = vld [vmem:[%s0] sm:$0xff]
  %v22 = vld [vmem:[%s0 + $0x8] sm:$0xff]
  %v23 = vld [vmem:[%s0 + $0x10] sm:$0x1]
  %v24 = vlaneseq
  %v25 = vshrl.u32 %v24, 7
  %v26 = vsub.s32 0, %v25
  %v27 = vrot.slane %v23, %v26
  %vm28 = vcmask 130048
  %v30 = vsel %vm28, %v19, 0
  %v33 = vsel %vm28, %v20, 0
  %35 = vmatprep.subr.mxu0 0.0
  %36 = vmatpush1.msra.mxu0 0.0
  %37 = vmatprep.subr.mxu0 0.0
  %38 = vmatpush1.msra.mxu0 0.0
  %39 = vmatprep.subr.mxu0 0.0
  %40 = vmatpush1.msra.mxu0 0.0
  %41 = vmatprep.subr.mxu0 0.0
  %42 = vmatpush1.msra.mxu0 0.0
  %43 = vmatprep.subr.mxu0 0.0
  %44 = vmatpush1.msra.mxu0 0.0
  %45 = vmatprep.subr.mxu0 0.0
  %46 = vmatpush1.msra.mxu0 0.0
  %47 = vmatprep.subr.mxu0 0.0
  %48 = vmatpush1.msra.mxu0 0.0
  %49 = vmatprep.subr.mxu0 0.0
  %50 = vmatpush1.msra.mxu0 0.0
  %51 = vmatprep.subr.mxu0 0.0
  %52 = vmatpush1.msra.mxu0 0.0
  %53 = vmatprep.subr.mxu0 0.0
  %54 = vmatpush1.msra.mxu0 0.0
  %55 = vmatprep.subr.mxu0 0.0
  %56 = vmatpush1.msra.mxu0 0.0
  %57 = vmatprep.subr.mxu0 0.0
  %58 = vmatpush1.msra.mxu0 0.0
  %59 = vmatprep.subr.mxu0 0.0
  %60 = vmatpush1.msra.mxu0 0.0
  %61 = vmatprep.subr.mxu0 0.0
  %62 = vmatpush1.msra.mxu0 0.0
  %63 = vmatprep.subr.mxu0 0.0
  %64 = vmatpush1.msra.mxu0 %v22
  %65 = vmatprep.subr.mxu0 0.0
  %66 = vmatpush1.msra.mxu0 %v21
  %67 = vmatprep.subr.mxu0 0.0
  %68 = vmatpush2.msra.mxu0 0.0
  %69 = vmatprep.subr.mxu0 0.0
  %70 = vmatpush2.msra.mxu0 0.0
  %71 = vmatprep.subr.mxu0 0.0
  %72 = vmatpush2.msra.mxu0 0.0
  %73 = vmatprep.subr.mxu0 0.0
  %74 = vmatpush2.msra.mxu0 0.0
  %75 = vmatprep.subr.mxu0 0.0
  %76 = vmatpush2.msra.mxu0 0.0
  %77 = vmatprep.subr.mxu0 0.0
  %78 = vmatpush2.msra.mxu0 0.0
  %79 = vmatprep.subr.mxu0 0.0
  %80 = vmatpush2.msra.mxu0 0.0
  %81 = vmatprep.subr.mxu0 0.0
  %82 = vmatpush2.msra.mxu0 0.0
  %83 = vmatprep.subr.mxu0 0.0
  %84 = vmatpush2.msra.mxu0 0.0
  %85 = vmatprep.subr.mxu0 0.0
  %86 = vmatpush2.msra.mxu0 0.0
  %87 = vmatprep.subr.mxu0 0.0
  %88 = vmatpush2.msra.mxu0 0.0
  %89 = vmatprep.subr.mxu0 0.0
  %90 = vmatpush2.msra.mxu0 0.0
  %91 = vmatprep.subr.mxu0 0.0
  %92 = vmatpush2.msra.mxu0 0.0
  %93 = vmatprep.subr.mxu0 0.0
  %94 = vmatpush2.msra.mxu0 0.0
  %95 = vmatprep.subr.mxu0 0.0
  %96 = vmatpush2.msra.mxu0 0.0
  %97 = vmatprep.subr.mxu0 0.0
  %98 = vmatpush2.msra.mxu0 0.0
  %99 = vmatprep.mubr.f32.mxu0 0.0
  %100 = vmatmul.mubr.f32.gmra.mxu0 %v30
  %v101 = vpop.f32.mrf.mxu0
  %v102 = vadd.f32 %v27, %v101
  %v103 = vpop.f32.mrf.mxu0
  %104 = vmatprep.mubr.f32.mxu0 0.0
  %105 = vmatmul.mubr.f32.gmra.mxu0 %v33
  %v106 = vpop.f32.mrf.mxu0
  %v107 = vadd.f32 %v27, %v106
  %v108 = vpop.f32.mrf.mxu0
  %109 = vdwg.mxu0
  %v110 = vmax.f32 %v102, 0.0
  %v111 = vmax.f32 %v107, 0.0
  %v112 = vld [vmem:[%s0 + $0x18] sm:$0xff]
  %v113 = vld [vmem:[%s0 + $0x20] sm:$0xff]
  %v114 = vld [vmem:[%s0 + $0x28] sm:$0xff]
  %v115 = vld [vmem:[%s0 + $0x30] sm:$0xff]
  %vm116 = vcmask 261120
  %v118 = vsel %vm116, %v110, 0
  %v121 = vsel %vm116, %v111, 0
  %123 = vmatprep.subr.mxu0 0.0
  %124 = vmatpush1.msra.mxu0 0.0
  %125 = vmatprep.subr.mxu0 0.0
  %126 = vmatpush1.msra.mxu0 0.0
  %127 = vmatprep.subr.mxu0 0.0
  %128 = vmatpush1.msra.mxu0 0.0
  %129 = vmatprep.subr.mxu0 0.0
  %130 = vmatpush1.msra.mxu0 0.0
  %131 = vmatprep.subr.mxu0 0.0
  %132 = vmatpush1.msra.mxu0 0.0
  %133 = vmatprep.subr.mxu0 0.0
  %134 = vmatpush1.msra.mxu0 0.0
  %135 = vmatprep.subr.mxu0 0.0
  %136 = vmatpush1.msra.mxu0 0.0
  %137 = vmatprep.subr.mxu0 0.0
  %138 = vmatpush1.msra.mxu0 0.0
  %139 = vmatprep.subr.mxu0 0.0
  %140 = vmatpush1.msra.mxu0 0.0
  %141 = vmatprep.subr.mxu0 0.0
  %142 = vmatpush1.msra.mxu0 0.0
  %143 = vmatprep.subr.mxu0 0.0
  %144 = vmatpush1.msra.mxu0 0.0
  %145 = vmatprep.subr.mxu0 0.0
  %146 = vmatpush1.msra.mxu0 0.0
  %147 = vmatprep.subr.mxu0 0.0
  %148 = vmatpush1.msra.mxu0 %v115
  %149 = vmatprep.subr.mxu0 0.0
  %150 = vmatpush1.msra.mxu0 %v114
  %151 = vmatprep.subr.mxu0 0.0
  %152 = vmatpush1.msra.mxu0 %v113
  %153 = vmatprep.subr.mxu0 0.0
  %154 = vmatpush1.msra.mxu0 %v112
  %155 = vmatprep.subr.mxu0 0.0
  %156 = vmatpush2.msra.mxu0 0.0
  %157 = vmatprep.subr.mxu0 0.0
  %158 = vmatpush2.msra.mxu0 0.0
  %159 = vmatprep.subr.mxu0 0.0
  %160 = vmatpush2.msra.mxu0 0.0
  %161 = vmatprep.subr.mxu0 0.0
  %162 = vmatpush2.msra.mxu0 0.0
  %163 = vmatprep.subr.mxu0 0.0
  %164 = vmatpush2.msra.mxu0 0.0
  %165 = vmatprep.subr.mxu0 0.0
  %166 = vmatpush2.msra.mxu0 0.0
  %167 = vmatprep.subr.mxu0 0.0
  %168 = vmatpush2.msra.mxu0 0.0
  %169 = vmatprep.subr.mxu0 0.0
  %170 = vmatpush2.msra.mxu0 0.0
  %171 = vmatprep.subr.mxu0 0.0
  %172 = vmatpush2.msra.mxu0 0.0
  %173 = vmatprep.subr.mxu0 0.0
  %174 = vmatpush2.msra.mxu0 0.0
  %175 = vmatprep.subr.mxu0 0.0
  %176 = vmatpush2.msra.mxu0 0.0
  %177 = vmatprep.subr.mxu0 0.0
  %178 = vmatpush2.msra.mxu0 0.0
  %179 = vmatprep.subr.mxu0 0.0
  %180 = vmatpush2.msra.mxu0 0.0
  %181 = vmatprep.subr.mxu0 0.0
  %182 = vmatpush2.msra.mxu0 0.0
  %183 = vmatprep.subr.mxu0 0.0
  %184 = vmatpush2.msra.mxu0 0.0
  %185 = vmatprep.subr.mxu0 0.0
  %186 = vmatpush2.msra.mxu0 0.0
  %187 = vmatprep.mubr.f32.mxu0 0.0
  %188 = vmatmul.mubr.f32.gmra.mxu0 %v118
  %v189 = vpop.f32.mrf.mxu0
  %v190 = vadd.f32 0.0, %v189
  %v191 = vpop.f32.mrf.mxu0
  %192 = vmatprep.mubr.f32.mxu0 0.0
  %193 = vmatmul.mubr.f32.gmra.mxu0 %v121
  %v194 = vpop.f32.mrf.mxu0
  %v195 = vadd.f32 0.0, %v194
  %v196 = vpop.f32.mrf.mxu0
  %197 = vdwg.mxu0
  %v198 = vld [vmem:[%s0 + $0x38] sm:$0xf]
  %v200 = vsel %vm116, %v198, 0
  %v203 = vsel %vm116, %v190, 0
  %v206 = vsel %vm116, %v195, 0
  %208 = vmatprep.subr.mxu0 0.0
  %209 = vmatpush1.xpose.msra.mxu0 0.0
  %210 = vmatprep.subr.mxu0 0.0
  %211 = vmatpush1.xpose.msra.mxu0 0.0
  %212 = vmatprep.subr.mxu0 0.0
  %213 = vmatpush1.xpose.msra.mxu0 0.0
  %214 = vmatprep.subr.mxu0 0.0
  %215 = vmatpush1.xpose.msra.mxu0 0.0
  %216 = vmatprep.subr.mxu0 0.0
  %217 = vmatpush1.xpose.msra.mxu0 0.0
  %218 = vmatprep.subr.mxu0 0.0
  %219 = vmatpush1.xpose.msra.mxu0 0.0
  %220 = vmatprep.subr.mxu0 0.0
  %221 = vmatpush1.xpose.msra.mxu0 0.0
  %222 = vmatprep.subr.mxu0 0.0
  %223 = vmatpush1.xpose.msra.mxu0 0.0
  %224 = vmatprep.subr.mxu0 0.0
  %225 = vmatpush1.xpose.msra.mxu0 0.0
  %226 = vmatprep.subr.mxu0 0.0
  %227 = vmatpush1.xpose.msra.mxu0 0.0
  %228 = vmatprep.subr.mxu0 0.0
  %229 = vmatpush1.xpose.msra.mxu0 0.0
  %230 = vmatprep.subr.mxu0 0.0
  %231 = vmatpush1.xpose.msra.mxu0 0.0
  %232 = vmatprep.subr.mxu0 0.0
  %233 = vmatpush1.xpose.msra.mxu0 0.0
  %234 = vmatprep.subr.mxu0 0.0
  %235 = vmatpush1.xpose.msra.mxu0 0.0
  %236 = vmatprep.subr.mxu0 0.0
  %237 = vmatpush1.xpose.msra.mxu0 %v206
  %238 = vmatprep.subr.mxu0 0.0
  %239 = vmatpush1.xpose.msra.mxu0 %v203
  %240 = vmatprep.subr.mxu0 0.0
  %241 = vmatpush2.xpose.msra.mxu0 0.0
  %242 = vmatprep.subr.mxu0 0.0
  %243 = vmatpush2.xpose.msra.mxu0 0.0
  %244 = vmatprep.subr.mxu0 0.0
  %245 = vmatpush2.xpose.msra.mxu0 0.0
  %246 = vmatprep.subr.mxu0 0.0
  %247 = vmatpush2.xpose.msra.mxu0 0.0
  %248 = vmatprep.subr.mxu0 0.0
  %249 = vmatpush2.xpose.msra.mxu0 0.0
  %250 = vmatprep.subr.mxu0 0.0
  %251 = vmatpush2.xpose.msra.mxu0 0.0
  %252 = vmatprep.subr.mxu0 0.0
  %253 = vmatpush2.xpose.msra.mxu0 0.0
  %254 = vmatprep.subr.mxu0 0.0
  %255 = vmatpush2.xpose.msra.mxu0 0.0
  %256 = vmatprep.subr.mxu0 0.0
  %257 = vmatpush2.xpose.msra.mxu0 0.0
  %258 = vmatprep.subr.mxu0 0.0
  %259 = vmatpush2.xpose.msra.mxu0 0.0
  %260 = vmatprep.subr.mxu0 0.0
  %261 = vmatpush2.xpose.msra.mxu0 0.0
  %262 = vmatprep.subr.mxu0 0.0
  %263 = vmatpush2.xpose.msra.mxu0 0.0
  %264 = vmatprep.subr.mxu0 0.0
  %265 = vmatpush2.xpose.msra.mxu0 0.0
  %266 = vmatprep.subr.mxu0 0.0
  %267 = vmatpush2.xpose.msra.mxu0 0.0
  %268 = vmatprep.subr.mxu0 0.0
  %269 = vmatpush2.xpose.msra.mxu0 0.0
  %270 = vmatprep.subr.mxu0 0.0
  %271 = vmatpush2.xpose.msra.mxu0 0.0
  %272 = vmatprep.mubr.f32.mxu0 0.0
  %273 = vmatmul.mubr.f32.gmra.mxu0 %v200
  %v274 = vpop.f32.mrf.mxu0
  %v275 = vadd.f32 0.0, %v274
  %v276 = vpop.f32.mrf.mxu0
  %277 = vdwg.mxu0
  %v278 = vld [vmem:[%s0 + $0x40] sm:$0xf]
  %v280 = vsel %vm116, %v278, 0
  %282 = vmatprep.subr.mxu0 0.0
  %283 = vmatpush1.xpose.msra.mxu0 0.0
  %284 = vmatprep.subr.mxu0 0.0
  %285 = vmatpush1.xpose.msra.mxu0 0.0
  %286 = vmatprep.subr.mxu0 0.0
  %287 = vmatpush1.xpose.msra.mxu0 0.0
  %288 = vmatprep.subr.mxu0 0.0
  %289 = vmatpush1.xpose.msra.mxu0 0.0
  %290 = vmatprep.subr.mxu0 0.0
  %291 = vmatpush1.xpose.msra.mxu0 0.0
  %292 = vmatprep.subr.mxu0 0.0
  %293 = vmatpush1.xpose.msra.mxu0 0.0
  %294 = vmatprep.subr.mxu0 0.0
  %295 = vmatpush1.xpose.msra.mxu0 0.0
  %296 = vmatprep.subr.mxu0 0.0
  %297 = vmatpush1.xpose.msra.mxu0 0.0
  %298 = vmatprep.subr.mxu0 0.0
  %299 = vmatpush1.xpose.msra.mxu0 0.0
  %300 = vmatprep.subr.mxu0 0.0
  %301 = vmatpush1.xpose.msra.mxu0 0.0
  %302 = vmatprep.subr.mxu0 0.0
  %303 = vmatpush1.xpose.msra.mxu0 0.0
  %304 = vmatprep.subr.mxu0 0.0
  %305 = vmatpush1.xpose.msra.mxu0 0.0
  %306 = vmatprep.subr.mxu0 0.0
  %307 = vmatpush1.xpose.msra.mxu0 0.0
  %308 = vmatprep.subr.mxu0 0.0
  %309 = vmatpush1.xpose.msra.mxu0 0.0
  %310 = vmatprep.subr.mxu0 0.0
  %311 = vmatpush1.xpose.msra.mxu0 0.0
  %312 = vmatprep.subr.mxu0 0.0
  %313 = vmatpush1.xpose.msra.mxu0 %v280
  %314 = vmatprep.subr.mxu0 0.0
  %315 = vmatpush2.xpose.msra.mxu0 0.0
  %316 = vmatprep.subr.mxu0 0.0
  %317 = vmatpush2.xpose.msra.mxu0 0.0
  %318 = vmatprep.subr.mxu0 0.0
  %319 = vmatpush2.xpose.msra.mxu0 0.0
  %320 = vmatprep.subr.mxu0 0.0
  %321 = vmatpush2.xpose.msra.mxu0 0.0
  %322 = vmatprep.subr.mxu0 0.0
  %323 = vmatpush2.xpose.msra.mxu0 0.0
  %324 = vmatprep.subr.mxu0 0.0
  %325 = vmatpush2.xpose.msra.mxu0 0.0
  %326 = vmatprep.subr.mxu0 0.0
  %327 = vmatpush2.xpose.msra.mxu0 0.0
  %328 = vmatprep.subr.mxu0 0.0
  %329 = vmatpush2.xpose.msra.mxu0 0.0
  %330 = vmatprep.subr.mxu0 0.0
  %331 = vmatpush2.xpose.msra.mxu0 0.0
  %332 = vmatprep.subr.mxu0 0.0
  %333 = vmatpush2.xpose.msra.mxu0 0.0
  %334 = vmatprep.subr.mxu0 0.0
  %335 = vmatpush2.xpose.msra.mxu0 0.0
  %336 = vmatprep.subr.mxu0 0.0
  %337 = vmatpush2.xpose.msra.mxu0 0.0
  %338 = vmatprep.subr.mxu0 0.0
  %339 = vmatpush2.xpose.msra.mxu0 0.0
  %340 = vmatprep.subr.mxu0 0.0
  %341 = vmatpush2.xpose.msra.mxu0 0.0
  %342 = vmatprep.subr.mxu0 0.0
  %343 = vmatpush2.xpose.msra.mxu0 0.0
  %344 = vmatprep.subr.mxu0 0.0
  %345 = vmatpush2.xpose.msra.mxu0 0.0
  %346 = vmatprep.mubr.f32.mxu0 0.0
  %347 = vmatmul.mubr.f32.gmra.mxu0 %v203
  %v348 = vpop.f32.mrf.mxu0
  %v349 = vadd.f32 0.0, %v348
  %v350 = vpop.f32.mrf.mxu0
  %351 = vmatprep.mubr.f32.mxu0 0.0
  %352 = vmatmul.mubr.f32.gmra.mxu0 %v206
  %v353 = vpop.f32.mrf.mxu0
  %v354 = vadd.f32 0.0, %v353
  %v355 = vpop.f32.mrf.mxu0
  %356 = vdwg.mxu0
  %358 = vset.pattern.permute.xlu0 0
  %359 = vperm.xlu0 %358, %v349
  %v360 = vpop.permute.xlu0 %359
  %363 = vset.pattern.permute.xlu0 0
  %364 = vperm.xlu0 %363, %v354
  %v365 = vpop.permute.xlu0 %364
  %v367 = vlaneseq
  %v368 = vshrl.u32 %v367, 7
  %v369 = vsub.s32 0, %v368
  %v370 = vrot.slane %v275, %v369
  %v371 = vadd.f32 %v360, %v370
  %v372 = vadd.f32 %v365, %v370
  %373 = vset.pattern.permute.xlu0 1
  %374 = vperm.xlu0 %373, %v349
  %v375 = vpop.permute.xlu0 %374
  %377 = vset.pattern.permute.xlu0 1
  %378 = vperm.xlu0 %377, %v354
  %v379 = vpop.permute.xlu0 %378
  %v381 = vlaneseq
  %v382 = vshrl.u32 %v381, 7
  %v383 = vsub.s32 1, %v382
  %v384 = vrot.slane %v275, %v383
  %v385 = vadd.f32 %v375, %v384
  %v386 = vadd.f32 %v379, %v384
  %387 = vset.pattern.permute.xlu0 2
  %388 = vperm.xlu0 %387, %v349
  %v389 = vpop.permute.xlu0 %388
  %391 = vset.pattern.permute.xlu0 2
  %392 = vperm.xlu0 %391, %v354
  %v393 = vpop.permute.xlu0 %392
  %v395 = vlaneseq
  %v396 = vshrl.u32 %v395, 7
  %v397 = vsub.s32 2, %v396
  %v398 = vrot.slane %v275, %v397
  %v399 = vadd.f32 %v389, %v398
  %v400 = vadd.f32 %v393, %v398
  %401 = vset.pattern.permute.xlu0 3
  %402 = vperm.xlu0 %401, %v349
  %v403 = vpop.permute.xlu0 %402
  %405 = vset.pattern.permute.xlu0 3
  %406 = vperm.xlu0 %405, %v354
  %v407 = vpop.permute.xlu0 %406
  %v409 = vlaneseq
  %v410 = vshrl.u32 %v409, 7
  %v411 = vsub.s32 3, %v410
  %v412 = vrot.slane %v275, %v411
  %v413 = vadd.f32 %v403, %v412
  %v414 = vadd.f32 %v407, %v412
  %v415 = vmul.f32 %v371, 0.2
  %v416 = vmul.f32 %v372, 0.2
  %v417 = vmul.f32 %v385, 0.2
  %v418 = vmul.f32 %v386, 0.2
  %v419 = vmul.f32 %v399, 0.2
  %v420 = vmul.f32 %v400, 0.2
  %v421 = vmul.f32 %v413, 0.2
  %v422 = vmul.f32 %v414, 0.2
  %v423 = vmax.f32 %v371, %v415
  %v424 = vmax.f32 %v372, %v416
  %v425 = vmax.f32 %v385, %v417
  %v426 = vmax.f32 %v386, %v418
  %v427 = vmax.f32 %v399, %v419
  %v428 = vmax.f32 %v400, %v420
  %v429 = vmax.f32 %v413, %v421
  %v430 = vmax.f32 %v414, %v422
  %v431 = vadd.f32 %v423, %v11
  %v432 = vadd.f32 %v424, %v12
  %v433 = vadd.f32 %v425, %v13
  %v434 = vadd.f32 %v426, %v14
  %v435 = vadd.f32 %v427, %v15
  %v436 = vadd.f32 %v428, %v16
  %v437 = vadd.f32 %v429, %v17
  %v438 = vadd.f32 %v430, %v18
  %v439 = vsel %vm28, %v431, -inf
  %440 = vmax.xlane.f32.xlu0 %v439
  %v441 = vpop.xlane.xlu0 %440
  %v442 = vsel %vm28, %v432, -inf
  %443 = vmax.xlane.f32.xlu0 %v442
  %v444 = vpop.xlane.xlu0 %443
  %v445 = vsel %vm28, %v433, -inf
  %446 = vmax.xlane.f32.xlu0 %v445
  %v447 = vpop.xlane.xlu0 %446
  %v448 = vsel %vm28, %v434, -inf
  %449 = vmax.xlane.f32.xlu0 %v448
  %v450 = vpop.xlane.xlu0 %449
  %v451 = vsel %vm28, %v435, -inf
  %452 = vmax.xlane.f32.xlu0 %v451
  %v453 = vpop.xlane.xlu0 %452
  %v454 = vsel %vm28, %v436, -inf
  %455 = vmax.xlane.f32.xlu0 %v454
  %v456 = vpop.xlane.xlu0 %455
  %v457 = vsel %vm28, %v437, -inf
  %458 = vmax.xlane.f32.xlu0 %v457
  %v459 = vpop.xlane.xlu0 %458
  %v460 = vsel %vm28, %v438, -inf
  %461 = vmax.xlane.f32.xlu0 %v460
  %v462 = vpop.xlane.xlu0 %461
  %v463 = vsub.f32 %v431, %v441
  %v464 = vsub.f32 %v432, %v444
  %v465 = vsub.f32 %v433, %v447
  %v466 = vsub.f32 %v434, %v450
  %v467 = vsub.f32 %v435, %v453
  %v468 = vsub.f32 %v436, %v456
  %v469 = vsub.f32 %v437, %v459
  %v470 = vsub.f32 %v438, %v462
  %v471 = vmul.f32 %v463, 1.442695
  %v472 = vpow.pop %v471
  %v473 = vmul.f32 %v464, 1.442695
  %v474 = vpow.pop %v473
  %v475 = vmul.f32 %v465, 1.442695
  %v476 = vpow.pop %v475
  %v477 = vmul.f32 %v466, 1.442695
  %v478 = vpow.pop %v477
  %v479 = vmul.f32 %v467, 1.442695
  %v480 = vpow.pop %v479
  %v481 = vmul.f32 %v468, 1.442695
  %v482 = vpow.pop %v481
  %v483 = vmul.f32 %v469, 1.442695
  %v484 = vpow.pop %v483
  %v485 = vmul.f32 %v470, 1.442695
  %v486 = vpow.pop %v485
  %v487 = vsel %vm28, %v472, 0.0
  %488 = vadd.xlane.f32.xlu0 %v487
  %v489 = vpop.xlane.xlu0 %488
  %v490 = vsel %vm28, %v474, 0.0
  %491 = vadd.xlane.f32.xlu0 %v490
  %v492 = vpop.xlane.xlu0 %491
  %v493 = vsel %vm28, %v476, 0.0
  %494 = vadd.xlane.f32.xlu0 %v493
  %v495 = vpop.xlane.xlu0 %494
  %v496 = vsel %vm28, %v478, 0.0
  %497 = vadd.xlane.f32.xlu0 %v496
  %v498 = vpop.xlane.xlu0 %497
  %v499 = vsel %vm28, %v480, 0.0
  %500 = vadd.xlane.f32.xlu0 %v499
  %v501 = vpop.xlane.xlu0 %500
  %v502 = vsel %vm28, %v482, 0.0
  %503 = vadd.xlane.f32.xlu0 %v502
  %v504 = vpop.xlane.xlu0 %503
  %v505 = vsel %vm28, %v484, 0.0
  %506 = vadd.xlane.f32.xlu0 %v505
  %v507 = vpop.xlane.xlu0 %506
  %v508 = vsel %vm28, %v486, 0.0
  %509 = vadd.xlane.f32.xlu0 %v508
  %v510 = vpop.xlane.xlu0 %509
  %v511 = vrcp.pop %v489
  %v512 = vmul.f32 %v472, %v511
  %v513 = vrcp.pop %v492
  %v514 = vmul.f32 %v474, %v513
  %v515 = vrcp.pop %v495
  %v516 = vmul.f32 %v476, %v515
  %v517 = vrcp.pop %v498
  %v518 = vmul.f32 %v478, %v517
  %v519 = vrcp.pop %v501
  %v520 = vmul.f32 %v480, %v519
  %v521 = vrcp.pop %v504
  %v522 = vmul.f32 %v482, %v521
  %v523 = vrcp.pop %v507
  %v524 = vmul.f32 %v484, %v523
  %v525 = vrcp.pop %v510
  %v526 = vmul.f32 %v486, %v525
  %v528 = vsel %vm28, %v512, 0
  %v531 = vsel %vm28, %v514, 0
  %533 = vmatprep.subr.mxu0 0.0
  %534 = vmatpush1.msra.mxu0 0.0
  %535 = vmatprep.subr.mxu0 0.0
  %536 = vmatpush1.msra.mxu0 0.0
  %537 = vmatprep.subr.mxu0 0.0
  %538 = vmatpush1.msra.mxu0 0.0
  %539 = vmatprep.subr.mxu0 0.0
  %540 = vmatpush1.msra.mxu0 0.0
  %541 = vmatprep.subr.mxu0 0.0
  %542 = vmatpush1.msra.mxu0 0.0
  %543 = vmatprep.subr.mxu0 0.0
  %544 = vmatpush1.msra.mxu0 0.0
  %545 = vmatprep.subr.mxu0 0.0
  %546 = vmatpush1.msra.mxu0 0.0
  %547 = vmatprep.subr.mxu0 0.0
  %548 = vmatpush1.msra.mxu0 0.0
  %549 = vmatprep.subr.mxu0 0.0
  %550 = vmatpush1.msra.mxu0 0.0
  %551 = vmatprep.subr.mxu0 0.0
  %552 = vmatpush1.msra.mxu0 0.0
  %553 = vmatprep.subr.mxu0 0.0
  %554 = vmatpush1.msra.mxu0 0.0
  %555 = vmatprep.subr.mxu0 0.0
  %556 = vmatpush1.msra.mxu0 0.0
  %557 = vmatprep.subr.mxu0 0.0
  %558 = vmatpush1.msra.mxu0 0.0
  %559 = vmatprep.subr.mxu0 0.0
  %560 = vmatpush1.msra.mxu0 0.0
  %561 = vmatprep.subr.mxu0 0.0
  %562 = vmatpush1.msra.mxu0 %v195
  %563 = vmatprep.subr.mxu0 0.0
  %564 = vmatpush1.msra.mxu0 %v190
  %565 = vmatprep.subr.mxu0 0.0
  %566 = vmatpush2.msra.mxu0 0.0
  %567 = vmatprep.subr.mxu0 0.0
  %568 = vmatpush2.msra.mxu0 0.0
  %569 = vmatprep.subr.mxu0 0.0
  %570 = vmatpush2.msra.mxu0 0.0
  %571 = vmatprep.subr.mxu0 0.0
  %572 = vmatpush2.msra.mxu0 0.0
  %573 = vmatprep.subr.mxu0 0.0
  %574 = vmatpush2.msra.mxu0 0.0
  %575 = vmatprep.subr.mxu0 0.0
  %576 = vmatpush2.msra.mxu0 0.0
  %577 = vmatprep.subr.mxu0 0.0
  %578 = vmatpush2.msra.mxu0 0.0
  %579 = vmatprep.subr.mxu0 0.0
  %580 = vmatpush2.msra.mxu0 0.0
  %581 = vmatprep.subr.mxu0 0.0
  %582 = vmatpush2.msra.mxu0 0.0
  %583 = vmatprep.subr.mxu0 0.0
  %584 = vmatpush2.msra.mxu0 0.0
  %585 = vmatprep.subr.mxu0 0.0
  %586 = vmatpush2.msra.mxu0 0.0
  %587 = vmatprep.subr.mxu0 0.0
  %588 = vmatpush2.msra.mxu0 0.0
  %589 = vmatprep.subr.mxu0 0.0
  %590 = vmatpush2.msra.mxu0 0.0
  %591 = vmatprep.subr.mxu0 0.0
  %592 = vmatpush2.msra.mxu0 0.0
  %593 = vmatprep.subr.mxu0 0.0
  %594 = vmatpush2.msra.mxu0 0.0
  %595 = vmatprep.subr.mxu0 0.0
  %596 = vmatpush2.msra.mxu0 0.0
  %597 = vmatprep.mubr.f32.mxu0 0.0
  %598 = vmatmul.mubr.f32.gmra.mxu0 %v528
  %v599 = vpop.f32.mrf.mxu0
  %v600 = vadd.f32 0.0, %v599
  %v601 = vpop.f32.mrf.mxu0
  %602 = vmatprep.mubr.f32.mxu0 0.0
  %603 = vmatmul.mubr.f32.gmra.mxu0 %v531
  %v604 = vpop.f32.mrf.mxu0
  %v605 = vadd.f32 0.0, %v604
  %v606 = vpop.f32.mrf.mxu0
  %607 = vdwg.mxu0
  %608 = vrot.lane.b32.xlu0 %v190, 120
  %v609 = vpop.permute.xlu0 %608
  %610 = vrot.lane.b32.xlu0 %v195, 120
  %v611 = vpop.permute.xlu0 %610
  %v615 = vsel %vm28, %v516, 0
  %v618 = vsel %vm28, %v518, 0
  %620 = vmatprep.subr.mxu0 0.0
  %621 = vmatpush1.msra.mxu0 0.0
  %622 = vmatprep.subr.mxu0 0.0
  %623 = vmatpush1.msra.mxu0 0.0
  %624 = vmatprep.subr.mxu0 0.0
  %625 = vmatpush1.msra.mxu0 0.0
  %626 = vmatprep.subr.mxu0 0.0
  %627 = vmatpush1.msra.mxu0 0.0
  %628 = vmatprep.subr.mxu0 0.0
  %629 = vmatpush1.msra.mxu0 0.0
  %630 = vmatprep.subr.mxu0 0.0
  %631 = vmatpush1.msra.mxu0 0.0
  %632 = vmatprep.subr.mxu0 0.0
  %633 = vmatpush1.msra.mxu0 0.0
  %634 = vmatprep.subr.mxu0 0.0
  %635 = vmatpush1.msra.mxu0 0.0
  %636 = vmatprep.subr.mxu0 0.0
  %637 = vmatpush1.msra.mxu0 0.0
  %638 = vmatprep.subr.mxu0 0.0
  %639 = vmatpush1.msra.mxu0 0.0
  %640 = vmatprep.subr.mxu0 0.0
  %641 = vmatpush1.msra.mxu0 0.0
  %642 = vmatprep.subr.mxu0 0.0
  %643 = vmatpush1.msra.mxu0 0.0
  %644 = vmatprep.subr.mxu0 0.0
  %645 = vmatpush1.msra.mxu0 0.0
  %646 = vmatprep.subr.mxu0 0.0
  %647 = vmatpush1.msra.mxu0 0.0
  %648 = vmatprep.subr.mxu0 0.0
  %649 = vmatpush1.msra.mxu0 %v611
  %650 = vmatprep.subr.mxu0 0.0
  %651 = vmatpush1.msra.mxu0 %v609
  %652 = vmatprep.subr.mxu0 0.0
  %653 = vmatpush2.msra.mxu0 0.0
  %654 = vmatprep.subr.mxu0 0.0
  %655 = vmatpush2.msra.mxu0 0.0
  %656 = vmatprep.subr.mxu0 0.0
  %657 = vmatpush2.msra.mxu0 0.0
  %658 = vmatprep.subr.mxu0 0.0
  %659 = vmatpush2.msra.mxu0 0.0
  %660 = vmatprep.subr.mxu0 0.0
  %661 = vmatpush2.msra.mxu0 0.0
  %662 = vmatprep.subr.mxu0 0.0
  %663 = vmatpush2.msra.mxu0 0.0
  %664 = vmatprep.subr.mxu0 0.0
  %665 = vmatpush2.msra.mxu0 0.0
  %666 = vmatprep.subr.mxu0 0.0
  %667 = vmatpush2.msra.mxu0 0.0
  %668 = vmatprep.subr.mxu0 0.0
  %669 = vmatpush2.msra.mxu0 0.0
  %670 = vmatprep.subr.mxu0 0.0
  %671 = vmatpush2.msra.mxu0 0.0
  %672 = vmatprep.subr.mxu0 0.0
  %673 = vmatpush2.msra.mxu0 0.0
  %674 = vmatprep.subr.mxu0 0.0
  %675 = vmatpush2.msra.mxu0 0.0
  %676 = vmatprep.subr.mxu0 0.0
  %677 = vmatpush2.msra.mxu0 0.0
  %678 = vmatprep.subr.mxu0 0.0
  %679 = vmatpush2.msra.mxu0 0.0
  %680 = vmatprep.subr.mxu0 0.0
  %681 = vmatpush2.msra.mxu0 0.0
  %682 = vmatprep.subr.mxu0 0.0
  %683 = vmatpush2.msra.mxu0 0.0
  %684 = vmatprep.mubr.f32.mxu0 0.0
  %685 = vmatmul.mubr.f32.gmra.mxu0 %v615
  %v686 = vpop.f32.mrf.mxu0
  %v687 = vadd.f32 0.0, %v686
  %v688 = vpop.f32.mrf.mxu0
  %689 = vmatprep.mubr.f32.mxu0 0.0
  %690 = vmatmul.mubr.f32.gmra.mxu0 %v618
  %v691 = vpop.f32.mrf.mxu0
  %v692 = vadd.f32 0.0, %v691
  %v693 = vpop.f32.mrf.mxu0
  %694 = vdwg.mxu0
  %695 = vrot.lane.b32.xlu0 %v190, 112
  %v696 = vpop.permute.xlu0 %695
  %697 = vrot.lane.b32.xlu0 %v195, 112
  %v698 = vpop.permute.xlu0 %697
  %v702 = vsel %vm28, %v520, 0
  %v705 = vsel %vm28, %v522, 0
  %707 = vmatprep.subr.mxu0 0.0
  %708 = vmatpush1.msra.mxu0 0.0
  %709 = vmatprep.subr.mxu0 0.0
  %710 = vmatpush1.msra.mxu0 0.0
  %711 = vmatprep.subr.mxu0 0.0
  %712 = vmatpush1.msra.mxu0 0.0
  %713 = vmatprep.subr.mxu0 0.0
  %714 = vmatpush1.msra.mxu0 0.0
  %715 = vmatprep.subr.mxu0 0.0
  %716 = vmatpush1.msra.mxu0 0.0
  %717 = vmatprep.subr.mxu0 0.0
  %718 = vmatpush1.msra.mxu0 0.0
  %719 = vmatprep.subr.mxu0 0.0
  %720 = vmatpush1.msra.mxu0 0.0
  %721 = vmatprep.subr.mxu0 0.0
  %722 = vmatpush1.msra.mxu0 0.0
  %723 = vmatprep.subr.mxu0 0.0
  %724 = vmatpush1.msra.mxu0 0.0
  %725 = vmatprep.subr.mxu0 0.0
  %726 = vmatpush1.msra.mxu0 0.0
  %727 = vmatprep.subr.mxu0 0.0
  %728 = vmatpush1.msra.mxu0 0.0
  %729 = vmatprep.subr.mxu0 0.0
  %730 = vmatpush1.msra.mxu0 0.0
  %731 = vmatprep.subr.mxu0 0.0
  %732 = vmatpush1.msra.mxu0 0.0
  %733 = vmatprep.subr.mxu0 0.0
  %734 = vmatpush1.msra.mxu0 0.0
  %735 = vmatprep.subr.mxu0 0.0
  %736 = vmatpush1.msra.mxu0 %v698
  %737 = vmatprep.subr.mxu0 0.0
  %738 = vmatpush1.msra.mxu0 %v696
  %739 = vmatprep.subr.mxu0 0.0
  %740 = vmatpush2.msra.mxu0 0.0
  %741 = vmatprep.subr.mxu0 0.0
  %742 = vmatpush2.msra.mxu0 0.0
  %743 = vmatprep.subr.mxu0 0.0
  %744 = vmatpush2.msra.mxu0 0.0
  %745 = vmatprep.subr.mxu0 0.0
  %746 = vmatpush2.msra.mxu0 0.0
  %747 = vmatprep.subr.mxu0 0.0
  %748 = vmatpush2.msra.mxu0 0.0
  %749 = vmatprep.subr.mxu0 0.0
  %750 = vmatpush2.msra.mxu0 0.0
  %751 = vmatprep.subr.mxu0 0.0
  %752 = vmatpush2.msra.mxu0 0.0
  %753 = vmatprep.subr.mxu0 0.0
  %754 = vmatpush2.msra.mxu0 0.0
  %755 = vmatprep.subr.mxu0 0.0
  %756 = vmatpush2.msra.mxu0 0.0
  %757 = vmatprep.subr.mxu0 0.0
  %758 = vmatpush2.msra.mxu0 0.0
  %759 = vmatprep.subr.mxu0 0.0
  %760 = vmatpush2.msra.mxu0 0.0
  %761 = vmatprep.subr.mxu0 0.0
  %762 = vmatpush2.msra.mxu0 0.0
  %763 = vmatprep.subr.mxu0 0.0
  %764 = vmatpush2.msra.mxu0 0.0
  %765 = vmatprep.subr.mxu0 0.0
  %766 = vmatpush2.msra.mxu0 0.0
  %767 = vmatprep.subr.mxu0 0.0
  %768 = vmatpush2.msra.mxu0 0.0
  %769 = vmatprep.subr.mxu0 0.0
  %770 = vmatpush2.msra.mxu0 0.0
  %771 = vmatprep.mubr.f32.mxu0 0.0
  %772 = vmatmul.mubr.f32.gmra.mxu0 %v702
  %v773 = vpop.f32.mrf.mxu0
  %v774 = vadd.f32 0.0, %v773
  %v775 = vpop.f32.mrf.mxu0
  %776 = vmatprep.mubr.f32.mxu0 0.0
  %777 = vmatmul.mubr.f32.gmra.mxu0 %v705
  %v778 = vpop.f32.mrf.mxu0
  %v779 = vadd.f32 0.0, %v778
  %v780 = vpop.f32.mrf.mxu0
  %781 = vdwg.mxu0
  %782 = vrot.lane.b32.xlu0 %v190, 104
  %v783 = vpop.permute.xlu0 %782
  %784 = vrot.lane.b32.xlu0 %v195, 104
  %v785 = vpop.permute.xlu0 %784
  %v789 = vsel %vm28, %v524, 0
  %v792 = vsel %vm28, %v526, 0
  %794 = vmatprep.subr.mxu0 0.0
  %795 = vmatpush1.msra.mxu0 0.0
  %796 = vmatprep.subr.mxu0 0.0
  %797 = vmatpush1.msra.mxu0 0.0
  %798 = vmatprep.subr.mxu0 0.0
  %799 = vmatpush1.msra.mxu0 0.0
  %800 = vmatprep.subr.mxu0 0.0
  %801 = vmatpush1.msra.mxu0 0.0
  %802 = vmatprep.subr.mxu0 0.0
  %803 = vmatpush1.msra.mxu0 0.0
  %804 = vmatprep.subr.mxu0 0.0
  %805 = vmatpush1.msra.mxu0 0.0
  %806 = vmatprep.subr.mxu0 0.0
  %807 = vmatpush1.msra.mxu0 0.0
  %808 = vmatprep.subr.mxu0 0.0
  %809 = vmatpush1.msra.mxu0 0.0
  %810 = vmatprep.subr.mxu0 0.0
  %811 = vmatpush1.msra.mxu0 0.0
  %812 = vmatprep.subr.mxu0 0.0
  %813 = vmatpush1.msra.mxu0 0.0
  %814 = vmatprep.subr.mxu0 0.0
  %815 = vmatpush1.msra.mxu0 0.0
  %816 = vmatprep.subr.mxu0 0.0
  %817 = vmatpush1.msra.mxu0 0.0
  %818 = vmatprep.subr.mxu0 0.0
  %819 = vmatpush1.msra.mxu0 0.0
  %820 = vmatprep.subr.mxu0 0.0
  %821 = vmatpush1.msra.mxu0 0.0
  %822 = vmatprep.subr.mxu0 0.0
  %823 = vmatpush1.msra.mxu0 %v785
  %824 = vmatprep.subr.mxu0 0.0
  %825 = vmatpush1.msra.mxu0 %v783
  %826 = vmatprep.subr.mxu0 0.0
  %827 = vmatpush2.msra.mxu0 0.0
  %828 = vmatprep.subr.mxu0 0.0
  %829 = vmatpush2.msra.mxu0 0.0
  %830 = vmatprep.subr.mxu0 0.0
  %831 = vmatpush2.msra.mxu0 0.0
  %832 = vmatprep.subr.mxu0 0.0
  %833 = vmatpush2.msra.mxu0 0.0
  %834 = vmatprep.subr.mxu0 0.0
  %835 = vmatpush2.msra.mxu0 0.0
  %836 = vmatprep.subr.mxu0 0.0
  %837 = vmatpush2.msra.mxu0 0.0
  %838 = vmatprep.subr.mxu0 0.0
  %839 = vmatpush2.msra.mxu0 0.0
  %840 = vmatprep.subr.mxu0 0.0
  %841 = vmatpush2.msra.mxu0 0.0
  %842 = vmatprep.subr.mxu0 0.0
  %843 = vmatpush2.msra.mxu0 0.0
  %844 = vmatprep.subr.mxu0 0.0
  %845 = vmatpush2.msra.mxu0 0.0
  %846 = vmatprep.subr.mxu0 0.0
  %847 = vmatpush2.msra.mxu0 0.0
  %848 = vmatprep.subr.mxu0 0.0
  %849 = vmatpush2.msra.mxu0 0.0
  %850 = vmatprep.subr.mxu0 0.0
  %851 = vmatpush2.msra.mxu0 0.0
  %852 = vmatprep.subr.mxu0 0.0
  %853 = vmatpush2.msra.mxu0 0.0
  %854 = vmatprep.subr.mxu0 0.0
  %855 = vmatpush2.msra.mxu0 0.0
  %856 = vmatprep.subr.mxu0 0.0
  %857 = vmatpush2.msra.mxu0 0.0
  %858 = vmatprep.mubr.f32.mxu0 0.0
  %859 = vmatmul.mubr.f32.gmra.mxu0 %v789
  %v860 = vpop.f32.mrf.mxu0
  %v861 = vadd.f32 0.0, %v860
  %v862 = vpop.f32.mrf.mxu0
  %863 = vmatprep.mubr.f32.mxu0 0.0
  %864 = vmatmul.mubr.f32.gmra.mxu0 %v792
  %v865 = vpop.f32.mrf.mxu0
  %v866 = vadd.f32 0.0, %v865
  %v867 = vpop.f32.mrf.mxu0
  %868 = vdwg.mxu0
  %871 = vrot.lane.b32.xlu0 %v687, 8
  %v872 = vpop.permute.xlu0 %871
  %873 = vrot.lane.b32.xlu0 %v692, 8
  %v874 = vpop.permute.xlu0 %873
  %879 = vrot.lane.b32.xlu0 %v774, 16
  %v880 = vpop.permute.xlu0 %879
  %881 = vrot.lane.b32.xlu0 %v779, 16
  %v882 = vpop.permute.xlu0 %881
  %887 = vrot.lane.b32.xlu0 %v861, 24
  %v888 = vpop.permute.xlu0 %887
  %889 = vrot.lane.b32.xlu0 %v866, 24
  %v890 = vpop.permute.xlu0 %889
  %vm893 = vcmask 64512
  %v894 = vsel %vm893, %v600, %v872
  %v895 = vsel %vm893, %v605, %v874
  %v896 = vsel %vm28, %v894, %v880
  %v897 = vsel %vm28, %v895, %v882
  %vm898 = vcmask 195584
  %v899 = vsel %vm898, %v896, %v888
  %v900 = vsel %vm898, %v897, %v890
  %v901 = vld [vmem:[%s0 + $0x48] sm:$0x1]
  %v902 = vlaneseq
  %v903 = vshrl.u32 %v902, 7
  %v904 = vsub.s32 0, %v903
  %v905 = vrot.slane %v901, %v904
  %v906 = vadd.f32 %v899, %v905
  %v907 = vadd.f32 %v900, %v905
  %v908 = vsel %vm116, %v906, 0.0
  %909 = vadd.xlane.f32.xlu0 %v908
  %v910 = vpop.xlane.xlu0 %909
  %v911 = vsel %vm116, %v907, 0.0
  %912 = vadd.xlane.f32.xlu0 %v911
  %v913 = vpop.xlane.xlu0 %912
  %v914 = vrcp.pop 32.0
  %v915 = vmul.f32 %v910, %v914
  %v916 = vmul.f32 %v913, %v914
  %v917 = vsub.f32 %v906, %v915
  %v918 = vsub.f32 %v907, %v916
  %v919 = vmul.f32 %v917, %v917
  %v920 = vmul.f32 %v918, %v918
  %v921 = vsel %vm116, %v919, 0.0
  %922 = vadd.xlane.f32.xlu0 %v921
  %v923 = vpop.xlane.xlu0 %922
  %v924 = vsel %vm116, %v920, 0.0
  %925 = vadd.xlane.f32.xlu0 %v924
  %v926 = vpop.xlane.xlu0 %925
  %v927 = vmul.f32 %v923, %v914
  %v928 = vmul.f32 %v926, %v914
  %v929 = vadd.f32 %v927, 1e-05
  %v930 = vadd.f32 %v928, 1e-05
  %v931 = vrsqrt.pop %v929
  %v932 = vrsqrt.pop %v930
  %v933 = vmul.f32 %v917, %v931
  %v934 = vmul.f32 %v918, %v932
  %v935 = vld [vmem:[%s0 + $0x50] sm:$0x1]
  %v936 = vlaneseq
  %v937 = vshrl.u32 %v936, 7
  %v938 = vsub.s32 0, %v937
  %v939 = vrot.slane %v935, %v938
  %v940 = vmul.f32 %v933, %v939
  %v941 = vmul.f32 %v934, %v939
  %v942 = vld [vmem:[%s0 + $0x58] sm:$0x1]
  %v943 = vlaneseq
  %v944 = vshrl.u32 %v943, 7
  %v945 = vsub.s32 0, %v944
  %v946 = vrot.slane %v942, %v945
  %v947 = vadd.f32 %v940, %v946
  %v948 = vadd.f32 %v941, %v946
  %v949 = vmax.f32 %v947, 0.0
  %v950 = vmax.f32 %v948, 0.0
  %v951 = vld [vmem:[%s0 + $0x60] sm:$0xff]
  %v952 = vld [vmem:[%s0 + $0x68] sm:$0xff]
  %v953 = vld [vmem:[%s0 + $0x70] sm:$0xff]
  %v954 = vld [vmem:[%s0 + $0x78] sm:$0xff]
  %v956 = vsel %vm116, %v949, 0
  %v959 = vsel %vm116, %v950, 0
  %961 = vmatprep.subr.mxu0 0.0
  %962 = vmatpush1.msra.mxu0 0.0
  %963 = vmatprep.subr.mxu0 0.0
  %964 = vmatpush1.msra.mxu0 0.0
  %965 = vmatprep.subr.mxu0 0.0
  %966 = vmatpush1.msra.mxu0 0.0
  %967 = vmatprep.subr.mxu0 0.0
  %968 = vmatpush1.msra.mxu0 0.0
  %969 = vmatprep.subr.mxu0 0.0
  %970 = vmatpush1.msra.mxu0 0.0
  %971 = vmatprep.subr.mxu0 0.0
  %972 = vmatpush1.msra.mxu0 0.0
  %973 = vmatprep.subr.mxu0 0.0
  %974 = vmatpush1.msra.mxu0 0.0
  %975 = vmatprep.subr.mxu0 0.0
  %976 = vmatpush1.msra.mxu0 0.0
  %977 = vmatprep.subr.mxu0 0.0
  %978 = vmatpush1.msra.mxu0 0.0
  %979 = vmatprep.subr.mxu0 0.0
  %980 = vmatpush1.msra.mxu0 0.0
  %981 = vmatprep.subr.mxu0 0.0
  %982 = vmatpush1.msra.mxu0 0.0
  %983 = vmatprep.subr.mxu0 0.0
  %984 = vmatpush1.msra.mxu0 0.0
  %985 = vmatprep.subr.mxu0 0.0
  %986 = vmatpush1.msra.mxu0 %v954
  %987 = vmatprep.subr.mxu0 0.0
  %988 = vmatpush1.msra.mxu0 %v953
  %989 = vmatprep.subr.mxu0 0.0
  %990 = vmatpush1.msra.mxu0 %v952
  %991 = vmatprep.subr.mxu0 0.0
  %992 = vmatpush1.msra.mxu0 %v951
  %993 = vmatprep.subr.mxu0 0.0
  %994 = vmatpush2.msra.mxu0 0.0
  %995 = vmatprep.subr.mxu0 0.0
  %996 = vmatpush2.msra.mxu0 0.0
  %997 = vmatprep.subr.mxu0 0.0
  %998 = vmatpush2.msra.mxu0 0.0
  %999 = vmatprep.subr.mxu0 0.0
  %1000 = vmatpush2.msra.mxu0 0.0
  %1001 = vmatprep.subr.mxu0 0.0
  %1002 = vmatpush2.msra.mxu0 0.0
  %1003 = vmatprep.subr.mxu0 0.0
  %1004 = vmatpush2.msra.mxu0 0.0
  %1005 = vmatprep.subr.mxu0 0.0
  %1006 = vmatpush2.msra.mxu0 0.0
  %1007 = vmatprep.subr.mxu0 0.0
  %1008 = vmatpush2.msra.mxu0 0.0
  %1009 = vmatprep.subr.mxu0 0.0
  %1010 = vmatpush2.msra.mxu0 0.0
  %1011 = vmatprep.subr.mxu0 0.0
  %1012 = vmatpush2.msra.mxu0 0.0
  %1013 = vmatprep.subr.mxu0 0.0
  %1014 = vmatpush2.msra.mxu0 0.0
  %1015 = vmatprep.subr.mxu0 0.0
  %1016 = vmatpush2.msra.mxu0 0.0
  %1017 = vmatprep.subr.mxu0 0.0
  %1018 = vmatpush2.msra.mxu0 0.0
  %1019 = vmatprep.subr.mxu0 0.0
  %1020 = vmatpush2.msra.mxu0 0.0
  %1021 = vmatprep.subr.mxu0 0.0
  %1022 = vmatpush2.msra.mxu0 0.0
  %1023 = vmatprep.subr.mxu0 0.0
  %1024 = vmatpush2.msra.mxu0 0.0
  %1025 = vmatprep.mubr.f32.mxu0 0.0
  %1026 = vmatmul.mubr.f32.gmra.mxu0 %v956
  %v1027 = vpop.f32.mrf.mxu0
  %v1028 = vadd.f32 0.0, %v1027
  %v1029 = vpop.f32.mrf.mxu0
  %1030 = vmatprep.mubr.f32.mxu0 0.0
  %1031 = vmatmul.mubr.f32.gmra.mxu0 %v959
  %v1032 = vpop.f32.mrf.mxu0
  %v1033 = vadd.f32 0.0, %v1032
  %v1034 = vpop.f32.mrf.mxu0
  %1035 = vdwg.mxu0
  %v1036 = vld [vmem:[%s0 + $0x80] sm:$0xf]
  %v1038 = vsel %vm116, %v1036, 0
  %v1041 = vsel %vm116, %v1028, 0
  %v1044 = vsel %vm116, %v1033, 0
  %1046 = vmatprep.subr.mxu0 0.0
  %1047 = vmatpush1.xpose.msra.mxu0 0.0
  %1048 = vmatprep.subr.mxu0 0.0
  %1049 = vmatpush1.xpose.msra.mxu0 0.0
  %1050 = vmatprep.subr.mxu0 0.0
  %1051 = vmatpush1.xpose.msra.mxu0 0.0
  %1052 = vmatprep.subr.mxu0 0.0
  %1053 = vmatpush1.xpose.msra.mxu0 0.0
  %1054 = vmatprep.subr.mxu0 0.0
  %1055 = vmatpush1.xpose.msra.mxu0 0.0
  %1056 = vmatprep.subr.mxu0 0.0
  %1057 = vmatpush1.xpose.msra.mxu0 0.0
  %1058 = vmatprep.subr.mxu0 0.0
  %1059 = vmatpush1.xpose.msra.mxu0 0.0
  %1060 = vmatprep.subr.mxu0 0.0
  %1061 = vmatpush1.xpose.msra.mxu0 0.0
  %1062 = vmatprep.subr.mxu0 0.0
  %1063 = vmatpush1.xpose.msra.mxu0 0.0
  %1064 = vmatprep.subr.mxu0 0.0
  %1065 = vmatpush1.xpose.msra.mxu0 0.0
  %1066 = vmatprep.subr.mxu0 0.0
  %1067 = vmatpush1.xpose.msra.mxu0 0.0
  %1068 = vmatprep.subr.mxu0 0.0
  %1069 = vmatpush1.xpose.msra.mxu0 0.0
  %1070 = vmatprep.subr.mxu0 0.0
  %1071 = vmatpush1.xpose.msra.mxu0 0.0
  %1072 = vmatprep.subr.mxu0 0.0
  %1073 = vmatpush1.xpose.msra.mxu0 0.0
  %1074 = vmatprep.subr.mxu0 0.0
  %1075 = vmatpush1.xpose.msra.mxu0 %v1044
  %1076 = vmatprep.subr.mxu0 0.0
  %1077 = vmatpush1.xpose.msra.mxu0 %v1041
  %1078 = vmatprep.subr.mxu0 0.0
  %1079 = vmatpush2.xpose.msra.mxu0 0.0
  %1080 = vmatprep.subr.mxu0 0.0
  %1081 = vmatpush2.xpose.msra.mxu0 0.0
  %1082 = vmatprep.subr.mxu0 0.0
  %1083 = vmatpush2.xpose.msra.mxu0 0.0
  %1084 = vmatprep.subr.mxu0 0.0
  %1085 = vmatpush2.xpose.msra.mxu0 0.0
  %1086 = vmatprep.subr.mxu0 0.0
  %1087 = vmatpush2.xpose.msra.mxu0 0.0
  %1088 = vmatprep.subr.mxu0 0.0
  %1089 = vmatpush2.xpose.msra.mxu0 0.0
  %1090 = vmatprep.subr.mxu0 0.0
  %1091 = vmatpush2.xpose.msra.mxu0 0.0
  %1092 = vmatprep.subr.mxu0 0.0
  %1093 = vmatpush2.xpose.msra.mxu0 0.0
  %1094 = vmatprep.subr.mxu0 0.0
  %1095 = vmatpush2.xpose.msra.mxu0 0.0
  %1096 = vmatprep.subr.mxu0 0.0
  %1097 = vmatpush2.xpose.msra.mxu0 0.0
  %1098 = vmatprep.subr.mxu0 0.0
  %1099 = vmatpush2.xpose.msra.mxu0 0.0
  %1100 = vmatprep.subr.mxu0 0.0
  %1101 = vmatpush2.xpose.msra.mxu0 0.0
  %1102 = vmatprep.subr.mxu0 0.0
  %1103 = vmatpush2.xpose.msra.mxu0 0.0
  %1104 = vmatprep.subr.mxu0 0.0
  %1105 = vmatpush2.xpose.msra.mxu0 0.0
  %1106 = vmatprep.subr.mxu0 0.0
  %1107 = vmatpush2.xpose.msra.mxu0 0.0
  %1108 = vmatprep.subr.mxu0 0.0
  %1109 = vmatpush2.xpose.msra.mxu0 0.0
  %1110 = vmatprep.mubr.f32.mxu0 0.0
  %1111 = vmatmul.mubr.f32.gmra.mxu0 %v1038
  %v1112 = vpop.f32.mrf.mxu0
  %v1113 = vadd.f32 0.0, %v1112
  %v1114 = vpop.f32.mrf.mxu0
  %1115 = vdwg.mxu0
  %v1116 = vld [vmem:[%s0 + $0x88] sm:$0xf]
  %v1118 = vsel %vm116, %v1116, 0
  %1120 = vmatprep.subr.mxu0 0.0
  %1121 = vmatpush1.xpose.msra.mxu0 0.0
  %1122 = vmatprep.subr.mxu0 0.0
  %1123 = vmatpush1.xpose.msra.mxu0 0.0
  %1124 = vmatprep.subr.mxu0 0.0
  %1125 = vmatpush1.xpose.msra.mxu0 0.0
  %1126 = vmatprep.subr.mxu0 0.0
  %1127 = vmatpush1.xpose.msra.mxu0 0.0
  %1128 = vmatprep.subr.mxu0 0.0
  %1129 = vmatpush1.xpose.msra.mxu0 0.0
  %1130 = vmatprep.subr.mxu0 0.0
  %1131 = vmatpush1.xpose.msra.mxu0 0.0
  %1132 = vmatprep.subr.mxu0 0.0
  %1133 = vmatpush1.xpose.msra.mxu0 0.0
  %1134 = vmatprep.subr.mxu0 0.0
  %1135 = vmatpush1.xpose.msra.mxu0 0.0
  %1136 = vmatprep.subr.mxu0 0.0
  %1137 = vmatpush1.xpose.msra.mxu0 0.0
  %1138 = vmatprep.subr.mxu0 0.0
  %1139 = vmatpush1.xpose.msra.mxu0 0.0
  %1140 = vmatprep.subr.mxu0 0.0
  %1141 = vmatpush1.xpose.msra.mxu0 0.0
  %1142 = vmatprep.subr.mxu0 0.0
  %1143 = vmatpush1.xpose.msra.mxu0 0.0
  %1144 = vmatprep.subr.mxu0 0.0
  %1145 = vmatpush1.xpose.msra.mxu0 0.0
  %1146 = vmatprep.subr.mxu0 0.0
  %1147 = vmatpush1.xpose.msra.mxu0 0.0
  %1148 = vmatprep.subr.mxu0 0.0
  %1149 = vmatpush1.xpose.msra.mxu0 0.0
  %1150 = vmatprep.subr.mxu0 0.0
  %1151 = vmatpush1.xpose.msra.mxu0 %v1118
  %1152 = vmatprep.subr.mxu0 0.0
  %1153 = vmatpush2.xpose.msra.mxu0 0.0
  %1154 = vmatprep.subr.mxu0 0.0
  %1155 = vmatpush2.xpose.msra.mxu0 0.0
  %1156 = vmatprep.subr.mxu0 0.0
  %1157 = vmatpush2.xpose.msra.mxu0 0.0
  %1158 = vmatprep.subr.mxu0 0.0
  %1159 = vmatpush2.xpose.msra.mxu0 0.0
  %1160 = vmatprep.subr.mxu0 0.0
  %1161 = vmatpush2.xpose.msra.mxu0 0.0
  %1162 = vmatprep.subr.mxu0 0.0
  %1163 = vmatpush2.xpose.msra.mxu0 0.0
  %1164 = vmatprep.subr.mxu0 0.0
  %1165 = vmatpush2.xpose.msra.mxu0 0.0
  %1166 = vmatprep.subr.mxu0 0.0
  %1167 = vmatpush2.xpose.msra.mxu0 0.0
  %1168 = vmatprep.subr.mxu0 0.0
  %1169 = vmatpush2.xpose.msra.mxu0 0.0
  %1170 = vmatprep.subr.mxu0 0.0
  %1171 = vmatpush2.xpose.msra.mxu0 0.0
  %1172 = vmatprep.subr.mxu0 0.0
  %1173 = vmatpush2.xpose.msra.mxu0 0.0
  %1174 = vmatprep.subr.mxu0 0.0
  %1175 = vmatpush2.xpose.msra.mxu0 0.0
  %1176 = vmatprep.subr.mxu0 0.0
  %1177 = vmatpush2.xpose.msra.mxu0 0.0
  %1178 = vmatprep.subr.mxu0 0.0
  %1179 = vmatpush2.xpose.msra.mxu0 0.0
  %1180 = vmatprep.subr.mxu0 0.0
  %1181 = vmatpush2.xpose.msra.mxu0 0.0
  %1182 = vmatprep.subr.mxu0 0.0
  %1183 = vmatpush2.xpose.msra.mxu0 0.0
  %1184 = vmatprep.mubr.f32.mxu0 0.0
  %1185 = vmatmul.mubr.f32.gmra.mxu0 %v1041
  %v1186 = vpop.f32.mrf.mxu0
  %v1187 = vadd.f32 0.0, %v1186
  %v1188 = vpop.f32.mrf.mxu0
  %1189 = vmatprep.mubr.f32.mxu0 0.0
  %1190 = vmatmul.mubr.f32.gmra.mxu0 %v1044
  %v1191 = vpop.f32.mrf.mxu0
  %v1192 = vadd.f32 0.0, %v1191
  %v1193 = vpop.f32.mrf.mxu0
  %1194 = vdwg.mxu0
  %1196 = vset.pattern.permute.xlu0 0
  %1197 = vperm.xlu0 %1196, %v1187
  %v1198 = vpop.permute.xlu0 %1197
  %1201 = vset.pattern.permute.xlu0 0
  %1202 = vperm.xlu0 %1201, %v1192
  %v1203 = vpop.permute.xlu0 %1202
  %v1205 = vlaneseq
  %v1206 = vshrl.u32 %v1205, 7
  %v1207 = vsub.s32 0, %v1206
  %v1208 = vrot.slane %v1113, %v1207
  %v1209 = vadd.f32 %v1198, %v1208
  %v1210 = vadd.f32 %v1203, %v1208
  %1211 = vset.pattern.permute.xlu0 1
  %1212 = vperm.xlu0 %1211, %v1187
  %v1213 = vpop.permute.xlu0 %1212
  %1215 = vset.pattern.permute.xlu0 1
  %1216 = vperm.xlu0 %1215, %v1192
  %v1217 = vpop.permute.xlu0 %1216
  %v1219 = vlaneseq
  %v1220 = vshrl.u32 %v1219, 7
  %v1221 = vsub.s32 1, %v1220
  %v1222 = vrot.slane %v1113, %v1221
  %v1223 = vadd.f32 %v1213, %v1222
  %v1224 = vadd.f32 %v1217, %v1222
  %1225 = vset.pattern.permute.xlu0 2
  %1226 = vperm.xlu0 %1225, %v1187
  %v1227 = vpop.permute.xlu0 %1226
  %1229 = vset.pattern.permute.xlu0 2
  %1230 = vperm.xlu0 %1229, %v1192
  %v1231 = vpop.permute.xlu0 %1230
  %v1233 = vlaneseq
  %v1234 = vshrl.u32 %v1233, 7
  %v1235 = vsub.s32 2, %v1234
  %v1236 = vrot.slane %v1113, %v1235
  %v1237 = vadd.f32 %v1227, %v1236
  %v1238 = vadd.f32 %v1231, %v1236
  %1239 = vset.pattern.permute.xlu0 3
  %1240 = vperm.xlu0 %1239, %v1187
  %v1241 = vpop.permute.xlu0 %1240
  %1243 = vset.pattern.permute.xlu0 3
  %1244 = vperm.xlu0 %1243, %v1192
  %v1245 = vpop.permute.xlu0 %1244
  %v1247 = vlaneseq
  %v1248 = vshrl.u32 %v1247, 7
  %v1249 = vsub.s32 3, %v1248
  %v1250 = vrot.slane %v1113, %v1249
  %v1251 = vadd.f32 %v1241, %v1250
  %v1252 = vadd.f32 %v1245, %v1250
  %v1253 = vmul.f32 %v1209, 0.2
  %v1254 = vmul.f32 %v1210, 0.2
  %v1255 = vmul.f32 %v1223, 0.2
  %v1256 = vmul.f32 %v1224, 0.2
  %v1257 = vmul.f32 %v1237, 0.2
  %v1258 = vmul.f32 %v1238, 0.2
  %v1259 = vmul.f32 %v1251, 0.2
  %v1260 = vmul.f32 %v1252, 0.2
  %v1261 = vmax.f32 %v1209, %v1253
  %v1262 = vmax.f32 %v1210, %v1254
  %v1263 = vmax.f32 %v1223, %v1255
  %v1264 = vmax.f32 %v1224, %v1256
  %v1265 = vmax.f32 %v1237, %v1257
  %v1266 = vmax.f32 %v1238, %v1258
  %v1267 = vmax.f32 %v1251, %v1259
  %v1268 = vmax.f32 %v1252, %v1260
  %v1269 = vadd.f32 %v1261, %v11
  %v1270 = vadd.f32 %v1262, %v12
  %v1271 = vadd.f32 %v1263, %v13
  %v1272 = vadd.f32 %v1264, %v14
  %v1273 = vadd.f32 %v1265, %v15
  %v1274 = vadd.f32 %v1266, %v16
  %v1275 = vadd.f32 %v1267, %v17
  %v1276 = vadd.f32 %v1268, %v18
  %v1277 = vsel %vm28, %v1269, -inf
  %1278 = vmax.xlane.f32.xlu0 %v1277
  %v1279 = vpop.xlane.xlu0 %1278
  %v1280 = vsel %vm28, %v1270, -inf
  %1281 = vmax.xlane.f32.xlu0 %v1280
  %v1282 = vpop.xlane.xlu0 %1281
  %v1283 = vsel %vm28, %v1271, -inf
  %1284 = vmax.xlane.f32.xlu0 %v1283
  %v1285 = vpop.xlane.xlu0 %1284
  %v1286 = vsel %vm28, %v1272, -inf
  %1287 = vmax.xlane.f32.xlu0 %v1286
  %v1288 = vpop.xlane.xlu0 %1287
  %v1289 = vsel %vm28, %v1273, -inf
  %1290 = vmax.xlane.f32.xlu0 %v1289
  %v1291 = vpop.xlane.xlu0 %1290
  %v1292 = vsel %vm28, %v1274, -inf
  %1293 = vmax.xlane.f32.xlu0 %v1292
  %v1294 = vpop.xlane.xlu0 %1293
  %v1295 = vsel %vm28, %v1275, -inf
  %1296 = vmax.xlane.f32.xlu0 %v1295
  %v1297 = vpop.xlane.xlu0 %1296
  %v1298 = vsel %vm28, %v1276, -inf
  %1299 = vmax.xlane.f32.xlu0 %v1298
  %v1300 = vpop.xlane.xlu0 %1299
  %v1301 = vsub.f32 %v1269, %v1279
  %v1302 = vsub.f32 %v1270, %v1282
  %v1303 = vsub.f32 %v1271, %v1285
  %v1304 = vsub.f32 %v1272, %v1288
  %v1305 = vsub.f32 %v1273, %v1291
  %v1306 = vsub.f32 %v1274, %v1294
  %v1307 = vsub.f32 %v1275, %v1297
  %v1308 = vsub.f32 %v1276, %v1300
  %v1309 = vmul.f32 %v1301, 1.442695
  %v1310 = vpow.pop %v1309
  %v1311 = vmul.f32 %v1302, 1.442695
  %v1312 = vpow.pop %v1311
  %v1313 = vmul.f32 %v1303, 1.442695
  %v1314 = vpow.pop %v1313
  %v1315 = vmul.f32 %v1304, 1.442695
  %v1316 = vpow.pop %v1315
  %v1317 = vmul.f32 %v1305, 1.442695
  %v1318 = vpow.pop %v1317
  %v1319 = vmul.f32 %v1306, 1.442695
  %v1320 = vpow.pop %v1319
  %v1321 = vmul.f32 %v1307, 1.442695
  %v1322 = vpow.pop %v1321
  %v1323 = vmul.f32 %v1308, 1.442695
  %v1324 = vpow.pop %v1323
  %v1325 = vsel %vm28, %v1310, 0.0
  %1326 = vadd.xlane.f32.xlu0 %v1325
  %v1327 = vpop.xlane.xlu0 %1326
  %v1328 = vsel %vm28, %v1312, 0.0
  %1329 = vadd.xlane.f32.xlu0 %v1328
  %v1330 = vpop.xlane.xlu0 %1329
  %v1331 = vsel %vm28, %v1314, 0.0
  %1332 = vadd.xlane.f32.xlu0 %v1331
  %v1333 = vpop.xlane.xlu0 %1332
  %v1334 = vsel %vm28, %v1316, 0.0
  %1335 = vadd.xlane.f32.xlu0 %v1334
  %v1336 = vpop.xlane.xlu0 %1335
  %v1337 = vsel %vm28, %v1318, 0.0
  %1338 = vadd.xlane.f32.xlu0 %v1337
  %v1339 = vpop.xlane.xlu0 %1338
  %v1340 = vsel %vm28, %v1320, 0.0
  %1341 = vadd.xlane.f32.xlu0 %v1340
  %v1342 = vpop.xlane.xlu0 %1341
  %v1343 = vsel %vm28, %v1322, 0.0
  %1344 = vadd.xlane.f32.xlu0 %v1343
  %v1345 = vpop.xlane.xlu0 %1344
  %v1346 = vsel %vm28, %v1324, 0.0
  %1347 = vadd.xlane.f32.xlu0 %v1346
  %v1348 = vpop.xlane.xlu0 %1347
  %v1349 = vrcp.pop %v1327
  %v1350 = vmul.f32 %v1310, %v1349
  %v1351 = vrcp.pop %v1330
  %v1352 = vmul.f32 %v1312, %v1351
  %v1353 = vrcp.pop %v1333
  %v1354 = vmul.f32 %v1314, %v1353
  %v1355 = vrcp.pop %v1336
  %v1356 = vmul.f32 %v1316, %v1355
  %v1357 = vrcp.pop %v1339
  %v1358 = vmul.f32 %v1318, %v1357
  %v1359 = vrcp.pop %v1342
  %v1360 = vmul.f32 %v1320, %v1359
  %v1361 = vrcp.pop %v1345
  %v1362 = vmul.f32 %v1322, %v1361
  %v1363 = vrcp.pop %v1348
  %v1364 = vmul.f32 %v1324, %v1363
  %v1366 = vsel %vm28, %v1350, 0
  %v1369 = vsel %vm28, %v1352, 0
  %1371 = vmatprep.subr.mxu0 0.0
  %1372 = vmatpush1.msra.mxu0 0.0
  %1373 = vmatprep.subr.mxu0 0.0
  %1374 = vmatpush1.msra.mxu0 0.0
  %1375 = vmatprep.subr.mxu0 0.0
  %1376 = vmatpush1.msra.mxu0 0.0
  %1377 = vmatprep.subr.mxu0 0.0
  %1378 = vmatpush1.msra.mxu0 0.0
  %1379 = vmatprep.subr.mxu0 0.0
  %1380 = vmatpush1.msra.mxu0 0.0
  %1381 = vmatprep.subr.mxu0 0.0
  %1382 = vmatpush1.msra.mxu0 0.0
  %1383 = vmatprep.subr.mxu0 0.0
  %1384 = vmatpush1.msra.mxu0 0.0
  %1385 = vmatprep.subr.mxu0 0.0
  %1386 = vmatpush1.msra.mxu0 0.0
  %1387 = vmatprep.subr.mxu0 0.0
  %1388 = vmatpush1.msra.mxu0 0.0
  %1389 = vmatprep.subr.mxu0 0.0
  %1390 = vmatpush1.msra.mxu0 0.0
  %1391 = vmatprep.subr.mxu0 0.0
  %1392 = vmatpush1.msra.mxu0 0.0
  %1393 = vmatprep.subr.mxu0 0.0
  %1394 = vmatpush1.msra.mxu0 0.0
  %1395 = vmatprep.subr.mxu0 0.0
  %1396 = vmatpush1.msra.mxu0 0.0
  %1397 = vmatprep.subr.mxu0 0.0
  %1398 = vmatpush1.msra.mxu0 0.0
  %1399 = vmatprep.subr.mxu0 0.0
  %1400 = vmatpush1.msra.mxu0 %v1033
  %1401 = vmatprep.subr.mxu0 0.0
  %1402 = vmatpush1.msra.mxu0 %v1028
  %1403 = vmatprep.subr.mxu0 0.0
  %1404 = vmatpush2.msra.mxu0 0.0
  %1405 = vmatprep.subr.mxu0 0.0
  %1406 = vmatpush2.msra.mxu0 0.0
  %1407 = vmatprep.subr.mxu0 0.0
  %1408 = vmatpush2.msra.mxu0 0.0
  %1409 = vmatprep.subr.mxu0 0.0
  %1410 = vmatpush2.msra.mxu0 0.0
  %1411 = vmatprep.subr.mxu0 0.0
  %1412 = vmatpush2.msra.mxu0 0.0
  %1413 = vmatprep.subr.mxu0 0.0
  %1414 = vmatpush2.msra.mxu0 0.0
  %1415 = vmatprep.subr.mxu0 0.0
  %1416 = vmatpush2.msra.mxu0 0.0
  %1417 = vmatprep.subr.mxu0 0.0
  %1418 = vmatpush2.msra.mxu0 0.0
  %1419 = vmatprep.subr.mxu0 0.0
  %1420 = vmatpush2.msra.mxu0 0.0
  %1421 = vmatprep.subr.mxu0 0.0
  %1422 = vmatpush2.msra.mxu0 0.0
  %1423 = vmatprep.subr.mxu0 0.0
  %1424 = vmatpush2.msra.mxu0 0.0
  %1425 = vmatprep.subr.mxu0 0.0
  %1426 = vmatpush2.msra.mxu0 0.0
  %1427 = vmatprep.subr.mxu0 0.0
  %1428 = vmatpush2.msra.mxu0 0.0
  %1429 = vmatprep.subr.mxu0 0.0
  %1430 = vmatpush2.msra.mxu0 0.0
  %1431 = vmatprep.subr.mxu0 0.0
  %1432 = vmatpush2.msra.mxu0 0.0
  %1433 = vmatprep.subr.mxu0 0.0
  %1434 = vmatpush2.msra.mxu0 0.0
  %1435 = vmatprep.mubr.f32.mxu0 0.0
  %1436 = vmatmul.mubr.f32.gmra.mxu0 %v1366
  %v1437 = vpop.f32.mrf.mxu0
  %v1438 = vadd.f32 0.0, %v1437
  %v1439 = vpop.f32.mrf.mxu0
  %1440 = vmatprep.mubr.f32.mxu0 0.0
  %1441 = vmatmul.mubr.f32.gmra.mxu0 %v1369
  %v1442 = vpop.f32.mrf.mxu0
  %v1443 = vadd.f32 0.0, %v1442
  %v1444 = vpop.f32.mrf.mxu0
  %1445 = vdwg.mxu0
  %1446 = vrot.lane.b32.xlu0 %v1028, 120
  %v1447 = vpop.permute.xlu0 %1446
  %1448 = vrot.lane.b32.xlu0 %v1033, 120
  %v1449 = vpop.permute.xlu0 %1448
  %v1453 = vsel %vm28, %v1354, 0
  %v1456 = vsel %vm28, %v1356, 0
  %1458 = vmatprep.subr.mxu0 0.0
  %1459 = vmatpush1.msra.mxu0 0.0
  %1460 = vmatprep.subr.mxu0 0.0
  %1461 = vmatpush1.msra.mxu0 0.0
  %1462 = vmatprep.subr.mxu0 0.0
  %1463 = vmatpush1.msra.mxu0 0.0
  %1464 = vmatprep.subr.mxu0 0.0
  %1465 = vmatpush1.msra.mxu0 0.0
  %1466 = vmatprep.subr.mxu0 0.0
  %1467 = vmatpush1.msra.mxu0 0.0
  %1468 = vmatprep.subr.mxu0 0.0
  %1469 = vmatpush1.msra.mxu0 0.0
  %1470 = vmatprep.subr.mxu0 0.0
  %1471 = vmatpush1.msra.mxu0 0.0
  %1472 = vmatprep.subr.mxu0 0.0
  %1473 = vmatpush1.msra.mxu0 0.0
  %1474 = vmatprep.subr.mxu0 0.0
  %1475 = vmatpush1.msra.mxu0 0.0
  %1476 = vmatprep.subr.mxu0 0.0
  %1477 = vmatpush1.msra.mxu0 0.0
  %1478 = vmatprep.subr.mxu0 0.0
  %1479 = vmatpush1.msra.mxu0 0.0
  %1480 = vmatprep.subr.mxu0 0.0
  %1481 = vmatpush1.msra.mxu0 0.0
  %1482 = vmatprep.subr.mxu0 0.0
  %1483 = vmatpush1.msra.mxu0 0.0
  %1484 = vmatprep.subr.mxu0 0.0
  %1485 = vmatpush1.msra.mxu0 0.0
  %1486 = vmatprep.subr.mxu0 0.0
  %1487 = vmatpush1.msra.mxu0 %v1449
  %1488 = vmatprep.subr.mxu0 0.0
  %1489 = vmatpush1.msra.mxu0 %v1447
  %1490 = vmatprep.subr.mxu0 0.0
  %1491 = vmatpush2.msra.mxu0 0.0
  %1492 = vmatprep.subr.mxu0 0.0
  %1493 = vmatpush2.msra.mxu0 0.0
  %1494 = vmatprep.subr.mxu0 0.0
  %1495 = vmatpush2.msra.mxu0 0.0
  %1496 = vmatprep.subr.mxu0 0.0
  %1497 = vmatpush2.msra.mxu0 0.0
  %1498 = vmatprep.subr.mxu0 0.0
  %1499 = vmatpush2.msra.mxu0 0.0
  %1500 = vmatprep.subr.mxu0 0.0
  %1501 = vmatpush2.msra.mxu0 0.0
  %1502 = vmatprep.subr.mxu0 0.0
  %1503 = vmatpush2.msra.mxu0 0.0
  %1504 = vmatprep.subr.mxu0 0.0
  %1505 = vmatpush2.msra.mxu0 0.0
  %1506 = vmatprep.subr.mxu0 0.0
  %1507 = vmatpush2.msra.mxu0 0.0
  %1508 = vmatprep.subr.mxu0 0.0
  %1509 = vmatpush2.msra.mxu0 0.0
  %1510 = vmatprep.subr.mxu0 0.0
  %1511 = vmatpush2.msra.mxu0 0.0
  %1512 = vmatprep.subr.mxu0 0.0
  %1513 = vmatpush2.msra.mxu0 0.0
  %1514 = vmatprep.subr.mxu0 0.0
  %1515 = vmatpush2.msra.mxu0 0.0
  %1516 = vmatprep.subr.mxu0 0.0
  %1517 = vmatpush2.msra.mxu0 0.0
  %1518 = vmatprep.subr.mxu0 0.0
  %1519 = vmatpush2.msra.mxu0 0.0
  %1520 = vmatprep.subr.mxu0 0.0
  %1521 = vmatpush2.msra.mxu0 0.0
  %1522 = vmatprep.mubr.f32.mxu0 0.0
  %1523 = vmatmul.mubr.f32.gmra.mxu0 %v1453
  %v1524 = vpop.f32.mrf.mxu0
  %v1525 = vadd.f32 0.0, %v1524
  %v1526 = vpop.f32.mrf.mxu0
  %1527 = vmatprep.mubr.f32.mxu0 0.0
  %1528 = vmatmul.mubr.f32.gmra.mxu0 %v1456
  %v1529 = vpop.f32.mrf.mxu0
  %v1530 = vadd.f32 0.0, %v1529
  %v1531 = vpop.f32.mrf.mxu0
  %1532 = vdwg.mxu0
  %1533 = vrot.lane.b32.xlu0 %v1028, 112
  %v1534 = vpop.permute.xlu0 %1533
  %1535 = vrot.lane.b32.xlu0 %v1033, 112
  %v1536 = vpop.permute.xlu0 %1535
  %v1540 = vsel %vm28, %v1358, 0
  %v1543 = vsel %vm28, %v1360, 0
  %1545 = vmatprep.subr.mxu0 0.0
  %1546 = vmatpush1.msra.mxu0 0.0
  %1547 = vmatprep.subr.mxu0 0.0
  %1548 = vmatpush1.msra.mxu0 0.0
  %1549 = vmatprep.subr.mxu0 0.0
  %1550 = vmatpush1.msra.mxu0 0.0
  %1551 = vmatprep.subr.mxu0 0.0
  %1552 = vmatpush1.msra.mxu0 0.0
  %1553 = vmatprep.subr.mxu0 0.0
  %1554 = vmatpush1.msra.mxu0 0.0
  %1555 = vmatprep.subr.mxu0 0.0
  %1556 = vmatpush1.msra.mxu0 0.0
  %1557 = vmatprep.subr.mxu0 0.0
  %1558 = vmatpush1.msra.mxu0 0.0
  %1559 = vmatprep.subr.mxu0 0.0
  %1560 = vmatpush1.msra.mxu0 0.0
  %1561 = vmatprep.subr.mxu0 0.0
  %1562 = vmatpush1.msra.mxu0 0.0
  %1563 = vmatprep.subr.mxu0 0.0
  %1564 = vmatpush1.msra.mxu0 0.0
  %1565 = vmatprep.subr.mxu0 0.0
  %1566 = vmatpush1.msra.mxu0 0.0
  %1567 = vmatprep.subr.mxu0 0.0
  %1568 = vmatpush1.msra.mxu0 0.0
  %1569 = vmatprep.subr.mxu0 0.0
  %1570 = vmatpush1.msra.mxu0 0.0
  %1571 = vmatprep.subr.mxu0 0.0
  %1572 = vmatpush1.msra.mxu0 0.0
  %1573 = vmatprep.subr.mxu0 0.0
  %1574 = vmatpush1.msra.mxu0 %v1536
  %1575 = vmatprep.subr.mxu0 0.0
  %1576 = vmatpush1.msra.mxu0 %v1534
  %1577 = vmatprep.subr.mxu0 0.0
  %1578 = vmatpush2.msra.mxu0 0.0
  %1579 = vmatprep.subr.mxu0 0.0
  %1580 = vmatpush2.msra.mxu0 0.0
  %1581 = vmatprep.subr.mxu0 0.0
  %1582 = vmatpush2.msra.mxu0 0.0
  %1583 = vmatprep.subr.mxu0 0.0
  %1584 = vmatpush2.msra.mxu0 0.0
  %1585 = vmatprep.subr.mxu0 0.0
  %1586 = vmatpush2.msra.mxu0 0.0
  %1587 = vmatprep.subr.mxu0 0.0
  %1588 = vmatpush2.msra.mxu0 0.0
  %1589 = vmatprep.subr.mxu0 0.0
  %1590 = vmatpush2.msra.mxu0 0.0
  %1591 = vmatprep.subr.mxu0 0.0
  %1592 = vmatpush2.msra.mxu0 0.0
  %1593 = vmatprep.subr.mxu0 0.0
  %1594 = vmatpush2.msra.mxu0 0.0
  %1595 = vmatprep.subr.mxu0 0.0
  %1596 = vmatpush2.msra.mxu0 0.0
  %1597 = vmatprep.subr.mxu0 0.0
  %1598 = vmatpush2.msra.mxu0 0.0
  %1599 = vmatprep.subr.mxu0 0.0
  %1600 = vmatpush2.msra.mxu0 0.0
  %1601 = vmatprep.subr.mxu0 0.0
  %1602 = vmatpush2.msra.mxu0 0.0
  %1603 = vmatprep.subr.mxu0 0.0
  %1604 = vmatpush2.msra.mxu0 0.0
  %1605 = vmatprep.subr.mxu0 0.0
  %1606 = vmatpush2.msra.mxu0 0.0
  %1607 = vmatprep.subr.mxu0 0.0
  %1608 = vmatpush2.msra.mxu0 0.0
  %1609 = vmatprep.mubr.f32.mxu0 0.0
  %1610 = vmatmul.mubr.f32.gmra.mxu0 %v1540
  %v1611 = vpop.f32.mrf.mxu0
  %v1612 = vadd.f32 0.0, %v1611
  %v1613 = vpop.f32.mrf.mxu0
  %1614 = vmatprep.mubr.f32.mxu0 0.0
  %1615 = vmatmul.mubr.f32.gmra.mxu0 %v1543
  %v1616 = vpop.f32.mrf.mxu0
  %v1617 = vadd.f32 0.0, %v1616
  %v1618 = vpop.f32.mrf.mxu0
  %1619 = vdwg.mxu0
  %1620 = vrot.lane.b32.xlu0 %v1028, 104
  %v1621 = vpop.permute.xlu0 %1620
  %1622 = vrot.lane.b32.xlu0 %v1033, 104
  %v1623 = vpop.permute.xlu0 %1622
  %v1627 = vsel %vm28, %v1362, 0
  %v1630 = vsel %vm28, %v1364, 0
  %1632 = vmatprep.subr.mxu0 0.0
  %1633 = vmatpush1.msra.mxu0 0.0
  %1634 = vmatprep.subr.mxu0 0.0
  %1635 = vmatpush1.msra.mxu0 0.0
  %1636 = vmatprep.subr.mxu0 0.0
  %1637 = vmatpush1.msra.mxu0 0.0
  %1638 = vmatprep.subr.mxu0 0.0
  %1639 = vmatpush1.msra.mxu0 0.0
  %1640 = vmatprep.subr.mxu0 0.0
  %1641 = vmatpush1.msra.mxu0 0.0
  %1642 = vmatprep.subr.mxu0 0.0
  %1643 = vmatpush1.msra.mxu0 0.0
  %1644 = vmatprep.subr.mxu0 0.0
  %1645 = vmatpush1.msra.mxu0 0.0
  %1646 = vmatprep.subr.mxu0 0.0
  %1647 = vmatpush1.msra.mxu0 0.0
  %1648 = vmatprep.subr.mxu0 0.0
  %1649 = vmatpush1.msra.mxu0 0.0
  %1650 = vmatprep.subr.mxu0 0.0
  %1651 = vmatpush1.msra.mxu0 0.0
  %1652 = vmatprep.subr.mxu0 0.0
  %1653 = vmatpush1.msra.mxu0 0.0
  %1654 = vmatprep.subr.mxu0 0.0
  %1655 = vmatpush1.msra.mxu0 0.0
  %1656 = vmatprep.subr.mxu0 0.0
  %1657 = vmatpush1.msra.mxu0 0.0
  %1658 = vmatprep.subr.mxu0 0.0
  %1659 = vmatpush1.msra.mxu0 0.0
  %1660 = vmatprep.subr.mxu0 0.0
  %1661 = vmatpush1.msra.mxu0 %v1623
  %1662 = vmatprep.subr.mxu0 0.0
  %1663 = vmatpush1.msra.mxu0 %v1621
  %1664 = vmatprep.subr.mxu0 0.0
  %1665 = vmatpush2.msra.mxu0 0.0
  %1666 = vmatprep.subr.mxu0 0.0
  %1667 = vmatpush2.msra.mxu0 0.0
  %1668 = vmatprep.subr.mxu0 0.0
  %1669 = vmatpush2.msra.mxu0 0.0
  %1670 = vmatprep.subr.mxu0 0.0
  %1671 = vmatpush2.msra.mxu0 0.0
  %1672 = vmatprep.subr.mxu0 0.0
  %1673 = vmatpush2.msra.mxu0 0.0
  %1674 = vmatprep.subr.mxu0 0.0
  %1675 = vmatpush2.msra.mxu0 0.0
  %1676 = vmatprep.subr.mxu0 0.0
  %1677 = vmatpush2.msra.mxu0 0.0
  %1678 = vmatprep.subr.mxu0 0.0
  %1679 = vmatpush2.msra.mxu0 0.0
  %1680 = vmatprep.subr.mxu0 0.0
  %1681 = vmatpush2.msra.mxu0 0.0
  %1682 = vmatprep.subr.mxu0 0.0
  %1683 = vmatpush2.msra.mxu0 0.0
  %1684 = vmatprep.subr.mxu0 0.0
  %1685 = vmatpush2.msra.mxu0 0.0
  %1686 = vmatprep.subr.mxu0 0.0
  %1687 = vmatpush2.msra.mxu0 0.0
  %1688 = vmatprep.subr.mxu0 0.0
  %1689 = vmatpush2.msra.mxu0 0.0
  %1690 = vmatprep.subr.mxu0 0.0
  %1691 = vmatpush2.msra.mxu0 0.0
  %1692 = vmatprep.subr.mxu0 0.0
  %1693 = vmatpush2.msra.mxu0 0.0
  %1694 = vmatprep.subr.mxu0 0.0
  %1695 = vmatpush2.msra.mxu0 0.0
  %1696 = vmatprep.mubr.f32.mxu0 0.0
  %1697 = vmatmul.mubr.f32.gmra.mxu0 %v1627
  %v1698 = vpop.f32.mrf.mxu0
  %v1699 = vadd.f32 0.0, %v1698
  %v1700 = vpop.f32.mrf.mxu0
  %1701 = vmatprep.mubr.f32.mxu0 0.0
  %1702 = vmatmul.mubr.f32.gmra.mxu0 %v1630
  %v1703 = vpop.f32.mrf.mxu0
  %v1704 = vadd.f32 0.0, %v1703
  %v1705 = vpop.f32.mrf.mxu0
  %1706 = vdwg.mxu0
  %1709 = vrot.lane.b32.xlu0 %v1525, 8
  %v1710 = vpop.permute.xlu0 %1709
  %1711 = vrot.lane.b32.xlu0 %v1530, 8
  %v1712 = vpop.permute.xlu0 %1711
  %1717 = vrot.lane.b32.xlu0 %v1612, 16
  %v1718 = vpop.permute.xlu0 %1717
  %1719 = vrot.lane.b32.xlu0 %v1617, 16
  %v1720 = vpop.permute.xlu0 %1719
  %1725 = vrot.lane.b32.xlu0 %v1699, 24
  %v1726 = vpop.permute.xlu0 %1725
  %1727 = vrot.lane.b32.xlu0 %v1704, 24
  %v1728 = vpop.permute.xlu0 %1727
  %v1731 = vsel %vm893, %v1438, %v1710
  %v1732 = vsel %vm893, %v1443, %v1712
  %v1733 = vsel %vm28, %v1731, %v1718
  %v1734 = vsel %vm28, %v1732, %v1720
  %v1735 = vsel %vm898, %v1733, %v1726
  %v1736 = vsel %vm898, %v1734, %v1728
  %v1737 = vld [vmem:[%s0 + $0x90] sm:$0x1]
  %v1738 = vlaneseq
  %v1739 = vshrl.u32 %v1738, 7
  %v1740 = vsub.s32 0, %v1739
  %v1741 = vrot.slane %v1737, %v1740
  %v1742 = vadd.f32 %v1735, %v1741
  %v1743 = vadd.f32 %v1736, %v1741
  %v1744 = vsel %vm116, %v1742, 0.0
  %1745 = vadd.xlane.f32.xlu0 %v1744
  %v1746 = vpop.xlane.xlu0 %1745
  %v1747 = vsel %vm116, %v1743, 0.0
  %1748 = vadd.xlane.f32.xlu0 %v1747
  %v1749 = vpop.xlane.xlu0 %1748
  %v1750 = vmul.f32 %v1746, %v914
  %v1751 = vmul.f32 %v1749, %v914
  %v1752 = vsub.f32 %v1742, %v1750
  %v1753 = vsub.f32 %v1743, %v1751
  %v1754 = vmul.f32 %v1752, %v1752
  %v1755 = vmul.f32 %v1753, %v1753
  %v1756 = vsel %vm116, %v1754, 0.0
  %1757 = vadd.xlane.f32.xlu0 %v1756
  %v1758 = vpop.xlane.xlu0 %1757
  %v1759 = vsel %vm116, %v1755, 0.0
  %1760 = vadd.xlane.f32.xlu0 %v1759
  %v1761 = vpop.xlane.xlu0 %1760
  %v1762 = vmul.f32 %v1758, %v914
  %v1763 = vmul.f32 %v1761, %v914
  %v1764 = vadd.f32 %v1762, 1e-05
  %v1765 = vadd.f32 %v1763, 1e-05
  %v1766 = vrsqrt.pop %v1764
  %v1767 = vrsqrt.pop %v1765
  %v1768 = vmul.f32 %v1752, %v1766
  %v1769 = vmul.f32 %v1753, %v1767
  %v1770 = vld [vmem:[%s0 + $0x98] sm:$0x1]
  %v1771 = vlaneseq
  %v1772 = vshrl.u32 %v1771, 7
  %v1773 = vsub.s32 0, %v1772
  %v1774 = vrot.slane %v1770, %v1773
  %v1775 = vmul.f32 %v1768, %v1774
  %v1776 = vmul.f32 %v1769, %v1774
  %v1777 = vld [vmem:[%s0 + $0xa0] sm:$0x1]
  %v1778 = vlaneseq
  %v1779 = vshrl.u32 %v1778, 7
  %v1780 = vsub.s32 0, %v1779
  %v1781 = vrot.slane %v1777, %v1780
  %v1782 = vadd.f32 %v1775, %v1781
  %v1783 = vadd.f32 %v1776, %v1781
  %v1784 = vmax.f32 %v1782, 0.0
  %v1785 = vmax.f32 %v1783, 0.0
  %v1786 = vld [vmem:[%s0 + $0xa8] sm:$0xff]
  %v1787 = vld [vmem:[%s0 + $0xb0] sm:$0xff]
  %v1788 = vld [vmem:[%s0 + $0xb8] sm:$0xff]
  %v1789 = vld [vmem:[%s0 + $0xc0] sm:$0xff]
  %v1791 = vsel %vm116, %v1784, 0
  %v1794 = vsel %vm116, %v1785, 0
  %1796 = vmatprep.subr.mxu0 0.0
  %1797 = vmatpush1.msra.mxu0 0.0
  %1798 = vmatprep.subr.mxu0 0.0
  %1799 = vmatpush1.msra.mxu0 0.0
  %1800 = vmatprep.subr.mxu0 0.0
  %1801 = vmatpush1.msra.mxu0 0.0
  %1802 = vmatprep.subr.mxu0 0.0
  %1803 = vmatpush1.msra.mxu0 0.0
  %1804 = vmatprep.subr.mxu0 0.0
  %1805 = vmatpush1.msra.mxu0 0.0
  %1806 = vmatprep.subr.mxu0 0.0
  %1807 = vmatpush1.msra.mxu0 0.0
  %1808 = vmatprep.subr.mxu0 0.0
  %1809 = vmatpush1.msra.mxu0 0.0
  %1810 = vmatprep.subr.mxu0 0.0
  %1811 = vmatpush1.msra.mxu0 0.0
  %1812 = vmatprep.subr.mxu0 0.0
  %1813 = vmatpush1.msra.mxu0 0.0
  %1814 = vmatprep.subr.mxu0 0.0
  %1815 = vmatpush1.msra.mxu0 0.0
  %1816 = vmatprep.subr.mxu0 0.0
  %1817 = vmatpush1.msra.mxu0 0.0
  %1818 = vmatprep.subr.mxu0 0.0
  %1819 = vmatpush1.msra.mxu0 0.0
  %1820 = vmatprep.subr.mxu0 0.0
  %1821 = vmatpush1.msra.mxu0 %v1789
  %1822 = vmatprep.subr.mxu0 0.0
  %1823 = vmatpush1.msra.mxu0 %v1788
  %1824 = vmatprep.subr.mxu0 0.0
  %1825 = vmatpush1.msra.mxu0 %v1787
  %1826 = vmatprep.subr.mxu0 0.0
  %1827 = vmatpush1.msra.mxu0 %v1786
  %1828 = vmatprep.subr.mxu0 0.0
  %1829 = vmatpush2.msra.mxu0 0.0
  %1830 = vmatprep.subr.mxu0 0.0
  %1831 = vmatpush2.msra.mxu0 0.0
  %1832 = vmatprep.subr.mxu0 0.0
  %1833 = vmatpush2.msra.mxu0 0.0
  %1834 = vmatprep.subr.mxu0 0.0
  %1835 = vmatpush2.msra.mxu0 0.0
  %1836 = vmatprep.subr.mxu0 0.0
  %1837 = vmatpush2.msra.mxu0 0.0
  %1838 = vmatprep.subr.mxu0 0.0
  %1839 = vmatpush2.msra.mxu0 0.0
  %1840 = vmatprep.subr.mxu0 0.0
  %1841 = vmatpush2.msra.mxu0 0.0
  %1842 = vmatprep.subr.mxu0 0.0
  %1843 = vmatpush2.msra.mxu0 0.0
  %1844 = vmatprep.subr.mxu0 0.0
  %1845 = vmatpush2.msra.mxu0 0.0
  %1846 = vmatprep.subr.mxu0 0.0
  %1847 = vmatpush2.msra.mxu0 0.0
  %1848 = vmatprep.subr.mxu0 0.0
  %1849 = vmatpush2.msra.mxu0 0.0
  %1850 = vmatprep.subr.mxu0 0.0
  %1851 = vmatpush2.msra.mxu0 0.0
  %1852 = vmatprep.subr.mxu0 0.0
  %1853 = vmatpush2.msra.mxu0 0.0
  %1854 = vmatprep.subr.mxu0 0.0
  %1855 = vmatpush2.msra.mxu0 0.0
  %1856 = vmatprep.subr.mxu0 0.0
  %1857 = vmatpush2.msra.mxu0 0.0
  %1858 = vmatprep.subr.mxu0 0.0
  %1859 = vmatpush2.msra.mxu0 0.0
  %1860 = vmatprep.mubr.f32.mxu0 0.0
  %1861 = vmatmul.mubr.f32.gmra.mxu0 %v1791
  %v1862 = vpop.f32.mrf.mxu0
  %v1863 = vadd.f32 0.0, %v1862
  %v1864 = vpop.f32.mrf.mxu0
  %1865 = vmatprep.mubr.f32.mxu0 0.0
  %1866 = vmatmul.mubr.f32.gmra.mxu0 %v1794
  %v1867 = vpop.f32.mrf.mxu0
  %v1868 = vadd.f32 0.0, %v1867
  %v1869 = vpop.f32.mrf.mxu0
  %1870 = vdwg.mxu0
  %v1871 = vld [vmem:[%s0 + $0xc8] sm:$0xf]
  %v1873 = vsel %vm116, %v1871, 0
  %v1876 = vsel %vm116, %v1863, 0
  %v1879 = vsel %vm116, %v1868, 0
  %1881 = vmatprep.subr.mxu0 0.0
  %1882 = vmatpush1.xpose.msra.mxu0 0.0
  %1883 = vmatprep.subr.mxu0 0.0
  %1884 = vmatpush1.xpose.msra.mxu0 0.0
  %1885 = vmatprep.subr.mxu0 0.0
  %1886 = vmatpush1.xpose.msra.mxu0 0.0
  %1887 = vmatprep.subr.mxu0 0.0
  %1888 = vmatpush1.xpose.msra.mxu0 0.0
  %1889 = vmatprep.subr.mxu0 0.0
  %1890 = vmatpush1.xpose.msra.mxu0 0.0
  %1891 = vmatprep.subr.mxu0 0.0
  %1892 = vmatpush1.xpose.msra.mxu0 0.0
  %1893 = vmatprep.subr.mxu0 0.0
  %1894 = vmatpush1.xpose.msra.mxu0 0.0
  %1895 = vmatprep.subr.mxu0 0.0
  %1896 = vmatpush1.xpose.msra.mxu0 0.0
  %1897 = vmatprep.subr.mxu0 0.0
  %1898 = vmatpush1.xpose.msra.mxu0 0.0
  %1899 = vmatprep.subr.mxu0 0.0
  %1900 = vmatpush1.xpose.msra.mxu0 0.0
  %1901 = vmatprep.subr.mxu0 0.0
  %1902 = vmatpush1.xpose.msra.mxu0 0.0
  %1903 = vmatprep.subr.mxu0 0.0
  %1904 = vmatpush1.xpose.msra.mxu0 0.0
  %1905 = vmatprep.subr.mxu0 0.0
  %1906 = vmatpush1.xpose.msra.mxu0 0.0
  %1907 = vmatprep.subr.mxu0 0.0
  %1908 = vmatpush1.xpose.msra.mxu0 0.0
  %1909 = vmatprep.subr.mxu0 0.0
  %1910 = vmatpush1.xpose.msra.mxu0 %v1879
  %1911 = vmatprep.subr.mxu0 0.0
  %1912 = vmatpush1.xpose.msra.mxu0 %v1876
  %1913 = vmatprep.subr.mxu0 0.0
  %1914 = vmatpush2.xpose.msra.mxu0 0.0
  %1915 = vmatprep.subr.mxu0 0.0
  %1916 = vmatpush2.xpose.msra.mxu0 0.0
  %1917 = vmatprep.subr.mxu0 0.0
  %1918 = vmatpush2.xpose.msra.mxu0 0.0
  %1919 = vmatprep.subr.mxu0 0.0
  %1920 = vmatpush2.xpose.msra.mxu0 0.0
  %1921 = vmatprep.subr.mxu0 0.0
  %1922 = vmatpush2.xpose.msra.mxu0 0.0
  %1923 = vmatprep.subr.mxu0 0.0
  %1924 = vmatpush2.xpose.msra.mxu0 0.0
  %1925 = vmatprep.subr.mxu0 0.0
  %1926 = vmatpush2.xpose.msra.mxu0 0.0
  %1927 = vmatprep.subr.mxu0 0.0
  %1928 = vmatpush2.xpose.msra.mxu0 0.0
  %1929 = vmatprep.subr.mxu0 0.0
  %1930 = vmatpush2.xpose.msra.mxu0 0.0
  %1931 = vmatprep.subr.mxu0 0.0
  %1932 = vmatpush2.xpose.msra.mxu0 0.0
  %1933 = vmatprep.subr.mxu0 0.0
  %1934 = vmatpush2.xpose.msra.mxu0 0.0
  %1935 = vmatprep.subr.mxu0 0.0
  %1936 = vmatpush2.xpose.msra.mxu0 0.0
  %1937 = vmatprep.subr.mxu0 0.0
  %1938 = vmatpush2.xpose.msra.mxu0 0.0
  %1939 = vmatprep.subr.mxu0 0.0
  %1940 = vmatpush2.xpose.msra.mxu0 0.0
  %1941 = vmatprep.subr.mxu0 0.0
  %1942 = vmatpush2.xpose.msra.mxu0 0.0
  %1943 = vmatprep.subr.mxu0 0.0
  %1944 = vmatpush2.xpose.msra.mxu0 0.0
  %1945 = vmatprep.mubr.f32.mxu0 0.0
  %1946 = vmatmul.mubr.f32.gmra.mxu0 %v1873
  %v1947 = vpop.f32.mrf.mxu0
  %v1948 = vadd.f32 0.0, %v1947
  %v1949 = vpop.f32.mrf.mxu0
  %1950 = vdwg.mxu0
  %v1951 = vld [vmem:[%s0 + $0xd0] sm:$0xf]
  %v1953 = vsel %vm116, %v1951, 0
  %1955 = vmatprep.subr.mxu0 0.0
  %1956 = vmatpush1.xpose.msra.mxu0 0.0
  %1957 = vmatprep.subr.mxu0 0.0
  %1958 = vmatpush1.xpose.msra.mxu0 0.0
  %1959 = vmatprep.subr.mxu0 0.0
  %1960 = vmatpush1.xpose.msra.mxu0 0.0
  %1961 = vmatprep.subr.mxu0 0.0
  %1962 = vmatpush1.xpose.msra.mxu0 0.0
  %1963 = vmatprep.subr.mxu0 0.0
  %1964 = vmatpush1.xpose.msra.mxu0 0.0
  %1965 = vmatprep.subr.mxu0 0.0
  %1966 = vmatpush1.xpose.msra.mxu0 0.0
  %1967 = vmatprep.subr.mxu0 0.0
  %1968 = vmatpush1.xpose.msra.mxu0 0.0
  %1969 = vmatprep.subr.mxu0 0.0
  %1970 = vmatpush1.xpose.msra.mxu0 0.0
  %1971 = vmatprep.subr.mxu0 0.0
  %1972 = vmatpush1.xpose.msra.mxu0 0.0
  %1973 = vmatprep.subr.mxu0 0.0
  %1974 = vmatpush1.xpose.msra.mxu0 0.0
  %1975 = vmatprep.subr.mxu0 0.0
  %1976 = vmatpush1.xpose.msra.mxu0 0.0
  %1977 = vmatprep.subr.mxu0 0.0
  %1978 = vmatpush1.xpose.msra.mxu0 0.0
  %1979 = vmatprep.subr.mxu0 0.0
  %1980 = vmatpush1.xpose.msra.mxu0 0.0
  %1981 = vmatprep.subr.mxu0 0.0
  %1982 = vmatpush1.xpose.msra.mxu0 0.0
  %1983 = vmatprep.subr.mxu0 0.0
  %1984 = vmatpush1.xpose.msra.mxu0 0.0
  %1985 = vmatprep.subr.mxu0 0.0
  %1986 = vmatpush1.xpose.msra.mxu0 %v1953
  %1987 = vmatprep.subr.mxu0 0.0
  %1988 = vmatpush2.xpose.msra.mxu0 0.0
  %1989 = vmatprep.subr.mxu0 0.0
  %1990 = vmatpush2.xpose.msra.mxu0 0.0
  %1991 = vmatprep.subr.mxu0 0.0
  %1992 = vmatpush2.xpose.msra.mxu0 0.0
  %1993 = vmatprep.subr.mxu0 0.0
  %1994 = vmatpush2.xpose.msra.mxu0 0.0
  %1995 = vmatprep.subr.mxu0 0.0
  %1996 = vmatpush2.xpose.msra.mxu0 0.0
  %1997 = vmatprep.subr.mxu0 0.0
  %1998 = vmatpush2.xpose.msra.mxu0 0.0
  %1999 = vmatprep.subr.mxu0 0.0
  %2000 = vmatpush2.xpose.msra.mxu0 0.0
  %2001 = vmatprep.subr.mxu0 0.0
  %2002 = vmatpush2.xpose.msra.mxu0 0.0
  %2003 = vmatprep.subr.mxu0 0.0
  %2004 = vmatpush2.xpose.msra.mxu0 0.0
  %2005 = vmatprep.subr.mxu0 0.0
  %2006 = vmatpush2.xpose.msra.mxu0 0.0
  %2007 = vmatprep.subr.mxu0 0.0
  %2008 = vmatpush2.xpose.msra.mxu0 0.0
  %2009 = vmatprep.subr.mxu0 0.0
  %2010 = vmatpush2.xpose.msra.mxu0 0.0
  %2011 = vmatprep.subr.mxu0 0.0
  %2012 = vmatpush2.xpose.msra.mxu0 0.0
  %2013 = vmatprep.subr.mxu0 0.0
  %2014 = vmatpush2.xpose.msra.mxu0 0.0
  %2015 = vmatprep.subr.mxu0 0.0
  %2016 = vmatpush2.xpose.msra.mxu0 0.0
  %2017 = vmatprep.subr.mxu0 0.0
  %2018 = vmatpush2.xpose.msra.mxu0 0.0
  %2019 = vmatprep.mubr.f32.mxu0 0.0
  %2020 = vmatmul.mubr.f32.gmra.mxu0 %v1876
  %v2021 = vpop.f32.mrf.mxu0
  %v2022 = vadd.f32 0.0, %v2021
  %v2023 = vpop.f32.mrf.mxu0
  %2024 = vmatprep.mubr.f32.mxu0 0.0
  %2025 = vmatmul.mubr.f32.gmra.mxu0 %v1879
  %v2026 = vpop.f32.mrf.mxu0
  %v2027 = vadd.f32 0.0, %v2026
  %v2028 = vpop.f32.mrf.mxu0
  %2029 = vdwg.mxu0
  %2031 = vset.pattern.permute.xlu0 0
  %2032 = vperm.xlu0 %2031, %v2022
  %v2033 = vpop.permute.xlu0 %2032
  %2036 = vset.pattern.permute.xlu0 0
  %2037 = vperm.xlu0 %2036, %v2027
  %v2038 = vpop.permute.xlu0 %2037
  %v2040 = vlaneseq
  %v2041 = vshrl.u32 %v2040, 7
  %v2042 = vsub.s32 0, %v2041
  %v2043 = vrot.slane %v1948, %v2042
  %v2044 = vadd.f32 %v2033, %v2043
  %v2045 = vadd.f32 %v2038, %v2043
  %2046 = vset.pattern.permute.xlu0 1
  %2047 = vperm.xlu0 %2046, %v2022
  %v2048 = vpop.permute.xlu0 %2047
  %2050 = vset.pattern.permute.xlu0 1
  %2051 = vperm.xlu0 %2050, %v2027
  %v2052 = vpop.permute.xlu0 %2051
  %v2054 = vlaneseq
  %v2055 = vshrl.u32 %v2054, 7
  %v2056 = vsub.s32 1, %v2055
  %v2057 = vrot.slane %v1948, %v2056
  %v2058 = vadd.f32 %v2048, %v2057
  %v2059 = vadd.f32 %v2052, %v2057
  %2060 = vset.pattern.permute.xlu0 2
  %2061 = vperm.xlu0 %2060, %v2022
  %v2062 = vpop.permute.xlu0 %2061
  %2064 = vset.pattern.permute.xlu0 2
  %2065 = vperm.xlu0 %2064, %v2027
  %v2066 = vpop.permute.xlu0 %2065
  %v2068 = vlaneseq
  %v2069 = vshrl.u32 %v2068, 7
  %v2070 = vsub.s32 2, %v2069
  %v2071 = vrot.slane %v1948, %v2070
  %v2072 = vadd.f32 %v2062, %v2071
  %v2073 = vadd.f32 %v2066, %v2071
  %2074 = vset.pattern.permute.xlu0 3
  %2075 = vperm.xlu0 %2074, %v2022
  %v2076 = vpop.permute.xlu0 %2075
  %2078 = vset.pattern.permute.xlu0 3
  %2079 = vperm.xlu0 %2078, %v2027
  %v2080 = vpop.permute.xlu0 %2079
  %v2082 = vlaneseq
  %v2083 = vshrl.u32 %v2082, 7
  %v2084 = vsub.s32 3, %v2083
  %v2085 = vrot.slane %v1948, %v2084
  %v2086 = vadd.f32 %v2076, %v2085
  %v2087 = vadd.f32 %v2080, %v2085
  %v2088 = vmul.f32 %v2044, 0.2
  %v2089 = vmul.f32 %v2045, 0.2
  %v2090 = vmul.f32 %v2058, 0.2
  %v2091 = vmul.f32 %v2059, 0.2
  %v2092 = vmul.f32 %v2072, 0.2
  %v2093 = vmul.f32 %v2073, 0.2
  %v2094 = vmul.f32 %v2086, 0.2
  %v2095 = vmul.f32 %v2087, 0.2
  %v2096 = vmax.f32 %v2044, %v2088
  %v2097 = vmax.f32 %v2045, %v2089
  %v2098 = vmax.f32 %v2058, %v2090
  %v2099 = vmax.f32 %v2059, %v2091
  %v2100 = vmax.f32 %v2072, %v2092
  %v2101 = vmax.f32 %v2073, %v2093
  %v2102 = vmax.f32 %v2086, %v2094
  %v2103 = vmax.f32 %v2087, %v2095
  %v2104 = vadd.f32 %v2096, %v11
  %v2105 = vadd.f32 %v2097, %v12
  %v2106 = vadd.f32 %v2098, %v13
  %v2107 = vadd.f32 %v2099, %v14
  %v2108 = vadd.f32 %v2100, %v15
  %v2109 = vadd.f32 %v2101, %v16
  %v2110 = vadd.f32 %v2102, %v17
  %v2111 = vadd.f32 %v2103, %v18
  %v2112 = vsel %vm28, %v2104, -inf
  %2113 = vmax.xlane.f32.xlu0 %v2112
  %v2114 = vpop.xlane.xlu0 %2113
  %v2115 = vsel %vm28, %v2105, -inf
  %2116 = vmax.xlane.f32.xlu0 %v2115
  %v2117 = vpop.xlane.xlu0 %2116
  %v2118 = vsel %vm28, %v2106, -inf
  %2119 = vmax.xlane.f32.xlu0 %v2118
  %v2120 = vpop.xlane.xlu0 %2119
  %v2121 = vsel %vm28, %v2107, -inf
  %2122 = vmax.xlane.f32.xlu0 %v2121
  %v2123 = vpop.xlane.xlu0 %2122
  %v2124 = vsel %vm28, %v2108, -inf
  %2125 = vmax.xlane.f32.xlu0 %v2124
  %v2126 = vpop.xlane.xlu0 %2125
  %v2127 = vsel %vm28, %v2109, -inf
  %2128 = vmax.xlane.f32.xlu0 %v2127
  %v2129 = vpop.xlane.xlu0 %2128
  %v2130 = vsel %vm28, %v2110, -inf
  %2131 = vmax.xlane.f32.xlu0 %v2130
  %v2132 = vpop.xlane.xlu0 %2131
  %v2133 = vsel %vm28, %v2111, -inf
  %2134 = vmax.xlane.f32.xlu0 %v2133
  %v2135 = vpop.xlane.xlu0 %2134
  %v2136 = vsub.f32 %v2104, %v2114
  %v2137 = vsub.f32 %v2105, %v2117
  %v2138 = vsub.f32 %v2106, %v2120
  %v2139 = vsub.f32 %v2107, %v2123
  %v2140 = vsub.f32 %v2108, %v2126
  %v2141 = vsub.f32 %v2109, %v2129
  %v2142 = vsub.f32 %v2110, %v2132
  %v2143 = vsub.f32 %v2111, %v2135
  %v2144 = vmul.f32 %v2136, 1.442695
  %v2145 = vpow.pop %v2144
  %v2146 = vmul.f32 %v2137, 1.442695
  %v2147 = vpow.pop %v2146
  %v2148 = vmul.f32 %v2138, 1.442695
  %v2149 = vpow.pop %v2148
  %v2150 = vmul.f32 %v2139, 1.442695
  %v2151 = vpow.pop %v2150
  %v2152 = vmul.f32 %v2140, 1.442695
  %v2153 = vpow.pop %v2152
  %v2154 = vmul.f32 %v2141, 1.442695
  %v2155 = vpow.pop %v2154
  %v2156 = vmul.f32 %v2142, 1.442695
  %v2157 = vpow.pop %v2156
  %v2158 = vmul.f32 %v2143, 1.442695
  %v2159 = vpow.pop %v2158
  %v2160 = vsel %vm28, %v2145, 0.0
  %2161 = vadd.xlane.f32.xlu0 %v2160
  %v2162 = vpop.xlane.xlu0 %2161
  %v2163 = vsel %vm28, %v2147, 0.0
  %2164 = vadd.xlane.f32.xlu0 %v2163
  %v2165 = vpop.xlane.xlu0 %2164
  %v2166 = vsel %vm28, %v2149, 0.0
  %2167 = vadd.xlane.f32.xlu0 %v2166
  %v2168 = vpop.xlane.xlu0 %2167
  %v2169 = vsel %vm28, %v2151, 0.0
  %2170 = vadd.xlane.f32.xlu0 %v2169
  %v2171 = vpop.xlane.xlu0 %2170
  %v2172 = vsel %vm28, %v2153, 0.0
  %2173 = vadd.xlane.f32.xlu0 %v2172
  %v2174 = vpop.xlane.xlu0 %2173
  %v2175 = vsel %vm28, %v2155, 0.0
  %2176 = vadd.xlane.f32.xlu0 %v2175
  %v2177 = vpop.xlane.xlu0 %2176
  %v2178 = vsel %vm28, %v2157, 0.0
  %2179 = vadd.xlane.f32.xlu0 %v2178
  %v2180 = vpop.xlane.xlu0 %2179
  %v2181 = vsel %vm28, %v2159, 0.0
  %2182 = vadd.xlane.f32.xlu0 %v2181
  %v2183 = vpop.xlane.xlu0 %2182
  %v2184 = vrcp.pop %v2162
  %v2185 = vmul.f32 %v2145, %v2184
  %v2186 = vrcp.pop %v2165
  %v2187 = vmul.f32 %v2147, %v2186
  %v2188 = vrcp.pop %v2168
  %v2189 = vmul.f32 %v2149, %v2188
  %v2190 = vrcp.pop %v2171
  %v2191 = vmul.f32 %v2151, %v2190
  %v2192 = vrcp.pop %v2174
  %v2193 = vmul.f32 %v2153, %v2192
  %v2194 = vrcp.pop %v2177
  %v2195 = vmul.f32 %v2155, %v2194
  %v2196 = vrcp.pop %v2180
  %v2197 = vmul.f32 %v2157, %v2196
  %v2198 = vrcp.pop %v2183
  %v2199 = vmul.f32 %v2159, %v2198
  %v2201 = vsel %vm28, %v2185, 0
  %v2204 = vsel %vm28, %v2187, 0
  %2206 = vmatprep.subr.mxu0 0.0
  %2207 = vmatpush1.msra.mxu0 0.0
  %2208 = vmatprep.subr.mxu0 0.0
  %2209 = vmatpush1.msra.mxu0 0.0
  %2210 = vmatprep.subr.mxu0 0.0
  %2211 = vmatpush1.msra.mxu0 0.0
  %2212 = vmatprep.subr.mxu0 0.0
  %2213 = vmatpush1.msra.mxu0 0.0
  %2214 = vmatprep.subr.mxu0 0.0
  %2215 = vmatpush1.msra.mxu0 0.0
  %2216 = vmatprep.subr.mxu0 0.0
  %2217 = vmatpush1.msra.mxu0 0.0
  %2218 = vmatprep.subr.mxu0 0.0
  %2219 = vmatpush1.msra.mxu0 0.0
  %2220 = vmatprep.subr.mxu0 0.0
  %2221 = vmatpush1.msra.mxu0 0.0
  %2222 = vmatprep.subr.mxu0 0.0
  %2223 = vmatpush1.msra.mxu0 0.0
  %2224 = vmatprep.subr.mxu0 0.0
  %2225 = vmatpush1.msra.mxu0 0.0
  %2226 = vmatprep.subr.mxu0 0.0
  %2227 = vmatpush1.msra.mxu0 0.0
  %2228 = vmatprep.subr.mxu0 0.0
  %2229 = vmatpush1.msra.mxu0 0.0
  %2230 = vmatprep.subr.mxu0 0.0
  %2231 = vmatpush1.msra.mxu0 0.0
  %2232 = vmatprep.subr.mxu0 0.0
  %2233 = vmatpush1.msra.mxu0 0.0
  %2234 = vmatprep.subr.mxu0 0.0
  %2235 = vmatpush1.msra.mxu0 %v1868
  %2236 = vmatprep.subr.mxu0 0.0
  %2237 = vmatpush1.msra.mxu0 %v1863
  %2238 = vmatprep.subr.mxu0 0.0
  %2239 = vmatpush2.msra.mxu0 0.0
  %2240 = vmatprep.subr.mxu0 0.0
  %2241 = vmatpush2.msra.mxu0 0.0
  %2242 = vmatprep.subr.mxu0 0.0
  %2243 = vmatpush2.msra.mxu0 0.0
  %2244 = vmatprep.subr.mxu0 0.0
  %2245 = vmatpush2.msra.mxu0 0.0
  %2246 = vmatprep.subr.mxu0 0.0
  %2247 = vmatpush2.msra.mxu0 0.0
  %2248 = vmatprep.subr.mxu0 0.0
  %2249 = vmatpush2.msra.mxu0 0.0
  %2250 = vmatprep.subr.mxu0 0.0
  %2251 = vmatpush2.msra.mxu0 0.0
  %2252 = vmatprep.subr.mxu0 0.0
  %2253 = vmatpush2.msra.mxu0 0.0
  %2254 = vmatprep.subr.mxu0 0.0
  %2255 = vmatpush2.msra.mxu0 0.0
  %2256 = vmatprep.subr.mxu0 0.0
  %2257 = vmatpush2.msra.mxu0 0.0
  %2258 = vmatprep.subr.mxu0 0.0
  %2259 = vmatpush2.msra.mxu0 0.0
  %2260 = vmatprep.subr.mxu0 0.0
  %2261 = vmatpush2.msra.mxu0 0.0
  %2262 = vmatprep.subr.mxu0 0.0
  %2263 = vmatpush2.msra.mxu0 0.0
  %2264 = vmatprep.subr.mxu0 0.0
  %2265 = vmatpush2.msra.mxu0 0.0
  %2266 = vmatprep.subr.mxu0 0.0
  %2267 = vmatpush2.msra.mxu0 0.0
  %2268 = vmatprep.subr.mxu0 0.0
  %2269 = vmatpush2.msra.mxu0 0.0
  %2270 = vmatprep.mubr.f32.mxu0 0.0
  %2271 = vmatmul.mubr.f32.gmra.mxu0 %v2201
  %v2272 = vpop.f32.mrf.mxu0
  %v2273 = vadd.f32 0.0, %v2272
  %v2274 = vpop.f32.mrf.mxu0
  %2275 = vmatprep.mubr.f32.mxu0 0.0
  %2276 = vmatmul.mubr.f32.gmra.mxu0 %v2204
  %v2277 = vpop.f32.mrf.mxu0
  %v2278 = vadd.f32 0.0, %v2277
  %v2279 = vpop.f32.mrf.mxu0
  %2280 = vdwg.mxu0
  %2281 = vrot.lane.b32.xlu0 %v1863, 120
  %v2282 = vpop.permute.xlu0 %2281
  %2283 = vrot.lane.b32.xlu0 %v1868, 120
  %v2284 = vpop.permute.xlu0 %2283
  %v2288 = vsel %vm28, %v2189, 0
  %v2291 = vsel %vm28, %v2191, 0
  %2293 = vmatprep.subr.mxu0 0.0
  %2294 = vmatpush1.msra.mxu0 0.0
  %2295 = vmatprep.subr.mxu0 0.0
  %2296 = vmatpush1.msra.mxu0 0.0
  %2297 = vmatprep.subr.mxu0 0.0
  %2298 = vmatpush1.msra.mxu0 0.0
  %2299 = vmatprep.subr.mxu0 0.0
  %2300 = vmatpush1.msra.mxu0 0.0
  %2301 = vmatprep.subr.mxu0 0.0
  %2302 = vmatpush1.msra.mxu0 0.0
  %2303 = vmatprep.subr.mxu0 0.0
  %2304 = vmatpush1.msra.mxu0 0.0
  %2305 = vmatprep.subr.mxu0 0.0
  %2306 = vmatpush1.msra.mxu0 0.0
  %2307 = vmatprep.subr.mxu0 0.0
  %2308 = vmatpush1.msra.mxu0 0.0
  %2309 = vmatprep.subr.mxu0 0.0
  %2310 = vmatpush1.msra.mxu0 0.0
  %2311 = vmatprep.subr.mxu0 0.0
  %2312 = vmatpush1.msra.mxu0 0.0
  %2313 = vmatprep.subr.mxu0 0.0
  %2314 = vmatpush1.msra.mxu0 0.0
  %2315 = vmatprep.subr.mxu0 0.0
  %2316 = vmatpush1.msra.mxu0 0.0
  %2317 = vmatprep.subr.mxu0 0.0
  %2318 = vmatpush1.msra.mxu0 0.0
  %2319 = vmatprep.subr.mxu0 0.0
  %2320 = vmatpush1.msra.mxu0 0.0
  %2321 = vmatprep.subr.mxu0 0.0
  %2322 = vmatpush1.msra.mxu0 %v2284
  %2323 = vmatprep.subr.mxu0 0.0
  %2324 = vmatpush1.msra.mxu0 %v2282
  %2325 = vmatprep.subr.mxu0 0.0
  %2326 = vmatpush2.msra.mxu0 0.0
  %2327 = vmatprep.subr.mxu0 0.0
  %2328 = vmatpush2.msra.mxu0 0.0
  %2329 = vmatprep.subr.mxu0 0.0
  %2330 = vmatpush2.msra.mxu0 0.0
  %2331 = vmatprep.subr.mxu0 0.0
  %2332 = vmatpush2.msra.mxu0 0.0
  %2333 = vmatprep.subr.mxu0 0.0
  %2334 = vmatpush2.msra.mxu0 0.0
  %2335 = vmatprep.subr.mxu0 0.0
  %2336 = vmatpush2.msra.mxu0 0.0
  %2337 = vmatprep.subr.mxu0 0.0
  %2338 = vmatpush2.msra.mxu0 0.0
  %2339 = vmatprep.subr.mxu0 0.0
  %2340 = vmatpush2.msra.mxu0 0.0
  %2341 = vmatprep.subr.mxu0 0.0
  %2342 = vmatpush2.msra.mxu0 0.0
  %2343 = vmatprep.subr.mxu0 0.0
  %2344 = vmatpush2.msra.mxu0 0.0
  %2345 = vmatprep.subr.mxu0 0.0
  %2346 = vmatpush2.msra.mxu0 0.0
  %2347 = vmatprep.subr.mxu0 0.0
  %2348 = vmatpush2.msra.mxu0 0.0
  %2349 = vmatprep.subr.mxu0 0.0
  %2350 = vmatpush2.msra.mxu0 0.0
  %2351 = vmatprep.subr.mxu0 0.0
  %2352 = vmatpush2.msra.mxu0 0.0
  %2353 = vmatprep.subr.mxu0 0.0
  %2354 = vmatpush2.msra.mxu0 0.0
  %2355 = vmatprep.subr.mxu0 0.0
  %2356 = vmatpush2.msra.mxu0 0.0
  %2357 = vmatprep.mubr.f32.mxu0 0.0
  %2358 = vmatmul.mubr.f32.gmra.mxu0 %v2288
  %v2359 = vpop.f32.mrf.mxu0
  %v2360 = vadd.f32 0.0, %v2359
  %v2361 = vpop.f32.mrf.mxu0
  %2362 = vmatprep.mubr.f32.mxu0 0.0
  %2363 = vmatmul.mubr.f32.gmra.mxu0 %v2291
  %v2364 = vpop.f32.mrf.mxu0
  %v2365 = vadd.f32 0.0, %v2364
  %v2366 = vpop.f32.mrf.mxu0
  %2367 = vdwg.mxu0
  %2368 = vrot.lane.b32.xlu0 %v1863, 112
  %v2369 = vpop.permute.xlu0 %2368
  %2370 = vrot.lane.b32.xlu0 %v1868, 112
  %v2371 = vpop.permute.xlu0 %2370
  %v2375 = vsel %vm28, %v2193, 0
  %v2378 = vsel %vm28, %v2195, 0
  %2380 = vmatprep.subr.mxu0 0.0
  %2381 = vmatpush1.msra.mxu0 0.0
  %2382 = vmatprep.subr.mxu0 0.0
  %2383 = vmatpush1.msra.mxu0 0.0
  %2384 = vmatprep.subr.mxu0 0.0
  %2385 = vmatpush1.msra.mxu0 0.0
  %2386 = vmatprep.subr.mxu0 0.0
  %2387 = vmatpush1.msra.mxu0 0.0
  %2388 = vmatprep.subr.mxu0 0.0
  %2389 = vmatpush1.msra.mxu0 0.0
  %2390 = vmatprep.subr.mxu0 0.0
  %2391 = vmatpush1.msra.mxu0 0.0
  %2392 = vmatprep.subr.mxu0 0.0
  %2393 = vmatpush1.msra.mxu0 0.0
  %2394 = vmatprep.subr.mxu0 0.0
  %2395 = vmatpush1.msra.mxu0 0.0
  %2396 = vmatprep.subr.mxu0 0.0
  %2397 = vmatpush1.msra.mxu0 0.0
  %2398 = vmatprep.subr.mxu0 0.0
  %2399 = vmatpush1.msra.mxu0 0.0
  %2400 = vmatprep.subr.mxu0 0.0
  %2401 = vmatpush1.msra.mxu0 0.0
  %2402 = vmatprep.subr.mxu0 0.0
  %2403 = vmatpush1.msra.mxu0 0.0
  %2404 = vmatprep.subr.mxu0 0.0
  %2405 = vmatpush1.msra.mxu0 0.0
  %2406 = vmatprep.subr.mxu0 0.0
  %2407 = vmatpush1.msra.mxu0 0.0
  %2408 = vmatprep.subr.mxu0 0.0
  %2409 = vmatpush1.msra.mxu0 %v2371
  %2410 = vmatprep.subr.mxu0 0.0
  %2411 = vmatpush1.msra.mxu0 %v2369
  %2412 = vmatprep.subr.mxu0 0.0
  %2413 = vmatpush2.msra.mxu0 0.0
  %2414 = vmatprep.subr.mxu0 0.0
  %2415 = vmatpush2.msra.mxu0 0.0
  %2416 = vmatprep.subr.mxu0 0.0
  %2417 = vmatpush2.msra.mxu0 0.0
  %2418 = vmatprep.subr.mxu0 0.0
  %2419 = vmatpush2.msra.mxu0 0.0
  %2420 = vmatprep.subr.mxu0 0.0
  %2421 = vmatpush2.msra.mxu0 0.0
  %2422 = vmatprep.subr.mxu0 0.0
  %2423 = vmatpush2.msra.mxu0 0.0
  %2424 = vmatprep.subr.mxu0 0.0
  %2425 = vmatpush2.msra.mxu0 0.0
  %2426 = vmatprep.subr.mxu0 0.0
  %2427 = vmatpush2.msra.mxu0 0.0
  %2428 = vmatprep.subr.mxu0 0.0
  %2429 = vmatpush2.msra.mxu0 0.0
  %2430 = vmatprep.subr.mxu0 0.0
  %2431 = vmatpush2.msra.mxu0 0.0
  %2432 = vmatprep.subr.mxu0 0.0
  %2433 = vmatpush2.msra.mxu0 0.0
  %2434 = vmatprep.subr.mxu0 0.0
  %2435 = vmatpush2.msra.mxu0 0.0
  %2436 = vmatprep.subr.mxu0 0.0
  %2437 = vmatpush2.msra.mxu0 0.0
  %2438 = vmatprep.subr.mxu0 0.0
  %2439 = vmatpush2.msra.mxu0 0.0
  %2440 = vmatprep.subr.mxu0 0.0
  %2441 = vmatpush2.msra.mxu0 0.0
  %2442 = vmatprep.subr.mxu0 0.0
  %2443 = vmatpush2.msra.mxu0 0.0
  %2444 = vmatprep.mubr.f32.mxu0 0.0
  %2445 = vmatmul.mubr.f32.gmra.mxu0 %v2375
  %v2446 = vpop.f32.mrf.mxu0
  %v2447 = vadd.f32 0.0, %v2446
  %v2448 = vpop.f32.mrf.mxu0
  %2449 = vmatprep.mubr.f32.mxu0 0.0
  %2450 = vmatmul.mubr.f32.gmra.mxu0 %v2378
  %v2451 = vpop.f32.mrf.mxu0
  %v2452 = vadd.f32 0.0, %v2451
  %v2453 = vpop.f32.mrf.mxu0
  %2454 = vdwg.mxu0
  %2455 = vrot.lane.b32.xlu0 %v1863, 104
  %v2456 = vpop.permute.xlu0 %2455
  %2457 = vrot.lane.b32.xlu0 %v1868, 104
  %v2458 = vpop.permute.xlu0 %2457
  %v2462 = vsel %vm28, %v2197, 0
  %v2465 = vsel %vm28, %v2199, 0
  %2467 = vmatprep.subr.mxu0 0.0
  %2468 = vmatpush1.msra.mxu0 0.0
  %2469 = vmatprep.subr.mxu0 0.0
  %2470 = vmatpush1.msra.mxu0 0.0
  %2471 = vmatprep.subr.mxu0 0.0
  %2472 = vmatpush1.msra.mxu0 0.0
  %2473 = vmatprep.subr.mxu0 0.0
  %2474 = vmatpush1.msra.mxu0 0.0
  %2475 = vmatprep.subr.mxu0 0.0
  %2476 = vmatpush1.msra.mxu0 0.0
  %2477 = vmatprep.subr.mxu0 0.0
  %2478 = vmatpush1.msra.mxu0 0.0
  %2479 = vmatprep.subr.mxu0 0.0
  %2480 = vmatpush1.msra.mxu0 0.0
  %2481 = vmatprep.subr.mxu0 0.0
  %2482 = vmatpush1.msra.mxu0 0.0
  %2483 = vmatprep.subr.mxu0 0.0
  %2484 = vmatpush1.msra.mxu0 0.0
  %2485 = vmatprep.subr.mxu0 0.0
  %2486 = vmatpush1.msra.mxu0 0.0
  %2487 = vmatprep.subr.mxu0 0.0
  %2488 = vmatpush1.msra.mxu0 0.0
  %2489 = vmatprep.subr.mxu0 0.0
  %2490 = vmatpush1.msra.mxu0 0.0
  %2491 = vmatprep.subr.mxu0 0.0
  %2492 = vmatpush1.msra.mxu0 0.0
  %2493 = vmatprep.subr.mxu0 0.0
  %2494 = vmatpush1.msra.mxu0 0.0
  %2495 = vmatprep.subr.mxu0 0.0
  %2496 = vmatpush1.msra.mxu0 %v2458
  %2497 = vmatprep.subr.mxu0 0.0
  %2498 = vmatpush1.msra.mxu0 %v2456
  %2499 = vmatprep.subr.mxu0 0.0
  %2500 = vmatpush2.msra.mxu0 0.0
  %2501 = vmatprep.subr.mxu0 0.0
  %2502 = vmatpush2.msra.mxu0 0.0
  %2503 = vmatprep.subr.mxu0 0.0
  %2504 = vmatpush2.msra.mxu0 0.0
  %2505 = vmatprep.subr.mxu0 0.0
  %2506 = vmatpush2.msra.mxu0 0.0
  %2507 = vmatprep.subr.mxu0 0.0
  %2508 = vmatpush2.msra.mxu0 0.0
  %2509 = vmatprep.subr.mxu0 0.0
  %2510 = vmatpush2.msra.mxu0 0.0
  %2511 = vmatprep.subr.mxu0 0.0
  %2512 = vmatpush2.msra.mxu0 0.0
  %2513 = vmatprep.subr.mxu0 0.0
  %2514 = vmatpush2.msra.mxu0 0.0
  %2515 = vmatprep.subr.mxu0 0.0
  %2516 = vmatpush2.msra.mxu0 0.0
  %2517 = vmatprep.subr.mxu0 0.0
  %2518 = vmatpush2.msra.mxu0 0.0
  %2519 = vmatprep.subr.mxu0 0.0
  %2520 = vmatpush2.msra.mxu0 0.0
  %2521 = vmatprep.subr.mxu0 0.0
  %2522 = vmatpush2.msra.mxu0 0.0
  %2523 = vmatprep.subr.mxu0 0.0
  %2524 = vmatpush2.msra.mxu0 0.0
  %2525 = vmatprep.subr.mxu0 0.0
  %2526 = vmatpush2.msra.mxu0 0.0
  %2527 = vmatprep.subr.mxu0 0.0
  %2528 = vmatpush2.msra.mxu0 0.0
  %2529 = vmatprep.subr.mxu0 0.0
  %2530 = vmatpush2.msra.mxu0 0.0
  %2531 = vmatprep.mubr.f32.mxu0 0.0
  %2532 = vmatmul.mubr.f32.gmra.mxu0 %v2462
  %v2533 = vpop.f32.mrf.mxu0
  %v2534 = vadd.f32 0.0, %v2533
  %v2535 = vpop.f32.mrf.mxu0
  %2536 = vmatprep.mubr.f32.mxu0 0.0
  %2537 = vmatmul.mubr.f32.gmra.mxu0 %v2465
  %v2538 = vpop.f32.mrf.mxu0
  %v2539 = vadd.f32 0.0, %v2538
  %v2540 = vpop.f32.mrf.mxu0
  %2541 = vdwg.mxu0
  %2544 = vrot.lane.b32.xlu0 %v2360, 8
  %v2545 = vpop.permute.xlu0 %2544
  %2546 = vrot.lane.b32.xlu0 %v2365, 8
  %v2547 = vpop.permute.xlu0 %2546
  %2552 = vrot.lane.b32.xlu0 %v2447, 16
  %v2553 = vpop.permute.xlu0 %2552
  %2554 = vrot.lane.b32.xlu0 %v2452, 16
  %v2555 = vpop.permute.xlu0 %2554
  %2560 = vrot.lane.b32.xlu0 %v2534, 24
  %v2561 = vpop.permute.xlu0 %2560
  %2562 = vrot.lane.b32.xlu0 %v2539, 24
  %v2563 = vpop.permute.xlu0 %2562
  %v2566 = vsel %vm893, %v2273, %v2545
  %v2567 = vsel %vm893, %v2278, %v2547
  %v2568 = vsel %vm28, %v2566, %v2553
  %v2569 = vsel %vm28, %v2567, %v2555
  %v2570 = vsel %vm898, %v2568, %v2561
  %v2571 = vsel %vm898, %v2569, %v2563
  %v2572 = vld [vmem:[%s0 + $0xd8] sm:$0x1]
  %v2573 = vlaneseq
  %v2574 = vshrl.u32 %v2573, 7
  %v2575 = vsub.s32 0, %v2574
  %v2576 = vrot.slane %v2572, %v2575
  %v2577 = vadd.f32 %v2570, %v2576
  %v2578 = vadd.f32 %v2571, %v2576
  %v2579 = vsel %vm116, %v2577, 0.0
  %2580 = vadd.xlane.f32.xlu0 %v2579
  %v2581 = vpop.xlane.xlu0 %2580
  %v2582 = vsel %vm116, %v2578, 0.0
  %2583 = vadd.xlane.f32.xlu0 %v2582
  %v2584 = vpop.xlane.xlu0 %2583
  %v2585 = vmul.f32 %v2581, %v914
  %v2586 = vmul.f32 %v2584, %v914
  %v2587 = vsub.f32 %v2577, %v2585
  %v2588 = vsub.f32 %v2578, %v2586
  %v2589 = vmul.f32 %v2587, %v2587
  %v2590 = vmul.f32 %v2588, %v2588
  %v2591 = vsel %vm116, %v2589, 0.0
  %2592 = vadd.xlane.f32.xlu0 %v2591
  %v2593 = vpop.xlane.xlu0 %2592
  %v2594 = vsel %vm116, %v2590, 0.0
  %2595 = vadd.xlane.f32.xlu0 %v2594
  %v2596 = vpop.xlane.xlu0 %2595
  %v2597 = vmul.f32 %v2593, %v914
  %v2598 = vmul.f32 %v2596, %v914
  %v2599 = vadd.f32 %v2597, 1e-05
  %v2600 = vadd.f32 %v2598, 1e-05
  %v2601 = vrsqrt.pop %v2599
  %v2602 = vrsqrt.pop %v2600
  %v2603 = vmul.f32 %v2587, %v2601
  %v2604 = vmul.f32 %v2588, %v2602
  %v2605 = vld [vmem:[%s0 + $0xe0] sm:$0x1]
  %v2606 = vlaneseq
  %v2607 = vshrl.u32 %v2606, 7
  %v2608 = vsub.s32 0, %v2607
  %v2609 = vrot.slane %v2605, %v2608
  %v2610 = vmul.f32 %v2603, %v2609
  %v2611 = vmul.f32 %v2604, %v2609
  %v2612 = vld [vmem:[%s0 + $0xe8] sm:$0x1]
  %v2613 = vlaneseq
  %v2614 = vshrl.u32 %v2613, 7
  %v2615 = vsub.s32 0, %v2614
  %v2616 = vrot.slane %v2612, %v2615
  %v2617 = vadd.f32 %v2610, %v2616
  %v2618 = vadd.f32 %v2611, %v2616
  %v2619 = vmax.f32 %v2617, 0.0
  %v2620 = vmax.f32 %v2618, 0.0
  %v2621 = vld [vmem:[%s0 + $0xf0] sm:$0xff]
  %v2622 = vld [vmem:[%s0 + $0xf8] sm:$0xff]
  %v2623 = vld [vmem:[%s0 + $0x100] sm:$0xff]
  %v2624 = vld [vmem:[%s0 + $0x108] sm:$0xff]
  %v2626 = vsel %vm116, %v2619, 0
  %v2629 = vsel %vm116, %v2620, 0
  %2631 = vmatprep.subr.mxu0 0.0
  %2632 = vmatpush1.msra.mxu0 0.0
  %2633 = vmatprep.subr.mxu0 0.0
  %2634 = vmatpush1.msra.mxu0 0.0
  %2635 = vmatprep.subr.mxu0 0.0
  %2636 = vmatpush1.msra.mxu0 0.0
  %2637 = vmatprep.subr.mxu0 0.0
  %2638 = vmatpush1.msra.mxu0 0.0
  %2639 = vmatprep.subr.mxu0 0.0
  %2640 = vmatpush1.msra.mxu0 0.0
  %2641 = vmatprep.subr.mxu0 0.0
  %2642 = vmatpush1.msra.mxu0 0.0
  %2643 = vmatprep.subr.mxu0 0.0
  %2644 = vmatpush1.msra.mxu0 0.0
  %2645 = vmatprep.subr.mxu0 0.0
  %2646 = vmatpush1.msra.mxu0 0.0
  %2647 = vmatprep.subr.mxu0 0.0
  %2648 = vmatpush1.msra.mxu0 0.0
  %2649 = vmatprep.subr.mxu0 0.0
  %2650 = vmatpush1.msra.mxu0 0.0
  %2651 = vmatprep.subr.mxu0 0.0
  %2652 = vmatpush1.msra.mxu0 0.0
  %2653 = vmatprep.subr.mxu0 0.0
  %2654 = vmatpush1.msra.mxu0 0.0
  %2655 = vmatprep.subr.mxu0 0.0
  %2656 = vmatpush1.msra.mxu0 %v2624
  %2657 = vmatprep.subr.mxu0 0.0
  %2658 = vmatpush1.msra.mxu0 %v2623
  %2659 = vmatprep.subr.mxu0 0.0
  %2660 = vmatpush1.msra.mxu0 %v2622
  %2661 = vmatprep.subr.mxu0 0.0
  %2662 = vmatpush1.msra.mxu0 %v2621
  %2663 = vmatprep.subr.mxu0 0.0
  %2664 = vmatpush2.msra.mxu0 0.0
  %2665 = vmatprep.subr.mxu0 0.0
  %2666 = vmatpush2.msra.mxu0 0.0
  %2667 = vmatprep.subr.mxu0 0.0
  %2668 = vmatpush2.msra.mxu0 0.0
  %2669 = vmatprep.subr.mxu0 0.0
  %2670 = vmatpush2.msra.mxu0 0.0
  %2671 = vmatprep.subr.mxu0 0.0
  %2672 = vmatpush2.msra.mxu0 0.0
  %2673 = vmatprep.subr.mxu0 0.0
  %2674 = vmatpush2.msra.mxu0 0.0
  %2675 = vmatprep.subr.mxu0 0.0
  %2676 = vmatpush2.msra.mxu0 0.0
  %2677 = vmatprep.subr.mxu0 0.0
  %2678 = vmatpush2.msra.mxu0 0.0
  %2679 = vmatprep.subr.mxu0 0.0
  %2680 = vmatpush2.msra.mxu0 0.0
  %2681 = vmatprep.subr.mxu0 0.0
  %2682 = vmatpush2.msra.mxu0 0.0
  %2683 = vmatprep.subr.mxu0 0.0
  %2684 = vmatpush2.msra.mxu0 0.0
  %2685 = vmatprep.subr.mxu0 0.0
  %2686 = vmatpush2.msra.mxu0 0.0
  %2687 = vmatprep.subr.mxu0 0.0
  %2688 = vmatpush2.msra.mxu0 0.0
  %2689 = vmatprep.subr.mxu0 0.0
  %2690 = vmatpush2.msra.mxu0 0.0
  %2691 = vmatprep.subr.mxu0 0.0
  %2692 = vmatpush2.msra.mxu0 0.0
  %2693 = vmatprep.subr.mxu0 0.0
  %2694 = vmatpush2.msra.mxu0 0.0
  %2695 = vmatprep.mubr.f32.mxu0 0.0
  %2696 = vmatmul.mubr.f32.gmra.mxu0 %v2626
  %v2697 = vpop.f32.mrf.mxu0
  %v2698 = vadd.f32 0.0, %v2697
  %v2699 = vpop.f32.mrf.mxu0
  %2700 = vmatprep.mubr.f32.mxu0 0.0
  %2701 = vmatmul.mubr.f32.gmra.mxu0 %v2629
  %v2702 = vpop.f32.mrf.mxu0
  %v2703 = vadd.f32 0.0, %v2702
  %v2704 = vpop.f32.mrf.mxu0
  %2705 = vdwg.mxu0
  %v2706 = vld [vmem:[%s0 + $0x110] sm:$0x1]
  %v2708 = vsel %vm28, %v2706, 0
  %v2711 = vsel %vm28, %v2698, 0
  %v2714 = vsel %vm28, %v2703, 0
  %2716 = vmatprep.subr.mxu0 0.0
  %2717 = vmatpush1.xpose.msra.mxu0 0.0
  %2718 = vmatprep.subr.mxu0 0.0
  %2719 = vmatpush1.xpose.msra.mxu0 0.0
  %2720 = vmatprep.subr.mxu0 0.0
  %2721 = vmatpush1.xpose.msra.mxu0 0.0
  %2722 = vmatprep.subr.mxu0 0.0
  %2723 = vmatpush1.xpose.msra.mxu0 0.0
  %2724 = vmatprep.subr.mxu0 0.0
  %2725 = vmatpush1.xpose.msra.mxu0 0.0
  %2726 = vmatprep.subr.mxu0 0.0
  %2727 = vmatpush1.xpose.msra.mxu0 0.0
  %2728 = vmatprep.subr.mxu0 0.0
  %2729 = vmatpush1.xpose.msra.mxu0 0.0
  %2730 = vmatprep.subr.mxu0 0.0
  %2731 = vmatpush1.xpose.msra.mxu0 0.0
  %2732 = vmatprep.subr.mxu0 0.0
  %2733 = vmatpush1.xpose.msra.mxu0 0.0
  %2734 = vmatprep.subr.mxu0 0.0
  %2735 = vmatpush1.xpose.msra.mxu0 0.0
  %2736 = vmatprep.subr.mxu0 0.0
  %2737 = vmatpush1.xpose.msra.mxu0 0.0
  %2738 = vmatprep.subr.mxu0 0.0
  %2739 = vmatpush1.xpose.msra.mxu0 0.0
  %2740 = vmatprep.subr.mxu0 0.0
  %2741 = vmatpush1.xpose.msra.mxu0 0.0
  %2742 = vmatprep.subr.mxu0 0.0
  %2743 = vmatpush1.xpose.msra.mxu0 0.0
  %2744 = vmatprep.subr.mxu0 0.0
  %2745 = vmatpush1.xpose.msra.mxu0 %v2714
  %2746 = vmatprep.subr.mxu0 0.0
  %2747 = vmatpush1.xpose.msra.mxu0 %v2711
  %2748 = vmatprep.subr.mxu0 0.0
  %2749 = vmatpush2.xpose.msra.mxu0 0.0
  %2750 = vmatprep.subr.mxu0 0.0
  %2751 = vmatpush2.xpose.msra.mxu0 0.0
  %2752 = vmatprep.subr.mxu0 0.0
  %2753 = vmatpush2.xpose.msra.mxu0 0.0
  %2754 = vmatprep.subr.mxu0 0.0
  %2755 = vmatpush2.xpose.msra.mxu0 0.0
  %2756 = vmatprep.subr.mxu0 0.0
  %2757 = vmatpush2.xpose.msra.mxu0 0.0
  %2758 = vmatprep.subr.mxu0 0.0
  %2759 = vmatpush2.xpose.msra.mxu0 0.0
  %2760 = vmatprep.subr.mxu0 0.0
  %2761 = vmatpush2.xpose.msra.mxu0 0.0
  %2762 = vmatprep.subr.mxu0 0.0
  %2763 = vmatpush2.xpose.msra.mxu0 0.0
  %2764 = vmatprep.subr.mxu0 0.0
  %2765 = vmatpush2.xpose.msra.mxu0 0.0
  %2766 = vmatprep.subr.mxu0 0.0
  %2767 = vmatpush2.xpose.msra.mxu0 0.0
  %2768 = vmatprep.subr.mxu0 0.0
  %2769 = vmatpush2.xpose.msra.mxu0 0.0
  %2770 = vmatprep.subr.mxu0 0.0
  %2771 = vmatpush2.xpose.msra.mxu0 0.0
  %2772 = vmatprep.subr.mxu0 0.0
  %2773 = vmatpush2.xpose.msra.mxu0 0.0
  %2774 = vmatprep.subr.mxu0 0.0
  %2775 = vmatpush2.xpose.msra.mxu0 0.0
  %2776 = vmatprep.subr.mxu0 0.0
  %2777 = vmatpush2.xpose.msra.mxu0 0.0
  %2778 = vmatprep.subr.mxu0 0.0
  %2779 = vmatpush2.xpose.msra.mxu0 0.0
  %2780 = vmatprep.mubr.f32.mxu0 0.0
  %2781 = vmatmul.mubr.f32.gmra.mxu0 %v2708
  %v2782 = vpop.f32.mrf.mxu0
  %v2783 = vadd.f32 0.0, %v2782
  %v2784 = vpop.f32.mrf.mxu0
  %2785 = vdwg.mxu0
  %v2786 = vld [vmem:[%s0 + $0x118] sm:$0x1]
  %v2787 = vlaneseq
  %v2788 = vshrl.u32 %v2787, 7
  %v2789 = vsub.s32 0, %v2788
  %v2790 = vrot.slane %v2786, %v2789
  %v2791 = vmul.f32 %v2698, %v2790
  %v2792 = vmul.f32 %v2703, %v2790
  %v2793 = vsel %vm28, %v2791, 0.0
  %2794 = vadd.xlane.f32.xlu0 %v2793
  %v2795 = vpop.xlane.xlu0 %2794
  %v2796 = vsel %vm28, %v2792, 0.0
  %2797 = vadd.xlane.f32.xlu0 %v2796
  %v2798 = vpop.xlane.xlu0 %2797
  %v2799 = vlaneseq
  %v2800 = vshrl.u32 %v2799, 7
  %v2801 = vsub.s32 0, %v2800
  %v2802 = vrot.slane %v2783, %v2801
  %v2803 = vadd.f32 %v2795, %v2802
  %v2804 = vadd.f32 %v2798, %v2802
  %v2805 = vmul.f32 %v2803, 0.2
  %v2806 = vmul.f32 %v2804, 0.2
  %v2807 = vmax.f32 %v2803, %v2805
  %v2808 = vmax.f32 %v2804, %v2806
  %v2809 = vadd.f32 %v2807, %v11
  %v2810 = vadd.f32 %v2808, %v12
  %v2811 = vsel %vm28, %v2809, -inf
  %2812 = vmax.xlane.f32.xlu0 %v2811
  %v2813 = vpop.xlane.xlu0 %2812
  %v2814 = vsel %vm28, %v2810, -inf
  %2815 = vmax.xlane.f32.xlu0 %v2814
  %v2816 = vpop.xlane.xlu0 %2815
  %v2817 = vsub.f32 %v2809, %v2813
  %v2818 = vsub.f32 %v2810, %v2816
  %v2819 = vmul.f32 %v2817, 1.442695
  %v2820 = vpow.pop %v2819
  %v2821 = vmul.f32 %v2818, 1.442695
  %v2822 = vpow.pop %v2821
  %v2823 = vsel %vm28, %v2820, 0.0
  %2824 = vadd.xlane.f32.xlu0 %v2823
  %v2825 = vpop.xlane.xlu0 %2824
  %v2826 = vsel %vm28, %v2822, 0.0
  %2827 = vadd.xlane.f32.xlu0 %v2826
  %v2828 = vpop.xlane.xlu0 %2827
  %v2829 = vrcp.pop %v2825
  %v2830 = vmul.f32 %v2820, %v2829
  %v2831 = vrcp.pop %v2828
  %v2832 = vmul.f32 %v2822, %v2831
  %v2833 = vld [vmem:[%s0 + $0x120] sm:$0x1]
  %v2834 = vlaneseq
  %v2835 = vshrl.u32 %v2834, 7
  %v2836 = vsub.s32 0, %v2835
  %v2837 = vrot.slane %v2833, %v2836
  %v2839 = vsel %vm28, %v2830, 0
  %v2842 = vsel %vm28, %v2832, 0
  %2844 = vmatprep.subr.mxu0 0.0
  %2845 = vmatpush1.msra.mxu0 0.0
  %2846 = vmatprep.subr.mxu0 0.0
  %2847 = vmatpush1.msra.mxu0 0.0
  %2848 = vmatprep.subr.mxu0 0.0
  %2849 = vmatpush1.msra.mxu0 0.0
  %2850 = vmatprep.subr.mxu0 0.0
  %2851 = vmatpush1.msra.mxu0 0.0
  %2852 = vmatprep.subr.mxu0 0.0
  %2853 = vmatpush1.msra.mxu0 0.0
  %2854 = vmatprep.subr.mxu0 0.0
  %2855 = vmatpush1.msra.mxu0 0.0
  %2856 = vmatprep.subr.mxu0 0.0
  %2857 = vmatpush1.msra.mxu0 0.0
  %2858 = vmatprep.subr.mxu0 0.0
  %2859 = vmatpush1.msra.mxu0 0.0
  %2860 = vmatprep.subr.mxu0 0.0
  %2861 = vmatpush1.msra.mxu0 0.0
  %2862 = vmatprep.subr.mxu0 0.0
  %2863 = vmatpush1.msra.mxu0 0.0
  %2864 = vmatprep.subr.mxu0 0.0
  %2865 = vmatpush1.msra.mxu0 0.0
  %2866 = vmatprep.subr.mxu0 0.0
  %2867 = vmatpush1.msra.mxu0 0.0
  %2868 = vmatprep.subr.mxu0 0.0
  %2869 = vmatpush1.msra.mxu0 0.0
  %2870 = vmatprep.subr.mxu0 0.0
  %2871 = vmatpush1.msra.mxu0 0.0
  %2872 = vmatprep.subr.mxu0 0.0
  %2873 = vmatpush1.msra.mxu0 %v2703
  %2874 = vmatprep.subr.mxu0 0.0
  %2875 = vmatpush1.msra.mxu0 %v2698
  %2876 = vmatprep.subr.mxu0 0.0
  %2877 = vmatpush2.msra.mxu0 0.0
  %2878 = vmatprep.subr.mxu0 0.0
  %2879 = vmatpush2.msra.mxu0 0.0
  %2880 = vmatprep.subr.mxu0 0.0
  %2881 = vmatpush2.msra.mxu0 0.0
  %2882 = vmatprep.subr.mxu0 0.0
  %2883 = vmatpush2.msra.mxu0 0.0
  %2884 = vmatprep.subr.mxu0 0.0
  %2885 = vmatpush2.msra.mxu0 0.0
  %2886 = vmatprep.subr.mxu0 0.0
  %2887 = vmatpush2.msra.mxu0 0.0
  %2888 = vmatprep.subr.mxu0 0.0
  %2889 = vmatpush2.msra.mxu0 0.0
  %2890 = vmatprep.subr.mxu0 0.0
  %2891 = vmatpush2.msra.mxu0 0.0
  %2892 = vmatprep.subr.mxu0 0.0
  %2893 = vmatpush2.msra.mxu0 0.0
  %2894 = vmatprep.subr.mxu0 0.0
  %2895 = vmatpush2.msra.mxu0 0.0
  %2896 = vmatprep.subr.mxu0 0.0
  %2897 = vmatpush2.msra.mxu0 0.0
  %2898 = vmatprep.subr.mxu0 0.0
  %2899 = vmatpush2.msra.mxu0 0.0
  %2900 = vmatprep.subr.mxu0 0.0
  %2901 = vmatpush2.msra.mxu0 0.0
  %2902 = vmatprep.subr.mxu0 0.0
  %2903 = vmatpush2.msra.mxu0 0.0
  %2904 = vmatprep.subr.mxu0 0.0
  %2905 = vmatpush2.msra.mxu0 0.0
  %2906 = vmatprep.subr.mxu0 0.0
  %2907 = vmatpush2.msra.mxu0 0.0
  %2908 = vmatprep.mubr.f32.mxu0 0.0
  %2909 = vmatmul.mubr.f32.gmra.mxu0 %v2839
  %v2910 = vpop.f32.mrf.mxu0
  %v2911 = vadd.f32 %v2837, %v2910
  %v2912 = vpop.f32.mrf.mxu0
  %2913 = vmatprep.mubr.f32.mxu0 0.0
  %2914 = vmatmul.mubr.f32.gmra.mxu0 %v2842
  %v2915 = vpop.f32.mrf.mxu0
  %v2916 = vadd.f32 %v2837, %v2915
  %v2917 = vpop.f32.mrf.mxu0
  %2918 = vdwg.mxu0
  %v2919 = vsel %vm28, %v2911, 0.0
  %2920 = vadd.xlane.f32.xlu0 %v2919
  %v2921 = vpop.xlane.xlu0 %2920
  %v2922 = vsel %vm28, %v2916, 0.0
  %2923 = vadd.xlane.f32.xlu0 %v2922
  %v2924 = vpop.xlane.xlu0 %2923
  %v2925 = vrcp.pop 16.0
  %v2926 = vmul.f32 %v2921, %v2925
  %v2927 = vmul.f32 %v2924, %v2925
  %v2928 = vsub.f32 %v2911, %v2926
  %v2929 = vsub.f32 %v2916, %v2927
  %v2930 = vmul.f32 %v2928, %v2928
  %v2931 = vmul.f32 %v2929, %v2929
  %v2932 = vsel %vm28, %v2930, 0.0
  %2933 = vadd.xlane.f32.xlu0 %v2932
  %v2934 = vpop.xlane.xlu0 %2933
  %v2935 = vsel %vm28, %v2931, 0.0
  %2936 = vadd.xlane.f32.xlu0 %v2935
  %v2937 = vpop.xlane.xlu0 %2936
  %v2938 = vmul.f32 %v2934, %v2925
  %v2939 = vmul.f32 %v2937, %v2925
  %v2940 = vadd.f32 %v2938, 1e-05
  %v2941 = vadd.f32 %v2939, 1e-05
  %v2942 = vrsqrt.pop %v2940
  %v2943 = vrsqrt.pop %v2941
  %v2944 = vmul.f32 %v2928, %v2942
  %v2945 = vmul.f32 %v2929, %v2943
  %v2946 = vld [vmem:[%s0 + $0x128] sm:$0x1]
  %v2947 = vlaneseq
  %v2948 = vshrl.u32 %v2947, 7
  %v2949 = vsub.s32 0, %v2948
  %v2950 = vrot.slane %v2946, %v2949
  %v2951 = vmul.f32 %v2944, %v2950
  %v2952 = vmul.f32 %v2945, %v2950
  %v2953 = vld [vmem:[%s0 + $0x130] sm:$0x1]
  %v2954 = vlaneseq
  %v2955 = vshrl.u32 %v2954, 7
  %v2956 = vsub.s32 0, %v2955
  %v2957 = vrot.slane %v2953, %v2956
  %v2958 = vadd.f32 %v2951, %v2957
  %v2959 = vadd.f32 %v2952, %v2957
  %v2960 = vld [vmem:[%s0 + $0x138] sm:$0xff]
  %v2961 = vld [vmem:[%s0 + $0x140] sm:$0xff]
  %v2962 = vld [vmem:[%s0 + $0x148] sm:$0xff]
  %v2963 = vld [vmem:[%s0 + $0x150] sm:$0xff]
  %2964 = vmatprep.subr.mxu0 0.0
  %2965 = vmatpush1.msra.mxu0 0.0
  %2966 = vmatprep.subr.mxu0 0.0
  %2967 = vmatpush1.msra.mxu0 0.0
  %2968 = vmatprep.subr.mxu0 0.0
  %2969 = vmatpush1.msra.mxu0 0.0
  %2970 = vmatprep.subr.mxu0 0.0
  %2971 = vmatpush1.msra.mxu0 0.0
  %2972 = vmatprep.subr.mxu0 0.0
  %2973 = vmatpush1.msra.mxu0 0.0
  %2974 = vmatprep.subr.mxu0 0.0
  %2975 = vmatpush1.msra.mxu0 0.0
  %2976 = vmatprep.subr.mxu0 0.0
  %2977 = vmatpush1.msra.mxu0 0.0
  %2978 = vmatprep.subr.mxu0 0.0
  %2979 = vmatpush1.msra.mxu0 0.0
  %2980 = vmatprep.subr.mxu0 0.0
  %2981 = vmatpush1.msra.mxu0 0.0
  %2982 = vmatprep.subr.mxu0 0.0
  %2983 = vmatpush1.msra.mxu0 0.0
  %2984 = vmatprep.subr.mxu0 0.0
  %2985 = vmatpush1.msra.mxu0 0.0
  %2986 = vmatprep.subr.mxu0 0.0
  %2987 = vmatpush1.msra.mxu0 0.0
  %2988 = vmatprep.subr.mxu0 0.0
  %2989 = vmatpush1.msra.mxu0 %v2963
  %2990 = vmatprep.subr.mxu0 0.0
  %2991 = vmatpush1.msra.mxu0 %v2962
  %2992 = vmatprep.subr.mxu0 0.0
  %2993 = vmatpush1.msra.mxu0 %v2961
  %2994 = vmatprep.subr.mxu0 0.0
  %2995 = vmatpush1.msra.mxu0 %v2960
  %2996 = vmatprep.subr.mxu0 0.0
  %2997 = vmatpush2.msra.mxu0 0.0
  %2998 = vmatprep.subr.mxu0 0.0
  %2999 = vmatpush2.msra.mxu0 0.0
  %3000 = vmatprep.subr.mxu0 0.0
  %3001 = vmatpush2.msra.mxu0 0.0
  %3002 = vmatprep.subr.mxu0 0.0
  %3003 = vmatpush2.msra.mxu0 0.0
  %3004 = vmatprep.subr.mxu0 0.0
  %3005 = vmatpush2.msra.mxu0 0.0
  %3006 = vmatprep.subr.mxu0 0.0
  %3007 = vmatpush2.msra.mxu0 0.0
  %3008 = vmatprep.subr.mxu0 0.0
  %3009 = vmatpush2.msra.mxu0 0.0
  %3010 = vmatprep.subr.mxu0 0.0
  %3011 = vmatpush2.msra.mxu0 0.0
  %3012 = vmatprep.subr.mxu0 0.0
  %3013 = vmatpush2.msra.mxu0 0.0
  %3014 = vmatprep.subr.mxu0 0.0
  %3015 = vmatpush2.msra.mxu0 0.0
  %3016 = vmatprep.subr.mxu0 0.0
  %3017 = vmatpush2.msra.mxu0 0.0
  %3018 = vmatprep.subr.mxu0 0.0
  %3019 = vmatpush2.msra.mxu0 0.0
  %3020 = vmatprep.subr.mxu0 0.0
  %3021 = vmatpush2.msra.mxu0 0.0
  %3022 = vmatprep.subr.mxu0 0.0
  %3023 = vmatpush2.msra.mxu0 0.0
  %3024 = vmatprep.subr.mxu0 0.0
  %3025 = vmatpush2.msra.mxu0 0.0
  %3026 = vmatprep.subr.mxu0 0.0
  %3027 = vmatpush2.msra.mxu0 0.0
  %3028 = vmatprep.mubr.f32.mxu0 0.0
  %3029 = vmatmul.mubr.f32.gmra.mxu0 %v118
  %v3030 = vpop.f32.mrf.mxu0
  %v3031 = vadd.f32 0.0, %v3030
  %v3032 = vpop.f32.mrf.mxu0
  %3033 = vmatprep.mubr.f32.mxu0 0.0
  %3034 = vmatmul.mubr.f32.gmra.mxu0 %v121
  %v3035 = vpop.f32.mrf.mxu0
  %v3036 = vadd.f32 0.0, %v3035
  %v3037 = vpop.f32.mrf.mxu0
  %3038 = vdwg.mxu0
  %v3039 = vadd.f32 %v2958, %v3031
  %v3040 = vadd.f32 %v2959, %v3036
  %v3041 = vld [vmem:[%s0 + $0x158] sm:$0x1]
  %v3042 = vlaneseq
  %v3043 = vshrl.u32 %v3042, 7
  %v3044 = vsub.s32 0, %v3043
  %v3045 = vrot.slane %v3041, %v3044
  %v3046 = vadd.f32 %v3039, %v3045
  %v3047 = vadd.f32 %v3040, %v3045
  %v3048 = vld [vmem:[%s0 + $0x160] sm:$0xff]
  %v3049 = vld [vmem:[%s0 + $0x168] sm:$0xff]
  %v3050 = vld [vmem:[%s0 + $0x170] sm:$0x1]
  %v3051 = vlaneseq
  %v3052 = vshrl.u32 %v3051, 7
  %v3053 = vsub.s32 0, %v3052
  %v3054 = vrot.slane %v3050, %v3053
  %v3056 = vsel %vm28, %v3046, 0
  %v3059 = vsel %vm28, %v3047, 0
  %3061 = vmatprep.subr.mxu0 0.0
  %3062 = vmatpush1.msra.mxu0 0.0
  %3063 = vmatprep.subr.mxu0 0.0
  %3064 = vmatpush1.msra.mxu0 0.0
  %3065 = vmatprep.subr.mxu0 0.0
  %3066 = vmatpush1.msra.mxu0 0.0
  %3067 = vmatprep.subr.mxu0 0.0
  %3068 = vmatpush1.msra.mxu0 0.0
  %3069 = vmatprep.subr.mxu0 0.0
  %3070 = vmatpush1.msra.mxu0 0.0
  %3071 = vmatprep.subr.mxu0 0.0
  %3072 = vmatpush1.msra.mxu0 0.0
  %3073 = vmatprep.subr.mxu0 0.0
  %3074 = vmatpush1.msra.mxu0 0.0
  %3075 = vmatprep.subr.mxu0 0.0
  %3076 = vmatpush1.msra.mxu0 0.0
  %3077 = vmatprep.subr.mxu0 0.0
  %3078 = vmatpush1.msra.mxu0 0.0
  %3079 = vmatprep.subr.mxu0 0.0
  %3080 = vmatpush1.msra.mxu0 0.0
  %3081 = vmatprep.subr.mxu0 0.0
  %3082 = vmatpush1.msra.mxu0 0.0
  %3083 = vmatprep.subr.mxu0 0.0
  %3084 = vmatpush1.msra.mxu0 0.0
  %3085 = vmatprep.subr.mxu0 0.0
  %3086 = vmatpush1.msra.mxu0 0.0
  %3087 = vmatprep.subr.mxu0 0.0
  %3088 = vmatpush1.msra.mxu0 0.0
  %3089 = vmatprep.subr.mxu0 0.0
  %3090 = vmatpush1.msra.mxu0 %v3049
  %3091 = vmatprep.subr.mxu0 0.0
  %3092 = vmatpush1.msra.mxu0 %v3048
  %3093 = vmatprep.subr.mxu0 0.0
  %3094 = vmatpush2.msra.mxu0 0.0
  %3095 = vmatprep.subr.mxu0 0.0
  %3096 = vmatpush2.msra.mxu0 0.0
  %3097 = vmatprep.subr.mxu0 0.0
  %3098 = vmatpush2.msra.mxu0 0.0
  %3099 = vmatprep.subr.mxu0 0.0
  %3100 = vmatpush2.msra.mxu0 0.0
  %3101 = vmatprep.subr.mxu0 0.0
  %3102 = vmatpush2.msra.mxu0 0.0
  %3103 = vmatprep.subr.mxu0 0.0
  %3104 = vmatpush2.msra.mxu0 0.0
  %3105 = vmatprep.subr.mxu0 0.0
  %3106 = vmatpush2.msra.mxu0 0.0
  %3107 = vmatprep.subr.mxu0 0.0
  %3108 = vmatpush2.msra.mxu0 0.0
  %3109 = vmatprep.subr.mxu0 0.0
  %3110 = vmatpush2.msra.mxu0 0.0
  %3111 = vmatprep.subr.mxu0 0.0
  %3112 = vmatpush2.msra.mxu0 0.0
  %3113 = vmatprep.subr.mxu0 0.0
  %3114 = vmatpush2.msra.mxu0 0.0
  %3115 = vmatprep.subr.mxu0 0.0
  %3116 = vmatpush2.msra.mxu0 0.0
  %3117 = vmatprep.subr.mxu0 0.0
  %3118 = vmatpush2.msra.mxu0 0.0
  %3119 = vmatprep.subr.mxu0 0.0
  %3120 = vmatpush2.msra.mxu0 0.0
  %3121 = vmatprep.subr.mxu0 0.0
  %3122 = vmatpush2.msra.mxu0 0.0
  %3123 = vmatprep.subr.mxu0 0.0
  %3124 = vmatpush2.msra.mxu0 0.0
  %3125 = vmatprep.mubr.f32.mxu0 0.0
  %3126 = vmatmul.mubr.f32.gmra.mxu0 %v3056
  %v3127 = vpop.f32.mrf.mxu0
  %v3128 = vadd.f32 %v3054, %v3127
  %v3129 = vpop.f32.mrf.mxu0
  %3130 = vmatprep.mubr.f32.mxu0 0.0
  %3131 = vmatmul.mubr.f32.gmra.mxu0 %v3059
  %v3132 = vpop.f32.mrf.mxu0
  %v3133 = vadd.f32 %v3054, %v3132
  %v3134 = vpop.f32.mrf.mxu0
  %3135 = vdwg.mxu0
  %v3136 = vmax.f32 %v3128, 0.0
  %v3137 = vmax.f32 %v3133, 0.0
  %v3138 = vld [vmem:[%s0 + $0x178] sm:$0xff]
  %v3139 = vld [vmem:[%s0 + $0x180] sm:$0xff]
  %v3140 = vld [vmem:[%s0 + $0x188] sm:$0xff]
  %v3141 = vld [vmem:[%s0 + $0x190] sm:$0xff]
  %v3142 = vld [vmem:[%s0 + $0x198] sm:$0xff]
  %v3143 = vld [vmem:[%s0 + $0x1a0] sm:$0xff]
  %v3144 = vld [vmem:[%s0 + $0x1a8] sm:$0xff]
  %v3145 = vld [vmem:[%s0 + $0x1b0] sm:$0xff]
  %v3146 = vld [vmem:[%s0 + $0x1b8] sm:$0x1]
  %v3147 = vlaneseq
  %v3148 = vshrl.u32 %v3147, 7
  %v3149 = vsub.s32 0, %v3148
  %v3150 = vrot.slane %v3146, %v3149
  %vm3151 = vcmask 523264
  %v3153 = vsel %vm3151, %v3136, 0
  %v3156 = vsel %vm3151, %v3137, 0
  %3158 = vmatprep.subr.mxu0 0.0
  %3159 = vmatpush1.msra.mxu0 0.0
  %3160 = vmatprep.subr.mxu0 0.0
  %3161 = vmatpush1.msra.mxu0 0.0
  %3162 = vmatprep.subr.mxu0 0.0
  %3163 = vmatpush1.msra.mxu0 0.0
  %3164 = vmatprep.subr.mxu0 0.0
  %3165 = vmatpush1.msra.mxu0 0.0
  %3166 = vmatprep.subr.mxu0 0.0
  %3167 = vmatpush1.msra.mxu0 0.0
  %3168 = vmatprep.subr.mxu0 0.0
  %3169 = vmatpush1.msra.mxu0 0.0
  %3170 = vmatprep.subr.mxu0 0.0
  %3171 = vmatpush1.msra.mxu0 0.0
  %3172 = vmatprep.subr.mxu0 0.0
  %3173 = vmatpush1.msra.mxu0 0.0
  %3174 = vmatprep.subr.mxu0 0.0
  %3175 = vmatpush1.msra.mxu0 %v3145
  %3176 = vmatprep.subr.mxu0 0.0
  %3177 = vmatpush1.msra.mxu0 %v3144
  %3178 = vmatprep.subr.mxu0 0.0
  %3179 = vmatpush1.msra.mxu0 %v3143
  %3180 = vmatprep.subr.mxu0 0.0
  %3181 = vmatpush1.msra.mxu0 %v3142
  %3182 = vmatprep.subr.mxu0 0.0
  %3183 = vmatpush1.msra.mxu0 %v3141
  %3184 = vmatprep.subr.mxu0 0.0
  %3185 = vmatpush1.msra.mxu0 %v3140
  %3186 = vmatprep.subr.mxu0 0.0
  %3187 = vmatpush1.msra.mxu0 %v3139
  %3188 = vmatprep.subr.mxu0 0.0
  %3189 = vmatpush1.msra.mxu0 %v3138
  %3190 = vmatprep.subr.mxu0 0.0
  %3191 = vmatpush2.msra.mxu0 0.0
  %3192 = vmatprep.subr.mxu0 0.0
  %3193 = vmatpush2.msra.mxu0 0.0
  %3194 = vmatprep.subr.mxu0 0.0
  %3195 = vmatpush2.msra.mxu0 0.0
  %3196 = vmatprep.subr.mxu0 0.0
  %3197 = vmatpush2.msra.mxu0 0.0
  %3198 = vmatprep.subr.mxu0 0.0
  %3199 = vmatpush2.msra.mxu0 0.0
  %3200 = vmatprep.subr.mxu0 0.0
  %3201 = vmatpush2.msra.mxu0 0.0
  %3202 = vmatprep.subr.mxu0 0.0
  %3203 = vmatpush2.msra.mxu0 0.0
  %3204 = vmatprep.subr.mxu0 0.0
  %3205 = vmatpush2.msra.mxu0 0.0
  %3206 = vmatprep.subr.mxu0 0.0
  %3207 = vmatpush2.msra.mxu0 0.0
  %3208 = vmatprep.subr.mxu0 0.0
  %3209 = vmatpush2.msra.mxu0 0.0
  %3210 = vmatprep.subr.mxu0 0.0
  %3211 = vmatpush2.msra.mxu0 0.0
  %3212 = vmatprep.subr.mxu0 0.0
  %3213 = vmatpush2.msra.mxu0 0.0
  %3214 = vmatprep.subr.mxu0 0.0
  %3215 = vmatpush2.msra.mxu0 0.0
  %3216 = vmatprep.subr.mxu0 0.0
  %3217 = vmatpush2.msra.mxu0 0.0
  %3218 = vmatprep.subr.mxu0 0.0
  %3219 = vmatpush2.msra.mxu0 0.0
  %3220 = vmatprep.subr.mxu0 0.0
  %3221 = vmatpush2.msra.mxu0 0.0
  %3222 = vmatprep.mubr.f32.mxu0 0.0
  %3223 = vmatmul.mubr.f32.gmra.mxu0 %v3153
  %v3224 = vpop.f32.mrf.mxu0
  %v3225 = vadd.f32 %v3150, %v3224
  %v3226 = vpop.f32.mrf.mxu0
  %3227 = vmatprep.mubr.f32.mxu0 0.0
  %3228 = vmatmul.mubr.f32.gmra.mxu0 %v3156
  %v3229 = vpop.f32.mrf.mxu0
  %v3230 = vadd.f32 %v3150, %v3229
  %v3231 = vpop.f32.mrf.mxu0
  %3232 = vdwg.mxu0
  %v3233 = vmax.f32 %v3225, 0.0
  %v3234 = vmax.f32 %v3230, 0.0
  %v3235 = vld [vmem:[%s0 + $0x1c0] sm:$0xff]
  %v3236 = vld [vmem:[%s0 + $0x1c8] sm:$0xff]
  %v3237 = vld [vmem:[%s0 + $0x1d0] sm:$0xff]
  %v3238 = vld [vmem:[%s0 + $0x1d8] sm:$0xff]
  %v3240 = vsel %vm28, %v3235, 0
  %v3243 = vsel %vm28, %v3236, 0
  %v3246 = vsel %vm28, %v3237, 0
  %v3249 = vsel %vm28, %v3238, 0
  %3251 = vmatprep.subr.mxu0 0.0
  %3252 = vmatpush1.xpose.msra.mxu0 0.0
  %3253 = vmatprep.subr.mxu0 0.0
  %3254 = vmatpush1.xpose.msra.mxu0 0.0
  %3255 = vmatprep.subr.mxu0 0.0
  %3256 = vmatpush1.xpose.msra.mxu0 0.0
  %3257 = vmatprep.subr.mxu0 0.0
  %3258 = vmatpush1.xpose.msra.mxu0 0.0
  %3259 = vmatprep.subr.mxu0 0.0
  %3260 = vmatpush1.xpose.msra.mxu0 0.0
  %3261 = vmatprep.subr.mxu0 0.0
  %3262 = vmatpush1.xpose.msra.mxu0 0.0
  %3263 = vmatprep.subr.mxu0 0.0
  %3264 = vmatpush1.xpose.msra.mxu0 0.0
  %3265 = vmatprep.subr.mxu0 0.0
  %3266 = vmatpush1.xpose.msra.mxu0 0.0
  %3267 = vmatprep.subr.mxu0 0.0
  %3268 = vmatpush1.xpose.msra.mxu0 0.0
  %3269 = vmatprep.subr.mxu0 0.0
  %3270 = vmatpush1.xpose.msra.mxu0 0.0
  %3271 = vmatprep.subr.mxu0 0.0
  %3272 = vmatpush1.xpose.msra.mxu0 0.0
  %3273 = vmatprep.subr.mxu0 0.0
  %3274 = vmatpush1.xpose.msra.mxu0 0.0
  %3275 = vmatprep.subr.mxu0 0.0
  %3276 = vmatpush1.xpose.msra.mxu0 0.0
  %3277 = vmatprep.subr.mxu0 0.0
  %3278 = vmatpush1.xpose.msra.mxu0 0.0
  %3279 = vmatprep.subr.mxu0 0.0
  %3280 = vmatpush1.xpose.msra.mxu0 %v3059
  %3281 = vmatprep.subr.mxu0 0.0
  %3282 = vmatpush1.xpose.msra.mxu0 %v3056
  %3283 = vmatprep.subr.mxu0 0.0
  %3284 = vmatpush2.xpose.msra.mxu0 0.0
  %3285 = vmatprep.subr.mxu0 0.0
  %3286 = vmatpush2.xpose.msra.mxu0 0.0
  %3287 = vmatprep.subr.mxu0 0.0
  %3288 = vmatpush2.xpose.msra.mxu0 0.0
  %3289 = vmatprep.subr.mxu0 0.0
  %3290 = vmatpush2.xpose.msra.mxu0 0.0
  %3291 = vmatprep.subr.mxu0 0.0
  %3292 = vmatpush2.xpose.msra.mxu0 0.0
  %3293 = vmatprep.subr.mxu0 0.0
  %3294 = vmatpush2.xpose.msra.mxu0 0.0
  %3295 = vmatprep.subr.mxu0 0.0
  %3296 = vmatpush2.xpose.msra.mxu0 0.0
  %3297 = vmatprep.subr.mxu0 0.0
  %3298 = vmatpush2.xpose.msra.mxu0 0.0
  %3299 = vmatprep.subr.mxu0 0.0
  %3300 = vmatpush2.xpose.msra.mxu0 0.0
  %3301 = vmatprep.subr.mxu0 0.0
  %3302 = vmatpush2.xpose.msra.mxu0 0.0
  %3303 = vmatprep.subr.mxu0 0.0
  %3304 = vmatpush2.xpose.msra.mxu0 0.0
  %3305 = vmatprep.subr.mxu0 0.0
  %3306 = vmatpush2.xpose.msra.mxu0 0.0
  %3307 = vmatprep.subr.mxu0 0.0
  %3308 = vmatpush2.xpose.msra.mxu0 0.0
  %3309 = vmatprep.subr.mxu0 0.0
  %3310 = vmatpush2.xpose.msra.mxu0 0.0
  %3311 = vmatprep.subr.mxu0 0.0
  %3312 = vmatpush2.xpose.msra.mxu0 0.0
  %3313 = vmatprep.subr.mxu0 0.0
  %3314 = vmatpush2.xpose.msra.mxu0 0.0
  %3315 = vmatprep.mubr.f32.mxu0 0.0
  %3316 = vmatmul.mubr.f32.gmra.mxu0 %v3240
  %v3317 = vpop.f32.mrf.mxu0
  %v3318 = vadd.f32 0.0, %v3317
  %v3319 = vpop.f32.mrf.mxu0
  %3320 = vmatprep.mubr.f32.mxu0 0.0
  %3321 = vmatmul.mubr.f32.gmra.mxu0 %v3243
  %v3322 = vpop.f32.mrf.mxu0
  %v3323 = vadd.f32 0.0, %v3322
  %v3324 = vpop.f32.mrf.mxu0
  %3325 = vmatprep.mubr.f32.mxu0 0.0
  %3326 = vmatmul.mubr.f32.gmra.mxu0 %v3246
  %v3327 = vpop.f32.mrf.mxu0
  %v3328 = vadd.f32 0.0, %v3327
  %v3329 = vpop.f32.mrf.mxu0
  %3330 = vmatprep.mubr.f32.mxu0 0.0
  %3331 = vmatmul.mubr.f32.gmra.mxu0 %v3249
  %v3332 = vpop.f32.mrf.mxu0
  %v3333 = vadd.f32 0.0, %v3332
  %v3334 = vpop.f32.mrf.mxu0
  %3335 = vdwg.mxu0
  %v3336 = vld [vmem:[%s1 + $0x50] sm:$0xff]
  %v3337 = vld [vmem:[%s1 + $0x58] sm:$0xff]
  %v3339 = vsel %vm116, %v3233, 0
  %v3342 = vsel %vm116, %v3234, 0
  %3344 = vmatprep.subr.mxu0 0.0
  %3345 = vmatpush1.msra.mxu0 0.0
  %3346 = vmatprep.subr.mxu0 0.0
  %3347 = vmatpush1.msra.mxu0 0.0
  %3348 = vmatprep.subr.mxu0 0.0
  %3349 = vmatpush1.msra.mxu0 0.0
  %3350 = vmatprep.subr.mxu0 0.0
  %3351 = vmatpush1.msra.mxu0 0.0
  %3352 = vmatprep.subr.mxu0 0.0
  %3353 = vmatpush1.msra.mxu0 0.0
  %3354 = vmatprep.subr.mxu0 0.0
  %3355 = vmatpush1.msra.mxu0 0.0
  %3356 = vmatprep.subr.mxu0 0.0
  %3357 = vmatpush1.msra.mxu0 0.0
  %3358 = vmatprep.subr.mxu0 0.0
  %3359 = vmatpush1.msra.mxu0 0.0
  %3360 = vmatprep.subr.mxu0 0.0
  %3361 = vmatpush1.msra.mxu0 0.0
  %3362 = vmatprep.subr.mxu0 0.0
  %3363 = vmatpush1.msra.mxu0 0.0
  %3364 = vmatprep.subr.mxu0 0.0
  %3365 = vmatpush1.msra.mxu0 0.0
  %3366 = vmatprep.subr.mxu0 0.0
  %3367 = vmatpush1.msra.mxu0 0.0
  %3368 = vmatprep.subr.mxu0 0.0
  %3369 = vmatpush1.msra.mxu0 %v3333
  %3370 = vmatprep.subr.mxu0 0.0
  %3371 = vmatpush1.msra.mxu0 %v3328
  %3372 = vmatprep.subr.mxu0 0.0
  %3373 = vmatpush1.msra.mxu0 %v3323
  %3374 = vmatprep.subr.mxu0 0.0
  %3375 = vmatpush1.msra.mxu0 %v3318
  %3376 = vmatprep.subr.mxu0 0.0
  %3377 = vmatpush2.msra.mxu0 0.0
  %3378 = vmatprep.subr.mxu0 0.0
  %3379 = vmatpush2.msra.mxu0 0.0
  %3380 = vmatprep.subr.mxu0 0.0
  %3381 = vmatpush2.msra.mxu0 0.0
  %3382 = vmatprep.subr.mxu0 0.0
  %3383 = vmatpush2.msra.mxu0 0.0
  %3384 = vmatprep.subr.mxu0 0.0
  %3385 = vmatpush2.msra.mxu0 0.0
  %3386 = vmatprep.subr.mxu0 0.0
  %3387 = vmatpush2.msra.mxu0 0.0
  %3388 = vmatprep.subr.mxu0 0.0
  %3389 = vmatpush2.msra.mxu0 0.0
  %3390 = vmatprep.subr.mxu0 0.0
  %3391 = vmatpush2.msra.mxu0 0.0
  %3392 = vmatprep.subr.mxu0 0.0
  %3393 = vmatpush2.msra.mxu0 0.0
  %3394 = vmatprep.subr.mxu0 0.0
  %3395 = vmatpush2.msra.mxu0 0.0
  %3396 = vmatprep.subr.mxu0 0.0
  %3397 = vmatpush2.msra.mxu0 0.0
  %3398 = vmatprep.subr.mxu0 0.0
  %3399 = vmatpush2.msra.mxu0 0.0
  %3400 = vmatprep.subr.mxu0 0.0
  %3401 = vmatpush2.msra.mxu0 0.0
  %3402 = vmatprep.subr.mxu0 0.0
  %3403 = vmatpush2.msra.mxu0 0.0
  %3404 = vmatprep.subr.mxu0 0.0
  %3405 = vmatpush2.msra.mxu0 0.0
  %3406 = vmatprep.subr.mxu0 0.0
  %3407 = vmatpush2.msra.mxu0 0.0
  %3408 = vmatprep.mubr.f32.mxu0 0.0
  %3409 = vmatmul.mubr.f32.gmra.mxu0 %v3339
  %v3410 = vpop.f32.mrf.mxu0
  %v3411 = vadd.f32 %v3336, %v3410
  %v3412 = vpop.f32.mrf.mxu0
  %3413 = vmatprep.mubr.f32.mxu0 0.0
  %3414 = vmatmul.mubr.f32.gmra.mxu0 %v3342
  %v3415 = vpop.f32.mrf.mxu0
  %v3416 = vadd.f32 %v3337, %v3415
  %v3417 = vpop.f32.mrf.mxu0
  %3418 = vdwg.mxu0
  %3419 = vrot.lane.b32.xlu0 %v3233, 96
  %v3420 = vpop.permute.xlu0 %3419
  %3421 = vrot.lane.b32.xlu0 %v3234, 96
  %v3422 = vpop.permute.xlu0 %3421
  %3425 = vrot.lane.b32.xlu0 %v3336, 112
  %v3426 = vpop.permute.xlu0 %3425
  %3427 = vrot.lane.b32.xlu0 %v3337, 112
  %v3428 = vpop.permute.xlu0 %3427
  %v3431 = vsel %vm116, %v3420, 0
  %v3433 = vsel %vm116, %v3422, 0
  %3435 = vmatprep.subr.mxu0 0.0
  %3436 = vmatpush1.msra.mxu0 0.0
  %3437 = vmatprep.subr.mxu0 0.0
  %3438 = vmatpush1.msra.mxu0 0.0
  %3439 = vmatprep.subr.mxu0 0.0
  %3440 = vmatpush1.msra.mxu0 0.0
  %3441 = vmatprep.subr.mxu0 0.0
  %3442 = vmatpush1.msra.mxu0 0.0
  %3443 = vmatprep.subr.mxu0 0.0
  %3444 = vmatpush1.msra.mxu0 0.0
  %3445 = vmatprep.subr.mxu0 0.0
  %3446 = vmatpush1.msra.mxu0 0.0
  %3447 = vmatprep.subr.mxu0 0.0
  %3448 = vmatpush1.msra.mxu0 0.0
  %3449 = vmatprep.subr.mxu0 0.0
  %3450 = vmatpush1.msra.mxu0 0.0
  %3451 = vmatprep.subr.mxu0 0.0
  %3452 = vmatpush1.msra.mxu0 0.0
  %3453 = vmatprep.subr.mxu0 0.0
  %3454 = vmatpush1.msra.mxu0 0.0
  %3455 = vmatprep.subr.mxu0 0.0
  %3456 = vmatpush1.msra.mxu0 0.0
  %3457 = vmatprep.subr.mxu0 0.0
  %3458 = vmatpush1.msra.mxu0 0.0
  %3459 = vmatprep.subr.mxu0 0.0
  %3460 = vmatpush1.msra.mxu0 %v3333
  %3461 = vmatprep.subr.mxu0 0.0
  %3462 = vmatpush1.msra.mxu0 %v3328
  %3463 = vmatprep.subr.mxu0 0.0
  %3464 = vmatpush1.msra.mxu0 %v3323
  %3465 = vmatprep.subr.mxu0 0.0
  %3466 = vmatpush1.msra.mxu0 %v3318
  %3467 = vmatprep.subr.mxu0 0.0
  %3468 = vmatpush2.msra.mxu0 0.0
  %3469 = vmatprep.subr.mxu0 0.0
  %3470 = vmatpush2.msra.mxu0 0.0
  %3471 = vmatprep.subr.mxu0 0.0
  %3472 = vmatpush2.msra.mxu0 0.0
  %3473 = vmatprep.subr.mxu0 0.0
  %3474 = vmatpush2.msra.mxu0 0.0
  %3475 = vmatprep.subr.mxu0 0.0
  %3476 = vmatpush2.msra.mxu0 0.0
  %3477 = vmatprep.subr.mxu0 0.0
  %3478 = vmatpush2.msra.mxu0 0.0
  %3479 = vmatprep.subr.mxu0 0.0
  %3480 = vmatpush2.msra.mxu0 0.0
  %3481 = vmatprep.subr.mxu0 0.0
  %3482 = vmatpush2.msra.mxu0 0.0
  %3483 = vmatprep.subr.mxu0 0.0
  %3484 = vmatpush2.msra.mxu0 0.0
  %3485 = vmatprep.subr.mxu0 0.0
  %3486 = vmatpush2.msra.mxu0 0.0
  %3487 = vmatprep.subr.mxu0 0.0
  %3488 = vmatpush2.msra.mxu0 0.0
  %3489 = vmatprep.subr.mxu0 0.0
  %3490 = vmatpush2.msra.mxu0 0.0
  %3491 = vmatprep.subr.mxu0 0.0
  %3492 = vmatpush2.msra.mxu0 0.0
  %3493 = vmatprep.subr.mxu0 0.0
  %3494 = vmatpush2.msra.mxu0 0.0
  %3495 = vmatprep.subr.mxu0 0.0
  %3496 = vmatpush2.msra.mxu0 0.0
  %3497 = vmatprep.subr.mxu0 0.0
  %3498 = vmatpush2.msra.mxu0 0.0
  %3499 = vmatprep.mubr.f32.mxu0 0.0
  %3500 = vmatmul.mubr.f32.gmra.mxu0 %v3431
  %v3501 = vpop.f32.mrf.mxu0
  %v3502 = vadd.f32 %v3426, %v3501
  %v3503 = vpop.f32.mrf.mxu0
  %3504 = vmatprep.mubr.f32.mxu0 0.0
  %3505 = vmatmul.mubr.f32.gmra.mxu0 %v3433
  %v3506 = vpop.f32.mrf.mxu0
  %v3507 = vadd.f32 %v3428, %v3506
  %v3508 = vpop.f32.mrf.mxu0
  %3509 = vdwg.mxu0
  %3512 = vrot.lane.b32.xlu0 %v3502, 16
  %v3513 = vpop.permute.xlu0 %3512
  %3514 = vrot.lane.b32.xlu0 %v3507, 16
  %v3515 = vpop.permute.xlu0 %3514
  %3518 = vrot.lane.b32.xlu0 %v3046, 32
  %v3519 = vpop.permute.xlu0 %3518
  %3520 = vrot.lane.b32.xlu0 %v3047, 32
  %v3521 = vpop.permute.xlu0 %3520
  %v3524 = vsel %vm28, %v3411, %v3513
  %v3525 = vsel %vm28, %v3416, %v3515
  %v3526 = vsel %vm116, %v3524, %v3519
  %v3527 = vsel %vm116, %v3525, %v3521
  %vm3528 = vcmask 392192
  %3529 = vst.msk [vmem:[%s2] sm:$0xff] %vm3528, %v3526
  %3530 = vst.msk [vmem:[%s2 + $0x8] sm:$0xff] %vm3528, %v3527
  // Predicated region
  $region10: #{model_forward.1} parent=0 // pred_check
    _
  $region11: #{model_forward.1} parent=0 // pred_check_branch
    %3532 = sbr.rel (0) target = $region13
  $region12: #{model_forward.1} parent=0 // pred_region
    _
  $region13: #{model_forward.1} parent=0 // pred_fallthru
    _
  // Predicated region
  $region14: #{model_forward.1} parent=0 // pred_check
    _
  $region15: #{model_forward.1} parent=0 // pred_check_branch
    %3534 = sbr.rel (0) target = $region17
  $region16: #{model_forward.1} parent=0 // pred_region
    _
  $region17: #{model_forward.1} parent=0 // pred_fallthru
    _

</llo_original>
